<compile_context>
chip_gen: v6e
topology: v6e:2x2x1
jax: 0.10.0
libtpu: 0.0.40
codegen_flags: <defaults>
</compile_context>

<pallas_src>
import functools

import jax
import jax.numpy as jnp
from jax.experimental import pallas as pl
from jax.experimental.pallas import tpu as pltpu


# --------------------------------------------------------------------------
# in-kernel helpers
# --------------------------------------------------------------------------
def _layernorm(x, g, b, eps=1e-5):
    # single-pass variance: E[x^2] - mu^2
    mu = jnp.mean(x, axis=-1, keepdims=True)
    var = jnp.mean(x * x, axis=-1, keepdims=True) - mu * mu
    return (x - mu) * jax.lax.rsqrt(var + eps) * g + b


def _attention(ctx_scr, q, k, v, bias_ref, b_block, lq, lk, n_head, dk,
               inv_sqrt_dk, attn_ref):
    """Scaled-dot-product attention per (batch, head).

    Per-head contexts are stored into ctx_scr (rows, D) so the caller can do a
    single (rows, D) @ (D, D) output projection.  attn_ref (if given) receives
    the probabilities; it is a VMEM-resident output block, so only the final
    layer's values are ever written back to HBM.
    """
    for b in range(b_block):
        qb = q[b * lq:(b + 1) * lq, :]
        kb = k[b * lk:(b + 1) * lk, :]
        vb = v[b * lk:(b + 1) * lk, :]
        bias = bias_ref[b * lq:(b + 1) * lq, :]            # (lq, lk) f32
        for h in range(n_head):
            lo = h * dk
            qh = qb[:, lo:lo + dk].astype(jnp.bfloat16)
            kh = kb[:, lo:lo + dk].astype(jnp.bfloat16)
            vh = vb[:, lo:lo + dk].astype(jnp.bfloat16)
            s = jax.lax.dot_general(qh, kh, (((1,), (1,)), ((), ())),
                                    preferred_element_type=jnp.float32)
            s = s * inv_sqrt_dk + bias                     # additive mask bias
            s = s - jnp.max(s, axis=-1, keepdims=True)
            e = jnp.exp(s)
            p = e * pl.reciprocal(jnp.sum(e, axis=-1, keepdims=True),
                                  approx=True)
            if attn_ref is not None:
                attn_ref[b, h, :, :] = p
            ctx_scr[b * lq:(b + 1) * lq, lo:lo + dk] = jnp.dot(
                p.astype(jnp.bfloat16), vh,
                preferred_element_type=jnp.float32)


# --------------------------------------------------------------------------
# fused decoder-stack kernel (one grid step = one layer of one batch shard)
# --------------------------------------------------------------------------
def decoder_layers_kernel(
        # activations / mask biases (batch-sharded, constant over layer axis)
        x0_ref, enc_ref, sbias_ref, cbias_ref,
        # self-attention weights (stacked over layers)
        s_g_ref, s_b_ref, s_wqkv_ref, s_bqkv_ref, s_wo_ref, s_bo_ref,
        # cross-attention weights
        c_g_ref, c_b_ref, c_wq_ref, c_bq_ref, c_wkv_ref, c_bkv_ref,
        c_wo_ref, c_bo_ref,
        # position-wise FFN weights
        f_g_ref, f_b_ref, f_w1_ref, f_b1_ref, f_w2_ref, f_b2_ref,
        # final LayerNorm
        fin_g_ref, fin_b_ref,
        # outputs
        emb_out_ref, attn_ref,
        # scratch
        x_scr, ctx_scr,
        *, n_head, n_layer, b_block, lq, lk):
    layer = pl.program_id(1)
    d_model = x_scr.shape[-1]
    dk = d_model // n_head
    inv_sqrt_dk = 1.0 / float(dk) ** 0.5

    @pl.when(layer == 0)
    def _():
        x_scr[...] = x0_ref[...]                           # activation resident in VMEM

    x = x_scr[...]                                         # (rows, D) f32

    # ---------------- self-attention (pre-LN, residual) ----------------
    xn = _layernorm(x, s_g_ref[0], s_b_ref[0])
    qkv = (jnp.dot(xn.astype(jnp.bfloat16), s_wqkv_ref[0],
                   preferred_element_type=jnp.float32) + s_bqkv_ref[0])
    _attention(ctx_scr,
               qkv[:, :d_model], qkv[:, d_model:2 * d_model],
               qkv[:, 2 * d_model:],
               sbias_ref, b_block, lq, lq, n_head, dk, inv_sqrt_dk, None)
    x = x + (jnp.dot(ctx_scr[...].astype(jnp.bfloat16), s_wo_ref[0],
                     preferred_element_type=jnp.float32) + s_bo_ref[0])

    # ---------------- cross-attention (pre-LN, residual) ----------------
    xn = _layernorm(x, c_g_ref[0], c_b_ref[0])
    q = (jnp.dot(xn.astype(jnp.bfloat16), c_wq_ref[0],
                 preferred_element_type=jnp.float32) + c_bq_ref[0])
    kv = (jnp.dot(enc_ref[...], c_wkv_ref[0],
                  preferred_element_type=jnp.float32) + c_bkv_ref[0])
    _attention(ctx_scr,
               q, kv[:, :d_model], kv[:, d_model:],
               cbias_ref, b_block, lq, lk, n_head, dk, inv_sqrt_dk, attn_ref)
    x = x + (jnp.dot(ctx_scr[...].astype(jnp.bfloat16), c_wo_ref[0],
                     preferred_element_type=jnp.float32) + c_bo_ref[0])

    # ---------------- position-wise FFN (pre-LN, residual) ----------------
    xn = _layernorm(x, f_g_ref[0], f_b_ref[0])
    h = (jnp.dot(xn.astype(jnp.bfloat16), f_w1_ref[0],
                 preferred_element_type=jnp.float32) + f_b1_ref[0])
    h = jnp.maximum(h, 0.0)
    x = x + (jnp.dot(h.astype(jnp.bfloat16), f_w2_ref[0],
                     preferred_element_type=jnp.float32) + f_b2_ref[0])

    x_scr[...] = x

    # final LayerNorm emitted once, after the last layer
    @pl.when(layer == n_layer - 1)
    def _():
        emb_out_ref[...] = _layernorm(x, fin_g_ref[...], fin_b_ref[...])


def _pick_batch_block(batch):
    """Largest batch-shard size that still yields >=2 parallel grid steps."""
    for bb in range(batch // 2, 0, -1):
        if batch % bb == 0:
            return bb
    return batch


def decoder_layers(x0, enc, sbias, cbias, p, n_head, b_block, B, Lt, Ls):
    n_layer = p["s_wqkv"].shape[0]
    D = x0.shape[-1]
    Dh = p["f_w1"].shape[-1]
    n_bb = B // b_block
    grid = (n_bb, n_layer)

    def act_spec(rows, cols):
        return pl.BlockSpec((rows, cols), lambda bo, l: (bo, 0))

    def wspec(d1, d2):                       # per-layer stacked weight
        return pl.BlockSpec((1, d1, d2), lambda bo, l: (l, 0, 0))

    def const_spec(d1, d2):                  # replicated across the whole grid
        return pl.BlockSpec((d1, d2), lambda bo, l: (0, 0))

    kernel = functools.partial(decoder_layers_kernel, n_head=n_head,
                               n_layer=n_layer, b_block=b_block, lq=Lt, lk=Ls)

    in_specs = [
        act_spec(b_block * Lt, D),           # x0
        act_spec(b_block * Ls, D),           # enc
        act_spec(b_block * Lt, Lt),          # self-attn mask bias
        act_spec(b_block * Lt, Ls),          # cross-attn mask bias
        wspec(1, D), wspec(1, D),            # slf ln g / b
        wspec(D, 3 * D), wspec(1, 3 * D),    # fused Wqkv / bqkv
        wspec(D, D), wspec(1, D),            # slf Wo / bo
        wspec(1, D), wspec(1, D),            # enc ln g / b
        wspec(D, D), wspec(1, D),            # enc Wq / bq
        wspec(D, 2 * D), wspec(1, 2 * D),    # fused Wkv / bkv
        wspec(D, D), wspec(1, D),            # enc Wo / bo
        wspec(1, D), wspec(1, D),            # ffn ln g / b
        wspec(D, Dh), wspec(1, Dh),          # ffn W1 / b1
        wspec(Dh, D), wspec(1, D),           # ffn W2 / b2
        const_spec(1, D), const_spec(1, D),  # final ln g / b
    ]
    out_specs = (
        act_spec(b_block * Lt, D),
        pl.BlockSpec((b_block, n_head, Lt, Ls), lambda bo, l: (bo, 0, 0, 0)),
    )
    out_shape = (
        jax.ShapeDtypeStruct((B * Lt, D), jnp.float32),
        jax.ShapeDtypeStruct((B, n_head, Lt, Ls), jnp.float32),
    )
    scratch = [pltpu.VMEM((b_block * Lt, D), jnp.float32),   # resident activation
               pltpu.VMEM((b_block * Lt, D), jnp.float32)]   # per-head context

    return pl.pallas_call(
        kernel, grid=grid, in_specs=in_specs, out_specs=out_specs,
        out_shape=out_shape, scratch_shapes=scratch,
        compiler_params=pltpu.CompilerParams(
            dimension_semantics=("parallel", "arbitrary"),
            vmem_limit_bytes=32 * 1024 * 1024),
    )(x0, enc, sbias, cbias,
      p["s_g"], p["s_b"], p["s_wqkv"], p["s_bqkv"], p["s_wo"], p["s_bo"],
      p["c_g"], p["c_b"], p["c_wq"], p["c_bq"], p["c_wkv"], p["c_bkv"],
      p["c_wo"], p["c_bo"],
      p["f_g"], p["f_b"], p["f_w1"], p["f_b1"], p["f_w2"], p["f_b2"],
      p["final_g"], p["final_b"])


# --------------------------------------------------------------------------
# tied output projection, tiled over the vocabulary
# --------------------------------------------------------------------------
def logits_kernel(emb_ref, w_ref, out_ref):
    # logits = emb @ W^T without materializing the transpose (contract on D)
    out_ref[...] = jax.lax.dot_general(
        emb_ref[...].astype(jnp.bfloat16), w_ref[...],
        (((1,), (1,)), ((), ())), preferred_element_type=jnp.float32)


def tied_logits(emb2d, out_w_bf16, max_vocab_block=2048):
    R, D = emb2d.shape
    V = out_w_bf16.shape[0]
    vb = V if V <= max_vocab_block else max_vocab_block
    grid = (pl.cdiv(V, vb),)
    return pl.pallas_call(
        logits_kernel, grid=grid,
        in_specs=[pl.BlockSpec((R, D), lambda v: (0, 0)),
                  pl.BlockSpec((vb, D), lambda v: (v, 0))],
        out_specs=pl.BlockSpec((R, vb), lambda v: (0, v)),
        out_shape=jax.ShapeDtypeStruct((R, V), jnp.float32),
        compiler_params=pltpu.CompilerParams(
            dimension_semantics=("parallel",),
            vmem_limit_bytes=32 * 1024 * 1024),
    )(emb2d, out_w_bf16)


# --------------------------------------------------------------------------
# parameter init (deterministic, synthetic, weights pre-stacked per layer)
# --------------------------------------------------------------------------
def init_params(key, n_classes, d_model, d_inner, n_layer):
    keys = jax.random.split(key, 1 + n_layer)
    emb = jax.random.normal(keys[0], (n_classes, d_model), jnp.float32)
    emb = emb.at[0].set(0.0)                      # padding_idx = 0

    def dense(k, fi, fo):
        kw, kb = jax.random.split(k)
        bound = 1.0 / fi ** 0.5
        w = jax.random.uniform(kw, (fi, fo), jnp.float32, -bound, bound)
        b = jax.random.uniform(kb, (1, fo), jnp.float32, -bound, bound)
        return w, b

    s_wqkv, s_bqkv, s_wo, s_bo = [], [], [], []
    c_wq, c_bq, c_wkv, c_bkv, c_wo, c_bo = [], [], [], [], [], []
    f_w1, f_b1, f_w2, f_b2 = [], [], [], []
    for lk in keys[1:]:
        ks = jax.random.split(lk, 10)
        wq, bq = dense(ks[0], d_model, d_model)
        wk, bk = dense(ks[1], d_model, d_model)
        wv, bv = dense(ks[2], d_model, d_model)
        wo, bo = dense(ks[3], d_model, d_model)
        s_wqkv.append(jnp.concatenate([wq, wk, wv], axis=1))
        s_bqkv.append(jnp.concatenate([bq, bk, bv], axis=1))
        s_wo.append(wo); s_bo.append(bo)
        wq, bq = dense(ks[4], d_model, d_model)
        wk, bk = dense(ks[5], d_model, d_model)
        wv, bv = dense(ks[6], d_model, d_model)
        wo, bo = dense(ks[7], d_model, d_model)
        c_wq.append(wq); c_bq.append(bq)
        c_wkv.append(jnp.concatenate([wk, wv], axis=1))
        c_bkv.append(jnp.concatenate([bk, bv], axis=1))
        c_wo.append(wo); c_bo.append(bo)
        w1, b1 = dense(ks[8], d_model, d_inner)
        w2, b2 = dense(ks[9], d_inner, d_model)
        f_w1.append(w1); f_b1.append(b1); f_w2.append(w2); f_b2.append(b2)

    def stk(lst, dtype=jnp.float32):
        return jnp.stack(lst).astype(dtype)

    ones = jnp.ones((n_layer, 1, d_model), jnp.float32)
    zeros = jnp.zeros((n_layer, 1, d_model), jnp.float32)
    return dict(
        emb=emb,
        out_w=emb.astype(jnp.bfloat16),           # tied output weight, bf16, pre-cast
        s_g=ones, s_b=zeros,
        s_wqkv=stk(s_wqkv, jnp.bfloat16), s_bqkv=stk(s_bqkv),
        s_wo=stk(s_wo, jnp.bfloat16), s_bo=stk(s_bo),
        c_g=ones, c_b=zeros,
        c_wq=stk(c_wq, jnp.bfloat16), c_bq=stk(c_bq),
        c_wkv=stk(c_wkv, jnp.bfloat16), c_bkv=stk(c_bkv),
        c_wo=stk(c_wo, jnp.bfloat16), c_bo=stk(c_bo),
        f_g=ones, f_b=zeros,
        f_w1=stk(f_w1, jnp.bfloat16), f_b1=stk(f_b1),
        f_w2=stk(f_w2, jnp.bfloat16), f_b2=stk(f_b2),
        final_g=jnp.ones((1, d_model), jnp.float32),
        final_b=jnp.zeros((1, d_model), jnp.float32),
    )


# --------------------------------------------------------------------------
# Decoder forward (inference)
# --------------------------------------------------------------------------
def decoder_forward(params, tgt_seq, enc_out, enc_mask, n_head):
    B, Lt = tgt_seq.shape
    Ls = enc_out.shape[1]
    n_classes, D = params["emb"].shape

    # embedding * sqrt(d_model) + sinusoidal positional embedding (plain-JAX glue)
    dec = jnp.take(params["emb"], tgt_seq, axis=0) * (D ** 0.5)      # (B, Lt, D)
    pos = jnp.arange(Lt, dtype=jnp.float32)
    inv_freq = 1.0 / (10000.0 ** (jnp.arange(0, D, 2, dtype=jnp.float32) / D))
    sinusoid = pos[:, None] * inv_freq[None, :]
    # TODO(synk): verify against reference PositionalEmbedding (concat vs interleave).
    pos_emb = jnp.concatenate([jnp.sin(sinusoid), jnp.cos(sinusoid)], axis=-1)
    dec = (dec + pos_emb[None, :, :]).astype(jnp.float32)
    # TODO(synk): emb_drop / dropout / layer_drop are training-time stochastic ops
    # -> identity in this inference kernel.

    # additive mask biases (0.0 keep, -1e9 blocked) precomputed once in glue
    pad = (tgt_seq == 0)
    tri = jnp.triu(jnp.ones((Lt, Lt), dtype=bool), k=1)
    slf_bias = jnp.where(pad[:, None, :] | tri[None, :, :],
                         -1e9, 0.0).astype(jnp.float32)              # (B, Lt, Lt)
    enc_bias = jnp.where((enc_mask == 0)[:, None, :], -1e9, 0.0)
    enc_bias = jnp.broadcast_to(enc_bias, (B, Lt, Ls)).astype(jnp.float32)

    b_block = _pick_batch_block(B)

    emb_out2d, attn = decoder_layers(
        dec.reshape(B * Lt, D),
        enc_out.reshape(B * Ls, D).astype(jnp.bfloat16),
        slf_bias.reshape(B * Lt, Lt),
        enc_bias.reshape(B * Lt, Ls),
        params, n_head, b_block, B, Lt, Ls)

    logits2d = tied_logits(emb_out2d, params["out_w"])

    return (logits2d.reshape(B, Lt, n_classes), attn,
            emb_out2d.reshape(B, Lt, D))


# --------------------------------------------------------------------------
if __name__ == "__main__":
    n_classes, d_model, d_inner, n_layer, n_head = 40, 32, 64, 2, 4
    B, Lt, Ls = 2, 8, 16

    key = jax.random.PRNGKey(0)
    k_p, k_t, k_e = jax.random.split(key, 3)

    params = init_params(k_p, n_classes, d_model, d_inner, n_layer)

    tgt_seq = jax.random.randint(k_t, (B, Lt), 1, n_classes, dtype=jnp.int32)
    tgt_seq = tgt_seq.at[1, -2:].set(0)            # trailing padding tokens
    enc_out = jax.random.normal(k_e, (B, Ls, d_model), jnp.float32)
    enc_mask = jnp.ones((B, Ls), jnp.int32).at[1, -4:].set(0)

    logits, attn, emb_out = decoder_forward(params, tgt_seq, enc_out,
                                            enc_mask, n_head)
    jax.block_until_ready((logits, attn, emb_out))

    assert logits.shape == (B, Lt, n_classes)
    assert attn.shape == (B, n_head, Lt, Ls)
    assert emb_out.shape == (B, Lt, d_model)
    assert bool(jnp.isfinite(logits).all())
    print("KERNEL_OK")
</pallas_src>

<mosaic_0001>
module attributes {stable_mosaic.version = 11 : i64} {
  func.func @decoder_layers_kernel(%arg0: i32, %arg1: i32, %arg2: memref<8x32xf32, #tpu.memory_space<vmem>>, %arg3: memref<16x32xbf16, #tpu.memory_space<vmem>>, %arg4: memref<8x8xf32, #tpu.memory_space<vmem>>, %arg5: memref<8x16xf32, #tpu.memory_space<vmem>>, %arg6: memref<1x1x32xf32, #tpu.memory_space<vmem>>, %arg7: memref<1x1x32xf32, #tpu.memory_space<vmem>>, %arg8: memref<1x32x96xbf16, #tpu.memory_space<vmem>>, %arg9: memref<1x1x96xf32, #tpu.memory_space<vmem>>, %arg10: memref<1x32x32xbf16, #tpu.memory_space<vmem>>, %arg11: memref<1x1x32xf32, #tpu.memory_space<vmem>>, %arg12: memref<1x1x32xf32, #tpu.memory_space<vmem>>, %arg13: memref<1x1x32xf32, #tpu.memory_space<vmem>>, %arg14: memref<1x32x32xbf16, #tpu.memory_space<vmem>>, %arg15: memref<1x1x32xf32, #tpu.memory_space<vmem>>, %arg16: memref<1x32x64xbf16, #tpu.memory_space<vmem>>, %arg17: memref<1x1x64xf32, #tpu.memory_space<vmem>>, %arg18: memref<1x32x32xbf16, #tpu.memory_space<vmem>>, %arg19: memref<1x1x32xf32, #tpu.memory_space<vmem>>, %arg20: memref<1x1x32xf32, #tpu.memory_space<vmem>>, %arg21: memref<1x1x32xf32, #tpu.memory_space<vmem>>, %arg22: memref<1x32x64xbf16, #tpu.memory_space<vmem>>, %arg23: memref<1x1x64xf32, #tpu.memory_space<vmem>>, %arg24: memref<1x64x32xbf16, #tpu.memory_space<vmem>>, %arg25: memref<1x1x32xf32, #tpu.memory_space<vmem>>, %arg26: memref<1x32xf32, #tpu.memory_space<vmem>>, %arg27: memref<1x32xf32, #tpu.memory_space<vmem>>, %arg28: memref<8x32xf32, #tpu.memory_space<vmem>>, %arg29: memref<1x4x8x16xf32, #tpu.memory_space<vmem>>, %arg30: memref<8x32xf32, #tpu.memory_space<vmem>>, %arg31: memref<8x32xf32, #tpu.memory_space<vmem>>) attributes {dimension_semantics = [#tpu.dimension_semantics<parallel>, #tpu.dimension_semantics<arbitrary>], iteration_bounds = array<i64: 2, 2>, scalar_prefetch = 0 : i64, scratch_operands = 2 : i64, tpu.core_type = #tpu.core_type<tc>, window_params = [{transform_indices = @transform_0, window_bounds = array<i64: 8, 32>}, {transform_indices = @transform_1, window_bounds = array<i64: 16, 32>}, {transform_indices = @transform_2, window_bounds = array<i64: 8, 8>}, {transform_indices = @transform_3, window_bounds = array<i64: 8, 16>}, {transform_indices = @transform_4, window_bounds = array<i64: 1, 1, 32>}, {transform_indices = @transform_5, window_bounds = array<i64: 1, 1, 32>}, {transform_indices = @transform_6, window_bounds = array<i64: 1, 32, 96>}, {transform_indices = @transform_7, window_bounds = array<i64: 1, 1, 96>}, {transform_indices = @transform_8, window_bounds = array<i64: 1, 32, 32>}, {transform_indices = @transform_9, window_bounds = array<i64: 1, 1, 32>}, {transform_indices = @transform_10, window_bounds = array<i64: 1, 1, 32>}, {transform_indices = @transform_11, window_bounds = array<i64: 1, 1, 32>}, {transform_indices = @transform_12, window_bounds = array<i64: 1, 32, 32>}, {transform_indices = @transform_13, window_bounds = array<i64: 1, 1, 32>}, {transform_indices = @transform_14, window_bounds = array<i64: 1, 32, 64>}, {transform_indices = @transform_15, window_bounds = array<i64: 1, 1, 64>}, {transform_indices = @transform_16, window_bounds = array<i64: 1, 32, 32>}, {transform_indices = @transform_17, window_bounds = array<i64: 1, 1, 32>}, {transform_indices = @transform_18, window_bounds = array<i64: 1, 1, 32>}, {transform_indices = @transform_19, window_bounds = array<i64: 1, 1, 32>}, {transform_indices = @transform_20, window_bounds = array<i64: 1, 32, 64>}, {transform_indices = @transform_21, window_bounds = array<i64: 1, 1, 64>}, {transform_indices = @transform_22, window_bounds = array<i64: 1, 64, 32>}, {transform_indices = @transform_23, window_bounds = array<i64: 1, 1, 32>}, {pipeline_mode = #tpu.pipeline_mode<synchronous>, transform_indices = @transform_24, window_bounds = array<i64: 1, 32>}, {pipeline_mode = #tpu.pipeline_mode<synchronous>, transform_indices = @transform_25, window_bounds = array<i64: 1, 32>}, {transform_indices = @transform_26, window_bounds = array<i64: 8, 32>}, {transform_indices = @transform_27, window_bounds = array<i64: 1, 4, 8, 16>}]} {
    %c0_i32 = arith.constant 0 : i32
    %0 = arith.cmpi eq, %arg1, %c0_i32 : i32
    %1 = arith.extui %0 : i1 to i32
    %c0_i32_0 = arith.constant 0 : i32
    %2 = arith.cmpi ne, %1, %c0_i32_0 : i32
    scf.if %2 {
      %c0_163 = arith.constant 0 : index
      %c0_164 = arith.constant 0 : index
      %352 = vector.load %arg2[%c0_163, %c0_164] : memref<8x32xf32, #tpu.memory_space<vmem>>, vector<8x32xf32>
      %c0_165 = arith.constant 0 : index
      %c0_166 = arith.constant 0 : index
      %353 = vector.load %arg30[%c0_165, %c0_166] : memref<8x32xf32, #tpu.memory_space<vmem>>, vector<8x32xf32>
      tpu.vector_store %arg30[%c0_165, %c0_166], %352 {strides = array<i32>} : memref<8x32xf32, #tpu.memory_space<vmem>>, vector<8x32xf32>,
    } else {
    }
    %c0 = arith.constant 0 : index
    %c0_1 = arith.constant 0 : index
    %3 = vector.load %arg30[%c0, %c0_1] : memref<8x32xf32, #tpu.memory_space<vmem>>, vector<8x32xf32>
    %c0_2 = arith.constant 0 : index
    %c0_3 = arith.constant 0 : index
    %c0_4 = arith.constant 0 : index
    %4 = vector.load %arg6[%c0_2, %c0_3, %c0_4] : memref<1x1x32xf32, #tpu.memory_space<vmem>>, vector<1x1x32xf32>
    %5 = vector.shape_cast %4 : vector<1x1x32xf32> to vector<1x32xf32>
    %c0_5 = arith.constant 0 : index
    %c0_6 = arith.constant 0 : index
    %c0_7 = arith.constant 0 : index
    %6 = vector.load %arg7[%c0_5, %c0_6, %c0_7] : memref<1x1x32xf32, #tpu.memory_space<vmem>>, vector<1x1x32xf32>
    %7 = vector.shape_cast %6 : vector<1x1x32xf32> to vector<1x32xf32>
    %cst = arith.constant dense<0.000000e+00> : vector<8xf32>
    %8 = vector.multi_reduction <add>, %3, %cst [1] : vector<8x32xf32> to vector<8xf32>
    %9 = vector.shape_cast %8 : vector<8xf32> to vector<8x1xf32>
    %cst_8 = arith.constant 3.200000e+01 : f32
    %10 = vector.broadcast %cst_8 : f32 to vector<8x1xf32>
    %11 = arith.divf %9, %10 : vector<8x1xf32>
    %12 = arith.mulf %3, %3 : vector<8x32xf32>
    %cst_9 = arith.constant dense<0.000000e+00> : vector<8xf32>
    %13 = vector.multi_reduction <add>, %12, %cst_9 [1] : vector<8x32xf32> to vector<8xf32>
    %14 = vector.shape_cast %13 : vector<8xf32> to vector<8x1xf32>
    %cst_10 = arith.constant 3.200000e+01 : f32
    %15 = vector.broadcast %cst_10 : f32 to vector<8x1xf32>
    %16 = arith.divf %14, %15 : vector<8x1xf32>
    %17 = arith.mulf %11, %11 : vector<8x1xf32>
    %18 = arith.subf %16, %17 : vector<8x1xf32>
    %19 = vector.broadcast %11 : vector<8x1xf32> to vector<8x32xf32>
    %20 = arith.subf %3, %19 : vector<8x32xf32>
    %cst_11 = arith.constant 9.99999974E-6 : f32
    %21 = vector.broadcast %cst_11 : f32 to vector<8x1xf32>
    %22 = arith.addf %18, %21 : vector<8x1xf32>
    %23 = math.rsqrt %22 : vector<8x1xf32>
    %24 = vector.broadcast %23 : vector<8x1xf32> to vector<8x32xf32>
    %25 = arith.mulf %20, %24 : vector<8x32xf32>
    %26 = vector.broadcast %5 : vector<1x32xf32> to vector<8x32xf32>
    %27 = arith.mulf %25, %26 : vector<8x32xf32>
    %28 = vector.broadcast %7 : vector<1x32xf32> to vector<8x32xf32>
    %29 = arith.addf %27, %28 : vector<8x32xf32>
    %30 = arith.truncf %29 : vector<8x32xf32> to vector<8x32xbf16>
    %c0_12 = arith.constant 0 : index
    %c0_13 = arith.constant 0 : index
    %c0_14 = arith.constant 0 : index
    %31 = vector.load %arg8[%c0_12, %c0_13, %c0_14] : memref<1x32x96xbf16, #tpu.memory_space<vmem>>, vector<1x32x96xbf16>
    %32 = vector.shape_cast %31 : vector<1x32x96xbf16> to vector<32x96xbf16>
    %cst_15 = arith.constant dense<0.000000e+00> : vector<8x96xf32>
    %33 = tpu.matmul %30, %32, %cst_15 {dimension_numbers = #tpu.dot_dimension_numbers<[1], [0], [0], [1], [0, 0, 1, 1], [], []>} : vector<8x32xbf16>, vector<32x96xbf16>, vector<8x96xf32> -> vector<8x96xf32>
    %c0_16 = arith.constant 0 : index
    %c0_17 = arith.constant 0 : index
    %c0_18 = arith.constant 0 : index
    %34 = vector.load %arg9[%c0_16, %c0_17, %c0_18] : memref<1x1x96xf32, #tpu.memory_space<vmem>>, vector<1x1x96xf32>
    %35 = vector.shape_cast %34 : vector<1x1x96xf32> to vector<1x96xf32>
    %36 = vector.broadcast %35 : vector<1x96xf32> to vector<8x96xf32>
    %37 = arith.addf %33, %36 : vector<8x96xf32>
    %38 = vector.extract_strided_slice %37 {offsets = [0, 0], sizes = [8, 32], strides = [1, 1]} : vector<8x96xf32> to vector<8x32xf32>
    %39 = vector.extract_strided_slice %37 {offsets = [0, 32], sizes = [8, 32], strides = [1, 1]} : vector<8x96xf32> to vector<8x32xf32>
    %40 = vector.extract_strided_slice %37 {offsets = [0, 64], sizes = [8, 32], strides = [1, 1]} : vector<8x96xf32> to vector<8x32xf32>
    %c0_19 = arith.constant 0 : index
    %c0_20 = arith.constant 0 : index
    %41 = vector.load %arg4[%c0_19, %c0_20] : memref<8x8xf32, #tpu.memory_space<vmem>>, vector<8x8xf32>
    %42 = vector.extract_strided_slice %38 {offsets = [0, 0], sizes = [8, 8], strides = [1, 1]} : vector<8x32xf32> to vector<8x8xf32>
    %43 = arith.truncf %42 : vector<8x8xf32> to vector<8x8xbf16>
    %44 = vector.extract_strided_slice %39 {offsets = [0, 0], sizes = [8, 8], strides = [1, 1]} : vector<8x32xf32> to vector<8x8xf32>
    %45 = arith.truncf %44 : vector<8x8xf32> to vector<8x8xbf16>
    %46 = vector.extract_strided_slice %40 {offsets = [0, 0], sizes = [8, 8], strides = [1, 1]} : vector<8x32xf32> to vector<8x8xf32>
    %47 = arith.truncf %46 : vector<8x8xf32> to vector<8x8xbf16>
    %cst_21 = arith.constant dense<0.000000e+00> : vector<8x8xf32>
    %48 = tpu.matmul %43, %45, %cst_21 {dimension_numbers = #tpu.dot_dimension_numbers<[1], [1], [0], [0], [0, 0, 1, 0], [], []>} : vector<8x8xbf16>, vector<8x8xbf16>, vector<8x8xf32> -> vector<8x8xf32>
    %cst_22 = arith.constant 0.353553385 : f32
    %49 = vector.broadcast %cst_22 : f32 to vector<8x8xf32>
    %50 = arith.mulf %48, %49 : vector<8x8xf32>
    %51 = arith.addf %50, %41 : vector<8x8xf32>
    %cst_23 = arith.constant dense<0xFF800000> : vector<8xf32>
    %52 = vector.multi_reduction <maximumf>, %51, %cst_23 [1] : vector<8x8xf32> to vector<8xf32>
    %53 = vector.shape_cast %52 : vector<8xf32> to vector<8x1xf32>
    %54 = vector.broadcast %53 : vector<8x1xf32> to vector<8x8xf32>
    %55 = arith.subf %51, %54 : vector<8x8xf32>
    %56 = math.exp %55 : vector<8x8xf32>
    %cst_24 = arith.constant dense<0.000000e+00> : vector<8xf32>
    %57 = vector.multi_reduction <add>, %56, %cst_24 [1] : vector<8x8xf32> to vector<8xf32>
    %58 = vector.shape_cast %57 : vector<8xf32> to vector<8x1xf32>
    %59 = tpu.reciprocal %58 {approx = true} : vector<8x1xf32> -> vector<8x1xf32>
    %60 = vector.broadcast %59 : vector<8x1xf32> to vector<8x8xf32>
    %61 = arith.mulf %56, %60 : vector<8x8xf32>
    %62 = arith.truncf %61 : vector<8x8xf32> to vector<8x8xbf16>
    %cst_25 = arith.constant dense<0.000000e+00> : vector<8x8xf32>
    %63 = tpu.matmul %62, %47, %cst_25 {dimension_numbers = #tpu.dot_dimension_numbers<[1], [0], [0], [1], [0, 0, 1, 1], [], []>} : vector<8x8xbf16>, vector<8x8xbf16>, vector<8x8xf32> -> vector<8x8xf32>
    %c0_26 = arith.constant 0 : index
    %c0_27 = arith.constant 0 : index
    %64 = vector.load %arg31[%c0_26, %c0_27] : memref<8x32xf32, #tpu.memory_space<vmem>>, vector<8x8xf32>
    tpu.vector_store %arg31[%c0_26, %c0_27], %63 {strides = array<i32>} : memref<8x32xf32, #tpu.memory_space<vmem>>, vector<8x8xf32>,
    %65 = vector.extract_strided_slice %38 {offsets = [0, 8], sizes = [8, 8], strides = [1, 1]} : vector<8x32xf32> to vector<8x8xf32>
    %66 = arith.truncf %65 : vector<8x8xf32> to vector<8x8xbf16>
    %67 = vector.extract_strided_slice %39 {offsets = [0, 8], sizes = [8, 8], strides = [1, 1]} : vector<8x32xf32> to vector<8x8xf32>
    %68 = arith.truncf %67 : vector<8x8xf32> to vector<8x8xbf16>
    %69 = vector.extract_strided_slice %40 {offsets = [0, 8], sizes = [8, 8], strides = [1, 1]} : vector<8x32xf32> to vector<8x8xf32>
    %70 = arith.truncf %69 : vector<8x8xf32> to vector<8x8xbf16>
    %cst_28 = arith.constant dense<0.000000e+00> : vector<8x8xf32>
    %71 = tpu.matmul %66, %68, %cst_28 {dimension_numbers = #tpu.dot_dimension_numbers<[1], [1], [0], [0], [0, 0, 1, 0], [], []>} : vector<8x8xbf16>, vector<8x8xbf16>, vector<8x8xf32> -> vector<8x8xf32>
    %cst_29 = arith.constant 0.353553385 : f32
    %72 = vector.broadcast %cst_29 : f32 to vector<8x8xf32>
    %73 = arith.mulf %71, %72 : vector<8x8xf32>
    %74 = arith.addf %73, %41 : vector<8x8xf32>
    %cst_30 = arith.constant dense<0xFF800000> : vector<8xf32>
    %75 = vector.multi_reduction <maximumf>, %74, %cst_30 [1] : vector<8x8xf32> to vector<8xf32>
    %76 = vector.shape_cast %75 : vector<8xf32> to vector<8x1xf32>
    %77 = vector.broadcast %76 : vector<8x1xf32> to vector<8x8xf32>
    %78 = arith.subf %74, %77 : vector<8x8xf32>
    %79 = math.exp %78 : vector<8x8xf32>
    %cst_31 = arith.constant dense<0.000000e+00> : vector<8xf32>
    %80 = vector.multi_reduction <add>, %79, %cst_31 [1] : vector<8x8xf32> to vector<8xf32>
    %81 = vector.shape_cast %80 : vector<8xf32> to vector<8x1xf32>
    %82 = tpu.reciprocal %81 {approx = true} : vector<8x1xf32> -> vector<8x1xf32>
    %83 = vector.broadcast %82 : vector<8x1xf32> to vector<8x8xf32>
    %84 = arith.mulf %79, %83 : vector<8x8xf32>
    %85 = arith.truncf %84 : vector<8x8xf32> to vector<8x8xbf16>
    %cst_32 = arith.constant dense<0.000000e+00> : vector<8x8xf32>
    %86 = tpu.matmul %85, %70, %cst_32 {dimension_numbers = #tpu.dot_dimension_numbers<[1], [0], [0], [1], [0, 0, 1, 1], [], []>} : vector<8x8xbf16>, vector<8x8xbf16>, vector<8x8xf32> -> vector<8x8xf32>
    %c0_33 = arith.constant 0 : index
    %c8 = arith.constant 8 : index
    %87 = vector.load %arg31[%c0_33, %c8] : memref<8x32xf32, #tpu.memory_space<vmem>>, vector<8x8xf32>
    tpu.vector_store %arg31[%c0_33, %c8], %86 {strides = array<i32>} : memref<8x32xf32, #tpu.memory_space<vmem>>, vector<8x8xf32>,
    %88 = vector.extract_strided_slice %38 {offsets = [0, 16], sizes = [8, 8], strides = [1, 1]} : vector<8x32xf32> to vector<8x8xf32>
    %89 = arith.truncf %88 : vector<8x8xf32> to vector<8x8xbf16>
    %90 = vector.extract_strided_slice %39 {offsets = [0, 16], sizes = [8, 8], strides = [1, 1]} : vector<8x32xf32> to vector<8x8xf32>
    %91 = arith.truncf %90 : vector<8x8xf32> to vector<8x8xbf16>
    %92 = vector.extract_strided_slice %40 {offsets = [0, 16], sizes = [8, 8], strides = [1, 1]} : vector<8x32xf32> to vector<8x8xf32>
    %93 = arith.truncf %92 : vector<8x8xf32> to vector<8x8xbf16>
    %cst_34 = arith.constant dense<0.000000e+00> : vector<8x8xf32>
    %94 = tpu.matmul %89, %91, %cst_34 {dimension_numbers = #tpu.dot_dimension_numbers<[1], [1], [0], [0], [0, 0, 1, 0], [], []>} : vector<8x8xbf16>, vector<8x8xbf16>, vector<8x8xf32> -> vector<8x8xf32>
    %cst_35 = arith.constant 0.353553385 : f32
    %95 = vector.broadcast %cst_35 : f32 to vector<8x8xf32>
    %96 = arith.mulf %94, %95 : vector<8x8xf32>
    %97 = arith.addf %96, %41 : vector<8x8xf32>
    %cst_36 = arith.constant dense<0xFF800000> : vector<8xf32>
    %98 = vector.multi_reduction <maximumf>, %97, %cst_36 [1] : vector<8x8xf32> to vector<8xf32>
    %99 = vector.shape_cast %98 : vector<8xf32> to vector<8x1xf32>
    %100 = vector.broadcast %99 : vector<8x1xf32> to vector<8x8xf32>
    %101 = arith.subf %97, %100 : vector<8x8xf32>
    %102 = math.exp %101 : vector<8x8xf32>
    %cst_37 = arith.constant dense<0.000000e+00> : vector<8xf32>
    %103 = vector.multi_reduction <add>, %102, %cst_37 [1] : vector<8x8xf32> to vector<8xf32>
    %104 = vector.shape_cast %103 : vector<8xf32> to vector<8x1xf32>
    %105 = tpu.reciprocal %104 {approx = true} : vector<8x1xf32> -> vector<8x1xf32>
    %106 = vector.broadcast %105 : vector<8x1xf32> to vector<8x8xf32>
    %107 = arith.mulf %102, %106 : vector<8x8xf32>
    %108 = arith.truncf %107 : vector<8x8xf32> to vector<8x8xbf16>
    %cst_38 = arith.constant dense<0.000000e+00> : vector<8x8xf32>
    %109 = tpu.matmul %108, %93, %cst_38 {dimension_numbers = #tpu.dot_dimension_numbers<[1], [0], [0], [1], [0, 0, 1, 1], [], []>} : vector<8x8xbf16>, vector<8x8xbf16>, vector<8x8xf32> -> vector<8x8xf32>
    %c0_39 = arith.constant 0 : index
    %c16 = arith.constant 16 : index
    %110 = vector.load %arg31[%c0_39, %c16] : memref<8x32xf32, #tpu.memory_space<vmem>>, vector<8x8xf32>
    tpu.vector_store %arg31[%c0_39, %c16], %109 {strides = array<i32>} : memref<8x32xf32, #tpu.memory_space<vmem>>, vector<8x8xf32>,
    %111 = vector.extract_strided_slice %38 {offsets = [0, 24], sizes = [8, 8], strides = [1, 1]} : vector<8x32xf32> to vector<8x8xf32>
    %112 = arith.truncf %111 : vector<8x8xf32> to vector<8x8xbf16>
    %113 = vector.extract_strided_slice %39 {offsets = [0, 24], sizes = [8, 8], strides = [1, 1]} : vector<8x32xf32> to vector<8x8xf32>
    %114 = arith.truncf %113 : vector<8x8xf32> to vector<8x8xbf16>
    %115 = vector.extract_strided_slice %40 {offsets = [0, 24], sizes = [8, 8], strides = [1, 1]} : vector<8x32xf32> to vector<8x8xf32>
    %116 = arith.truncf %115 : vector<8x8xf32> to vector<8x8xbf16>
    %cst_40 = arith.constant dense<0.000000e+00> : vector<8x8xf32>
    %117 = tpu.matmul %112, %114, %cst_40 {dimension_numbers = #tpu.dot_dimension_numbers<[1], [1], [0], [0], [0, 0, 1, 0], [], []>} : vector<8x8xbf16>, vector<8x8xbf16>, vector<8x8xf32> -> vector<8x8xf32>
    %cst_41 = arith.constant 0.353553385 : f32
    %118 = vector.broadcast %cst_41 : f32 to vector<8x8xf32>
    %119 = arith.mulf %117, %118 : vector<8x8xf32>
    %120 = arith.addf %119, %41 : vector<8x8xf32>
    %cst_42 = arith.constant dense<0xFF800000> : vector<8xf32>
    %121 = vector.multi_reduction <maximumf>, %120, %cst_42 [1] : vector<8x8xf32> to vector<8xf32>
    %122 = vector.shape_cast %121 : vector<8xf32> to vector<8x1xf32>
    %123 = vector.broadcast %122 : vector<8x1xf32> to vector<8x8xf32>
    %124 = arith.subf %120, %123 : vector<8x8xf32>
    %125 = math.exp %124 : vector<8x8xf32>
    %cst_43 = arith.constant dense<0.000000e+00> : vector<8xf32>
    %126 = vector.multi_reduction <add>, %125, %cst_43 [1] : vector<8x8xf32> to vector<8xf32>
    %127 = vector.shape_cast %126 : vector<8xf32> to vector<8x1xf32>
    %128 = tpu.reciprocal %127 {approx = true} : vector<8x1xf32> -> vector<8x1xf32>
    %129 = vector.broadcast %128 : vector<8x1xf32> to vector<8x8xf32>
    %130 = arith.mulf %125, %129 : vector<8x8xf32>
    %131 = arith.truncf %130 : vector<8x8xf32> to vector<8x8xbf16>
    %cst_44 = arith.constant dense<0.000000e+00> : vector<8x8xf32>
    %132 = tpu.matmul %131, %116, %cst_44 {dimension_numbers = #tpu.dot_dimension_numbers<[1], [0], [0], [1], [0, 0, 1, 1], [], []>} : vector<8x8xbf16>, vector<8x8xbf16>, vector<8x8xf32> -> vector<8x8xf32>
    %c0_45 = arith.constant 0 : index
    %c24 = arith.constant 24 : index
    %133 = vector.load %arg31[%c0_45, %c24] : memref<8x32xf32, #tpu.memory_space<vmem>>, vector<8x8xf32>
    tpu.vector_store %arg31[%c0_45, %c24], %132 {strides = array<i32>} : memref<8x32xf32, #tpu.memory_space<vmem>>, vector<8x8xf32>,
    %c0_46 = arith.constant 0 : index
    %c0_47 = arith.constant 0 : index
    %134 = vector.load %arg31[%c0_46, %c0_47] : memref<8x32xf32, #tpu.memory_space<vmem>>, vector<8x32xf32>
    %135 = arith.truncf %134 : vector<8x32xf32> to vector<8x32xbf16>
    %c0_48 = arith.constant 0 : index
    %c0_49 = arith.constant 0 : index
    %c0_50 = arith.constant 0 : index
    %136 = vector.load %arg10[%c0_48, %c0_49, %c0_50] : memref<1x32x32xbf16, #tpu.memory_space<vmem>>, vector<1x32x32xbf16>
    %137 = vector.shape_cast %136 : vector<1x32x32xbf16> to vector<32x32xbf16>
    %cst_51 = arith.constant dense<0.000000e+00> : vector<8x32xf32>
    %138 = tpu.matmul %135, %137, %cst_51 {dimension_numbers = #tpu.dot_dimension_numbers<[1], [0], [0], [1], [0, 0, 1, 1], [], []>} : vector<8x32xbf16>, vector<32x32xbf16>, vector<8x32xf32> -> vector<8x32xf32>
    %c0_52 = arith.constant 0 : index
    %c0_53 = arith.constant 0 : index
    %c0_54 = arith.constant 0 : index
    %139 = vector.load %arg11[%c0_52, %c0_53, %c0_54] : memref<1x1x32xf32, #tpu.memory_space<vmem>>, vector<1x1x32xf32>
    %140 = vector.shape_cast %139 : vector<1x1x32xf32> to vector<1x32xf32>
    %141 = vector.broadcast %140 : vector<1x32xf32> to vector<8x32xf32>
    %142 = arith.addf %138, %141 : vector<8x32xf32>
    %143 = arith.addf %3, %142 : vector<8x32xf32>
    %c0_55 = arith.constant 0 : index
    %c0_56 = arith.constant 0 : index
    %c0_57 = arith.constant 0 : index
    %144 = vector.load %arg12[%c0_55, %c0_56, %c0_57] : memref<1x1x32xf32, #tpu.memory_space<vmem>>, vector<1x1x32xf32>
    %145 = vector.shape_cast %144 : vector<1x1x32xf32> to vector<1x32xf32>
    %c0_58 = arith.constant 0 : index
    %c0_59 = arith.constant 0 : index
    %c0_60 = arith.constant 0 : index
    %146 = vector.load %arg13[%c0_58, %c0_59, %c0_60] : memref<1x1x32xf32, #tpu.memory_space<vmem>>, vector<1x1x32xf32>
    %147 = vector.shape_cast %146 : vector<1x1x32xf32> to vector<1x32xf32>
    %cst_61 = arith.constant dense<0.000000e+00> : vector<8xf32>
    %148 = vector.multi_reduction <add>, %143, %cst_61 [1] : vector<8x32xf32> to vector<8xf32>
    %149 = vector.shape_cast %148 : vector<8xf32> to vector<8x1xf32>
    %cst_62 = arith.constant 3.200000e+01 : f32
    %150 = vector.broadcast %cst_62 : f32 to vector<8x1xf32>
    %151 = arith.divf %149, %150 : vector<8x1xf32>
    %152 = arith.mulf %143, %143 : vector<8x32xf32>
    %cst_63 = arith.constant dense<0.000000e+00> : vector<8xf32>
    %153 = vector.multi_reduction <add>, %152, %cst_63 [1] : vector<8x32xf32> to vector<8xf32>
    %154 = vector.shape_cast %153 : vector<8xf32> to vector<8x1xf32>
    %cst_64 = arith.constant 3.200000e+01 : f32
    %155 = vector.broadcast %cst_64 : f32 to vector<8x1xf32>
    %156 = arith.divf %154, %155 : vector<8x1xf32>
    %157 = arith.mulf %151, %151 : vector<8x1xf32>
    %158 = arith.subf %156, %157 : vector<8x1xf32>
    %159 = vector.broadcast %151 : vector<8x1xf32> to vector<8x32xf32>
    %160 = arith.subf %143, %159 : vector<8x32xf32>
    %cst_65 = arith.constant 9.99999974E-6 : f32
    %161 = vector.broadcast %cst_65 : f32 to vector<8x1xf32>
    %162 = arith.addf %158, %161 : vector<8x1xf32>
    %163 = math.rsqrt %162 : vector<8x1xf32>
    %164 = vector.broadcast %163 : vector<8x1xf32> to vector<8x32xf32>
    %165 = arith.mulf %160, %164 : vector<8x32xf32>
    %166 = vector.broadcast %145 : vector<1x32xf32> to vector<8x32xf32>
    %167 = arith.mulf %165, %166 : vector<8x32xf32>
    %168 = vector.broadcast %147 : vector<1x32xf32> to vector<8x32xf32>
    %169 = arith.addf %167, %168 : vector<8x32xf32>
    %170 = arith.truncf %169 : vector<8x32xf32> to vector<8x32xbf16>
    %c0_66 = arith.constant 0 : index
    %c0_67 = arith.constant 0 : index
    %c0_68 = arith.constant 0 : index
    %171 = vector.load %arg14[%c0_66, %c0_67, %c0_68] : memref<1x32x32xbf16, #tpu.memory_space<vmem>>, vector<1x32x32xbf16>
    %172 = vector.shape_cast %171 : vector<1x32x32xbf16> to vector<32x32xbf16>
    %cst_69 = arith.constant dense<0.000000e+00> : vector<8x32xf32>
    %173 = tpu.matmul %170, %172, %cst_69 {dimension_numbers = #tpu.dot_dimension_numbers<[1], [0], [0], [1], [0, 0, 1, 1], [], []>} : vector<8x32xbf16>, vector<32x32xbf16>, vector<8x32xf32> -> vector<8x32xf32>
    %c0_70 = arith.constant 0 : index
    %c0_71 = arith.constant 0 : index
    %c0_72 = arith.constant 0 : index
    %174 = vector.load %arg15[%c0_70, %c0_71, %c0_72] : memref<1x1x32xf32, #tpu.memory_space<vmem>>, vector<1x1x32xf32>
    %175 = vector.shape_cast %174 : vector<1x1x32xf32> to vector<1x32xf32>
    %176 = vector.broadcast %175 : vector<1x32xf32> to vector<8x32xf32>
    %177 = arith.addf %173, %176 : vector<8x32xf32>
    %c0_73 = arith.constant 0 : index
    %c0_74 = arith.constant 0 : index
    %178 = vector.load %arg3[%c0_73, %c0_74] : memref<16x32xbf16, #tpu.memory_space<vmem>>, vector<16x32xbf16>
    %c0_75 = arith.constant 0 : index
    %c0_76 = arith.constant 0 : index
    %c0_77 = arith.constant 0 : index
    %179 = vector.load %arg16[%c0_75, %c0_76, %c0_77] : memref<1x32x64xbf16, #tpu.memory_space<vmem>>, vector<1x32x64xbf16>
    %180 = vector.shape_cast %179 : vector<1x32x64xbf16> to vector<32x64xbf16>
    %cst_78 = arith.constant dense<0.000000e+00> : vector<16x64xf32>
    %181 = tpu.matmul %178, %180, %cst_78 {dimension_numbers = #tpu.dot_dimension_numbers<[1], [0], [0], [1], [0, 0, 1, 1], [], []>} : vector<16x32xbf16>, vector<32x64xbf16>, vector<16x64xf32> -> vector<16x64xf32>
    %c0_79 = arith.constant 0 : index
    %c0_80 = arith.constant 0 : index
    %c0_81 = arith.constant 0 : index
    %182 = vector.load %arg17[%c0_79, %c0_80, %c0_81] : memref<1x1x64xf32, #tpu.memory_space<vmem>>, vector<1x1x64xf32>
    %183 = vector.shape_cast %182 : vector<1x1x64xf32> to vector<1x64xf32>
    %184 = vector.broadcast %183 : vector<1x64xf32> to vector<16x64xf32>
    %185 = arith.addf %181, %184 : vector<16x64xf32>
    %186 = vector.extract_strided_slice %185 {offsets = [0, 0], sizes = [16, 32], strides = [1, 1]} : vector<16x64xf32> to vector<16x32xf32>
    %187 = vector.extract_strided_slice %185 {offsets = [0, 32], sizes = [16, 32], strides = [1, 1]} : vector<16x64xf32> to vector<16x32xf32>
    %c0_82 = arith.constant 0 : index
    %c0_83 = arith.constant 0 : index
    %188 = vector.load %arg5[%c0_82, %c0_83] : memref<8x16xf32, #tpu.memory_space<vmem>>, vector<8x16xf32>
    %189 = vector.extract_strided_slice %177 {offsets = [0, 0], sizes = [8, 8], strides = [1, 1]} : vector<8x32xf32> to vector<8x8xf32>
    %190 = arith.truncf %189 : vector<8x8xf32> to vector<8x8xbf16>
    %191 = vector.extract_strided_slice %186 {offsets = [0, 0], sizes = [16, 8], strides = [1, 1]} : vector<16x32xf32> to vector<16x8xf32>
    %192 = arith.truncf %191 : vector<16x8xf32> to vector<16x8xbf16>
    %193 = vector.extract_strided_slice %187 {offsets = [0, 0], sizes = [16, 8], strides = [1, 1]} : vector<16x32xf32> to vector<16x8xf32>
    %194 = arith.truncf %193 : vector<16x8xf32> to vector<16x8xbf16>
    %cst_84 = arith.constant dense<0.000000e+00> : vector<8x16xf32>
    %195 = tpu.matmul %190, %192, %cst_84 {dimension_numbers = #tpu.dot_dimension_numbers<[1], [1], [0], [0], [0, 0, 1, 0], [], []>} : vector<8x8xbf16>, vector<16x8xbf16>, vector<8x16xf32> -> vector<8x16xf32>
    %cst_85 = arith.constant 0.353553385 : f32
    %196 = vector.broadcast %cst_85 : f32 to vector<8x16xf32>
    %197 = arith.mulf %195, %196 : vector<8x16xf32>
    %198 = arith.addf %197, %188 : vector<8x16xf32>
    %cst_86 = arith.constant dense<0xFF800000> : vector<8xf32>
    %199 = vector.multi_reduction <maximumf>, %198, %cst_86 [1] : vector<8x16xf32> to vector<8xf32>
    %200 = vector.shape_cast %199 : vector<8xf32> to vector<8x1xf32>
    %201 = vector.broadcast %200 : vector<8x1xf32> to vector<8x16xf32>
    %202 = arith.subf %198, %201 : vector<8x16xf32>
    %203 = math.exp %202 : vector<8x16xf32>
    %cst_87 = arith.constant dense<0.000000e+00> : vector<8xf32>
    %204 = vector.multi_reduction <add>, %203, %cst_87 [1] : vector<8x16xf32> to vector<8xf32>
    %205 = vector.shape_cast %204 : vector<8xf32> to vector<8x1xf32>
    %206 = tpu.reciprocal %205 {approx = true} : vector<8x1xf32> -> vector<8x1xf32>
    %207 = vector.broadcast %206 : vector<8x1xf32> to vector<8x16xf32>
    %208 = arith.mulf %203, %207 : vector<8x16xf32>
    %c0_88 = arith.constant 0 : index
    %c0_89 = arith.constant 0 : index
    %c0_90 = arith.constant 0 : index
    %c0_91 = arith.constant 0 : index
    %209 = vector.load %arg29[%c0_88, %c0_89, %c0_90, %c0_91] : memref<1x4x8x16xf32, #tpu.memory_space<vmem>>, vector<1x1x8x16xf32>
    %210 = vector.shape_cast %209 : vector<1x1x8x16xf32> to vector<8x16xf32>
    %211 = vector.shape_cast %208 : vector<8x16xf32> to vector<1x1x8x16xf32>
    tpu.vector_store %arg29[%c0_88, %c0_89, %c0_90, %c0_91], %211 {strides = array<i32>} : memref<1x4x8x16xf32, #tpu.memory_space<vmem>>, vector<1x1x8x16xf32>,
    %212 = arith.truncf %208 : vector<8x16xf32> to vector<8x16xbf16>
    %cst_92 = arith.constant dense<0.000000e+00> : vector<8x8xf32>
    %213 = tpu.matmul %212, %194, %cst_92 {dimension_numbers = #tpu.dot_dimension_numbers<[1], [0], [0], [1], [0, 0, 1, 1], [], []>} : vector<8x16xbf16>, vector<16x8xbf16>, vector<8x8xf32> -> vector<8x8xf32>
    %c0_93 = arith.constant 0 : index
    %c0_94 = arith.constant 0 : index
    %214 = vector.load %arg31[%c0_93, %c0_94] : memref<8x32xf32, #tpu.memory_space<vmem>>, vector<8x8xf32>
    tpu.vector_store %arg31[%c0_93, %c0_94], %213 {strides = array<i32>} : memref<8x32xf32, #tpu.memory_space<vmem>>, vector<8x8xf32>,
    %215 = vector.extract_strided_slice %177 {offsets = [0, 8], sizes = [8, 8], strides = [1, 1]} : vector<8x32xf32> to vector<8x8xf32>
    %216 = arith.truncf %215 : vector<8x8xf32> to vector<8x8xbf16>
    %217 = vector.extract_strided_slice %186 {offsets = [0, 8], sizes = [16, 8], strides = [1, 1]} : vector<16x32xf32> to vector<16x8xf32>
    %218 = arith.truncf %217 : vector<16x8xf32> to vector<16x8xbf16>
    %219 = vector.extract_strided_slice %187 {offsets = [0, 8], sizes = [16, 8], strides = [1, 1]} : vector<16x32xf32> to vector<16x8xf32>
    %220 = arith.truncf %219 : vector<16x8xf32> to vector<16x8xbf16>
    %cst_95 = arith.constant dense<0.000000e+00> : vector<8x16xf32>
    %221 = tpu.matmul %216, %218, %cst_95 {dimension_numbers = #tpu.dot_dimension_numbers<[1], [1], [0], [0], [0, 0, 1, 0], [], []>} : vector<8x8xbf16>, vector<16x8xbf16>, vector<8x16xf32> -> vector<8x16xf32>
    %cst_96 = arith.constant 0.353553385 : f32
    %222 = vector.broadcast %cst_96 : f32 to vector<8x16xf32>
    %223 = arith.mulf %221, %222 : vector<8x16xf32>
    %224 = arith.addf %223, %188 : vector<8x16xf32>
    %cst_97 = arith.constant dense<0xFF800000> : vector<8xf32>
    %225 = vector.multi_reduction <maximumf>, %224, %cst_97 [1] : vector<8x16xf32> to vector<8xf32>
    %226 = vector.shape_cast %225 : vector<8xf32> to vector<8x1xf32>
    %227 = vector.broadcast %226 : vector<8x1xf32> to vector<8x16xf32>
    %228 = arith.subf %224, %227 : vector<8x16xf32>
    %229 = math.exp %228 : vector<8x16xf32>
    %cst_98 = arith.constant dense<0.000000e+00> : vector<8xf32>
    %230 = vector.multi_reduction <add>, %229, %cst_98 [1] : vector<8x16xf32> to vector<8xf32>
    %231 = vector.shape_cast %230 : vector<8xf32> to vector<8x1xf32>
    %232 = tpu.reciprocal %231 {approx = true} : vector<8x1xf32> -> vector<8x1xf32>
    %233 = vector.broadcast %232 : vector<8x1xf32> to vector<8x16xf32>
    %234 = arith.mulf %229, %233 : vector<8x16xf32>
    %c0_99 = arith.constant 0 : index
    %c1 = arith.constant 1 : index
    %c0_100 = arith.constant 0 : index
    %c0_101 = arith.constant 0 : index
    %235 = vector.load %arg29[%c0_99, %c1, %c0_100, %c0_101] : memref<1x4x8x16xf32, #tpu.memory_space<vmem>>, vector<1x1x8x16xf32>
    %236 = vector.shape_cast %235 : vector<1x1x8x16xf32> to vector<8x16xf32>
    %237 = vector.shape_cast %234 : vector<8x16xf32> to vector<1x1x8x16xf32>
    tpu.vector_store %arg29[%c0_99, %c1, %c0_100, %c0_101], %237 {strides = array<i32>} : memref<1x4x8x16xf32, #tpu.memory_space<vmem>>, vector<1x1x8x16xf32>,
    %238 = arith.truncf %234 : vector<8x16xf32> to vector<8x16xbf16>
    %cst_102 = arith.constant dense<0.000000e+00> : vector<8x8xf32>
    %239 = tpu.matmul %238, %220, %cst_102 {dimension_numbers = #tpu.dot_dimension_numbers<[1], [0], [0], [1], [0, 0, 1, 1], [], []>} : vector<8x16xbf16>, vector<16x8xbf16>, vector<8x8xf32> -> vector<8x8xf32>
    %c0_103 = arith.constant 0 : index
    %c8_104 = arith.constant 8 : index
    %240 = vector.load %arg31[%c0_103, %c8_104] : memref<8x32xf32, #tpu.memory_space<vmem>>, vector<8x8xf32>
    tpu.vector_store %arg31[%c0_103, %c8_104], %239 {strides = array<i32>} : memref<8x32xf32, #tpu.memory_space<vmem>>, vector<8x8xf32>,
    %241 = vector.extract_strided_slice %177 {offsets = [0, 16], sizes = [8, 8], strides = [1, 1]} : vector<8x32xf32> to vector<8x8xf32>
    %242 = arith.truncf %241 : vector<8x8xf32> to vector<8x8xbf16>
    %243 = vector.extract_strided_slice %186 {offsets = [0, 16], sizes = [16, 8], strides = [1, 1]} : vector<16x32xf32> to vector<16x8xf32>
    %244 = arith.truncf %243 : vector<16x8xf32> to vector<16x8xbf16>
    %245 = vector.extract_strided_slice %187 {offsets = [0, 16], sizes = [16, 8], strides = [1, 1]} : vector<16x32xf32> to vector<16x8xf32>
    %246 = arith.truncf %245 : vector<16x8xf32> to vector<16x8xbf16>
    %cst_105 = arith.constant dense<0.000000e+00> : vector<8x16xf32>
    %247 = tpu.matmul %242, %244, %cst_105 {dimension_numbers = #tpu.dot_dimension_numbers<[1], [1], [0], [0], [0, 0, 1, 0], [], []>} : vector<8x8xbf16>, vector<16x8xbf16>, vector<8x16xf32> -> vector<8x16xf32>
    %cst_106 = arith.constant 0.353553385 : f32
    %248 = vector.broadcast %cst_106 : f32 to vector<8x16xf32>
    %249 = arith.mulf %247, %248 : vector<8x16xf32>
    %250 = arith.addf %249, %188 : vector<8x16xf32>
    %cst_107 = arith.constant dense<0xFF800000> : vector<8xf32>
    %251 = vector.multi_reduction <maximumf>, %250, %cst_107 [1] : vector<8x16xf32> to vector<8xf32>
    %252 = vector.shape_cast %251 : vector<8xf32> to vector<8x1xf32>
    %253 = vector.broadcast %252 : vector<8x1xf32> to vector<8x16xf32>
    %254 = arith.subf %250, %253 : vector<8x16xf32>
    %255 = math.exp %254 : vector<8x16xf32>
    %cst_108 = arith.constant dense<0.000000e+00> : vector<8xf32>
    %256 = vector.multi_reduction <add>, %255, %cst_108 [1] : vector<8x16xf32> to vector<8xf32>
    %257 = vector.shape_cast %256 : vector<8xf32> to vector<8x1xf32>
    %258 = tpu.reciprocal %257 {approx = true} : vector<8x1xf32> -> vector<8x1xf32>
    %259 = vector.broadcast %258 : vector<8x1xf32> to vector<8x16xf32>
    %260 = arith.mulf %255, %259 : vector<8x16xf32>
    %c0_109 = arith.constant 0 : index
    %c2 = arith.constant 2 : index
    %c0_110 = arith.constant 0 : index
    %c0_111 = arith.constant 0 : index
    %261 = vector.load %arg29[%c0_109, %c2, %c0_110, %c0_111] : memref<1x4x8x16xf32, #tpu.memory_space<vmem>>, vector<1x1x8x16xf32>
    %262 = vector.shape_cast %261 : vector<1x1x8x16xf32> to vector<8x16xf32>
    %263 = vector.shape_cast %260 : vector<8x16xf32> to vector<1x1x8x16xf32>
    tpu.vector_store %arg29[%c0_109, %c2, %c0_110, %c0_111], %263 {strides = array<i32>} : memref<1x4x8x16xf32, #tpu.memory_space<vmem>>, vector<1x1x8x16xf32>,
    %264 = arith.truncf %260 : vector<8x16xf32> to vector<8x16xbf16>
    %cst_112 = arith.constant dense<0.000000e+00> : vector<8x8xf32>
    %265 = tpu.matmul %264, %246, %cst_112 {dimension_numbers = #tpu.dot_dimension_numbers<[1], [0], [0], [1], [0, 0, 1, 1], [], []>} : vector<8x16xbf16>, vector<16x8xbf16>, vector<8x8xf32> -> vector<8x8xf32>
    %c0_113 = arith.constant 0 : index
    %c16_114 = arith.constant 16 : index
    %266 = vector.load %arg31[%c0_113, %c16_114] : memref<8x32xf32, #tpu.memory_space<vmem>>, vector<8x8xf32>
    tpu.vector_store %arg31[%c0_113, %c16_114], %265 {strides = array<i32>} : memref<8x32xf32, #tpu.memory_space<vmem>>, vector<8x8xf32>,
    %267 = vector.extract_strided_slice %177 {offsets = [0, 24], sizes = [8, 8], strides = [1, 1]} : vector<8x32xf32> to vector<8x8xf32>
    %268 = arith.truncf %267 : vector<8x8xf32> to vector<8x8xbf16>
    %269 = vector.extract_strided_slice %186 {offsets = [0, 24], sizes = [16, 8], strides = [1, 1]} : vector<16x32xf32> to vector<16x8xf32>
    %270 = arith.truncf %269 : vector<16x8xf32> to vector<16x8xbf16>
    %271 = vector.extract_strided_slice %187 {offsets = [0, 24], sizes = [16, 8], strides = [1, 1]} : vector<16x32xf32> to vector<16x8xf32>
    %272 = arith.truncf %271 : vector<16x8xf32> to vector<16x8xbf16>
    %cst_115 = arith.constant dense<0.000000e+00> : vector<8x16xf32>
    %273 = tpu.matmul %268, %270, %cst_115 {dimension_numbers = #tpu.dot_dimension_numbers<[1], [1], [0], [0], [0, 0, 1, 0], [], []>} : vector<8x8xbf16>, vector<16x8xbf16>, vector<8x16xf32> -> vector<8x16xf32>
    %cst_116 = arith.constant 0.353553385 : f32
    %274 = vector.broadcast %cst_116 : f32 to vector<8x16xf32>
    %275 = arith.mulf %273, %274 : vector<8x16xf32>
    %276 = arith.addf %275, %188 : vector<8x16xf32>
    %cst_117 = arith.constant dense<0xFF800000> : vector<8xf32>
    %277 = vector.multi_reduction <maximumf>, %276, %cst_117 [1] : vector<8x16xf32> to vector<8xf32>
    %278 = vector.shape_cast %277 : vector<8xf32> to vector<8x1xf32>
    %279 = vector.broadcast %278 : vector<8x1xf32> to vector<8x16xf32>
    %280 = arith.subf %276, %279 : vector<8x16xf32>
    %281 = math.exp %280 : vector<8x16xf32>
    %cst_118 = arith.constant dense<0.000000e+00> : vector<8xf32>
    %282 = vector.multi_reduction <add>, %281, %cst_118 [1] : vector<8x16xf32> to vector<8xf32>
    %283 = vector.shape_cast %282 : vector<8xf32> to vector<8x1xf32>
    %284 = tpu.reciprocal %283 {approx = true} : vector<8x1xf32> -> vector<8x1xf32>
    %285 = vector.broadcast %284 : vector<8x1xf32> to vector<8x16xf32>
    %286 = arith.mulf %281, %285 : vector<8x16xf32>
    %c0_119 = arith.constant 0 : index
    %c3 = arith.constant 3 : index
    %c0_120 = arith.constant 0 : index
    %c0_121 = arith.constant 0 : index
    %287 = vector.load %arg29[%c0_119, %c3, %c0_120, %c0_121] : memref<1x4x8x16xf32, #tpu.memory_space<vmem>>, vector<1x1x8x16xf32>
    %288 = vector.shape_cast %287 : vector<1x1x8x16xf32> to vector<8x16xf32>
    %289 = vector.shape_cast %286 : vector<8x16xf32> to vector<1x1x8x16xf32>
    tpu.vector_store %arg29[%c0_119, %c3, %c0_120, %c0_121], %289 {strides = array<i32>} : memref<1x4x8x16xf32, #tpu.memory_space<vmem>>, vector<1x1x8x16xf32>,
    %290 = arith.truncf %286 : vector<8x16xf32> to vector<8x16xbf16>
    %cst_122 = arith.constant dense<0.000000e+00> : vector<8x8xf32>
    %291 = tpu.matmul %290, %272, %cst_122 {dimension_numbers = #tpu.dot_dimension_numbers<[1], [0], [0], [1], [0, 0, 1, 1], [], []>} : vector<8x16xbf16>, vector<16x8xbf16>, vector<8x8xf32> -> vector<8x8xf32>
    %c0_123 = arith.constant 0 : index
    %c24_124 = arith.constant 24 : index
    %292 = vector.load %arg31[%c0_123, %c24_124] : memref<8x32xf32, #tpu.memory_space<vmem>>, vector<8x8xf32>
    tpu.vector_store %arg31[%c0_123, %c24_124], %291 {strides = array<i32>} : memref<8x32xf32, #tpu.memory_space<vmem>>, vector<8x8xf32>,
    %c0_125 = arith.constant 0 : index
    %c0_126 = arith.constant 0 : index
    %293 = vector.load %arg31[%c0_125, %c0_126] : memref<8x32xf32, #tpu.memory_space<vmem>>, vector<8x32xf32>
    %294 = arith.truncf %293 : vector<8x32xf32> to vector<8x32xbf16>
    %c0_127 = arith.constant 0 : index
    %c0_128 = arith.constant 0 : index
    %c0_129 = arith.constant 0 : index
    %295 = vector.load %arg18[%c0_127, %c0_128, %c0_129] : memref<1x32x32xbf16, #tpu.memory_space<vmem>>, vector<1x32x32xbf16>
    %296 = vector.shape_cast %295 : vector<1x32x32xbf16> to vector<32x32xbf16>
    %cst_130 = arith.constant dense<0.000000e+00> : vector<8x32xf32>
    %297 = tpu.matmul %294, %296, %cst_130 {dimension_numbers = #tpu.dot_dimension_numbers<[1], [0], [0], [1], [0, 0, 1, 1], [], []>} : vector<8x32xbf16>, vector<32x32xbf16>, vector<8x32xf32> -> vector<8x32xf32>
    %c0_131 = arith.constant 0 : index
    %c0_132 = arith.constant 0 : index
    %c0_133 = arith.constant 0 : index
    %298 = vector.load %arg19[%c0_131, %c0_132, %c0_133] : memref<1x1x32xf32, #tpu.memory_space<vmem>>, vector<1x1x32xf32>
    %299 = vector.shape_cast %298 : vector<1x1x32xf32> to vector<1x32xf32>
    %300 = vector.broadcast %299 : vector<1x32xf32> to vector<8x32xf32>
    %301 = arith.addf %297, %300 : vector<8x32xf32>
    %302 = arith.addf %143, %301 : vector<8x32xf32>
    %c0_134 = arith.constant 0 : index
    %c0_135 = arith.constant 0 : index
    %c0_136 = arith.constant 0 : index
    %303 = vector.load %arg20[%c0_134, %c0_135, %c0_136] : memref<1x1x32xf32, #tpu.memory_space<vmem>>, vector<1x1x32xf32>
    %304 = vector.shape_cast %303 : vector<1x1x32xf32> to vector<1x32xf32>
    %c0_137 = arith.constant 0 : index
    %c0_138 = arith.constant 0 : index
    %c0_139 = arith.constant 0 : index
    %305 = vector.load %arg21[%c0_137, %c0_138, %c0_139] : memref<1x1x32xf32, #tpu.memory_space<vmem>>, vector<1x1x32xf32>
    %306 = vector.shape_cast %305 : vector<1x1x32xf32> to vector<1x32xf32>
    %cst_140 = arith.constant dense<0.000000e+00> : vector<8xf32>
    %307 = vector.multi_reduction <add>, %302, %cst_140 [1] : vector<8x32xf32> to vector<8xf32>
    %308 = vector.shape_cast %307 : vector<8xf32> to vector<8x1xf32>
    %cst_141 = arith.constant 3.200000e+01 : f32
    %309 = vector.broadcast %cst_141 : f32 to vector<8x1xf32>
    %310 = arith.divf %308, %309 : vector<8x1xf32>
    %311 = arith.mulf %302, %302 : vector<8x32xf32>
    %cst_142 = arith.constant dense<0.000000e+00> : vector<8xf32>
    %312 = vector.multi_reduction <add>, %311, %cst_142 [1] : vector<8x32xf32> to vector<8xf32>
    %313 = vector.shape_cast %312 : vector<8xf32> to vector<8x1xf32>
    %cst_143 = arith.constant 3.200000e+01 : f32
    %314 = vector.broadcast %cst_143 : f32 to vector<8x1xf32>
    %315 = arith.divf %313, %314 : vector<8x1xf32>
    %316 = arith.mulf %310, %310 : vector<8x1xf32>
    %317 = arith.subf %315, %316 : vector<8x1xf32>
    %318 = vector.broadcast %310 : vector<8x1xf32> to vector<8x32xf32>
    %319 = arith.subf %302, %318 : vector<8x32xf32>
    %cst_144 = arith.constant 9.99999974E-6 : f32
    %320 = vector.broadcast %cst_144 : f32 to vector<8x1xf32>
    %321 = arith.addf %317, %320 : vector<8x1xf32>
    %322 = math.rsqrt %321 : vector<8x1xf32>
    %323 = vector.broadcast %322 : vector<8x1xf32> to vector<8x32xf32>
    %324 = arith.mulf %319, %323 : vector<8x32xf32>
    %325 = vector.broadcast %304 : vector<1x32xf32> to vector<8x32xf32>
    %326 = arith.mulf %324, %325 : vector<8x32xf32>
    %327 = vector.broadcast %306 : vector<1x32xf32> to vector<8x32xf32>
    %328 = arith.addf %326, %327 : vector<8x32xf32>
    %329 = arith.truncf %328 : vector<8x32xf32> to vector<8x32xbf16>
    %c0_145 = arith.constant 0 : index
    %c0_146 = arith.constant 0 : index
    %c0_147 = arith.constant 0 : index
    %330 = vector.load %arg22[%c0_145, %c0_146, %c0_147] : memref<1x32x64xbf16, #tpu.memory_space<vmem>>, vector<1x32x64xbf16>
    %331 = vector.shape_cast %330 : vector<1x32x64xbf16> to vector<32x64xbf16>
    %cst_148 = arith.constant dense<0.000000e+00> : vector<8x64xf32>
    %332 = tpu.matmul %329, %331, %cst_148 {dimension_numbers = #tpu.dot_dimension_numbers<[1], [0], [0], [1], [0, 0, 1, 1], [], []>} : vector<8x32xbf16>, vector<32x64xbf16>, vector<8x64xf32> -> vector<8x64xf32>
    %c0_149 = arith.constant 0 : index
    %c0_150 = arith.constant 0 : index
    %c0_151 = arith.constant 0 : index
    %333 = vector.load %arg23[%c0_149, %c0_150, %c0_151] : memref<1x1x64xf32, #tpu.memory_space<vmem>>, vector<1x1x64xf32>
    %334 = vector.shape_cast %333 : vector<1x1x64xf32> to vector<1x64xf32>
    %335 = vector.broadcast %334 : vector<1x64xf32> to vector<8x64xf32>
    %336 = arith.addf %332, %335 : vector<8x64xf32>
    %cst_152 = arith.constant 0.000000e+00 : f32
    %337 = vector.broadcast %cst_152 : f32 to vector<8x64xf32>
    %338 = arith.maximumf %336, %337 : vector<8x64xf32>
    %339 = arith.truncf %338 : vector<8x64xf32> to vector<8x64xbf16>
    %c0_153 = arith.constant 0 : index
    %c0_154 = arith.constant 0 : index
    %c0_155 = arith.constant 0 : index
    %340 = vector.load %arg24[%c0_153, %c0_154, %c0_155] : memref<1x64x32xbf16, #tpu.memory_space<vmem>>, vector<1x64x32xbf16>
    %341 = vector.shape_cast %340 : vector<1x64x32xbf16> to vector<64x32xbf16>
    %cst_156 = arith.constant dense<0.000000e+00> : vector<8x32xf32>
    %342 = tpu.matmul %339, %341, %cst_156 {dimension_numbers = #tpu.dot_dimension_numbers<[1], [0], [0], [1], [0, 0, 1, 1], [], []>} : vector<8x64xbf16>, vector<64x32xbf16>, vector<8x32xf32> -> vector<8x32xf32>
    %c0_157 = arith.constant 0 : index
    %c0_158 = arith.constant 0 : index
    %c0_159 = arith.constant 0 : index
    %343 = vector.load %arg25[%c0_157, %c0_158, %c0_159] : memref<1x1x32xf32, #tpu.memory_space<vmem>>, vector<1x1x32xf32>
    %344 = vector.shape_cast %343 : vector<1x1x32xf32> to vector<1x32xf32>
    %345 = vector.broadcast %344 : vector<1x32xf32> to vector<8x32xf32>
    %346 = arith.addf %342, %345 : vector<8x32xf32>
    %347 = arith.addf %302, %346 : vector<8x32xf32>
    %c0_160 = arith.constant 0 : index
    %c0_161 = arith.constant 0 : index
    %348 = vector.load %arg30[%c0_160, %c0_161] : memref<8x32xf32, #tpu.memory_space<vmem>>, vector<8x32xf32>
    tpu.vector_store %arg30[%c0_160, %c0_161], %347 {strides = array<i32>} : memref<8x32xf32, #tpu.memory_space<vmem>>, vector<8x32xf32>,
    %c1_i32 = arith.constant 1 : i32
    %349 = arith.cmpi eq, %arg1, %c1_i32 : i32
    %350 = arith.extui %349 : i1 to i32
    %c0_i32_162 = arith.constant 0 : i32
    %351 = arith.cmpi ne, %350, %c0_i32_162 : i32
    scf.if %351 {
      %c0_163 = arith.constant 0 : index
      %c0_164 = arith.constant 0 : index
      %352 = vector.load %arg26[%c0_163, %c0_164] : memref<1x32xf32, #tpu.memory_space<vmem>>, vector<1x32xf32>
      %c0_165 = arith.constant 0 : index
      %c0_166 = arith.constant 0 : index
      %353 = vector.load %arg27[%c0_165, %c0_166] : memref<1x32xf32, #tpu.memory_space<vmem>>, vector<1x32xf32>
      %cst_167 = arith.constant dense<0.000000e+00> : vector<8xf32>
      %354 = vector.multi_reduction <add>, %347, %cst_167 [1] : vector<8x32xf32> to vector<8xf32>
      %355 = vector.shape_cast %354 : vector<8xf32> to vector<8x1xf32>
      %cst_168 = arith.constant 3.200000e+01 : f32
      %356 = vector.broadcast %cst_168 : f32 to vector<8x1xf32>
      %357 = arith.divf %355, %356 : vector<8x1xf32>
      %358 = arith.mulf %347, %347 : vector<8x32xf32>
      %cst_169 = arith.constant dense<0.000000e+00> : vector<8xf32>
      %359 = vector.multi_reduction <add>, %358, %cst_169 [1] : vector<8x32xf32> to vector<8xf32>
      %360 = vector.shape_cast %359 : vector<8xf32> to vector<8x1xf32>
      %cst_170 = arith.constant 3.200000e+01 : f32
      %361 = vector.broadcast %cst_170 : f32 to vector<8x1xf32>
      %362 = arith.divf %360, %361 : vector<8x1xf32>
      %363 = arith.mulf %357, %357 : vector<8x1xf32>
      %364 = arith.subf %362, %363 : vector<8x1xf32>
      %365 = vector.broadcast %357 : vector<8x1xf32> to vector<8x32xf32>
      %366 = arith.subf %347, %365 : vector<8x32xf32>
      %cst_171 = arith.constant 9.99999974E-6 : f32
      %367 = vector.broadcast %cst_171 : f32 to vector<8x1xf32>
      %368 = arith.addf %364, %367 : vector<8x1xf32>
      %369 = math.rsqrt %368 : vector<8x1xf32>
      %370 = vector.broadcast %369 : vector<8x1xf32> to vector<8x32xf32>
      %371 = arith.mulf %366, %370 : vector<8x32xf32>
      %372 = vector.broadcast %352 : vector<1x32xf32> to vector<8x32xf32>
      %373 = arith.mulf %371, %372 : vector<8x32xf32>
      %374 = vector.broadcast %353 : vector<1x32xf32> to vector<8x32xf32>
      %375 = arith.addf %373, %374 : vector<8x32xf32>
      %c0_172 = arith.constant 0 : index
      %c0_173 = arith.constant 0 : index
      %376 = vector.load %arg28[%c0_172, %c0_173] : memref<8x32xf32, #tpu.memory_space<vmem>>, vector<8x32xf32>
      tpu.vector_store %arg28[%c0_172, %c0_173], %375 {strides = array<i32>} : memref<8x32xf32, #tpu.memory_space<vmem>>, vector<8x32xf32>,
    } else {
    }
    return
  }
  func.func @transform_0(%arg0: i32, %arg1: i32) -> (i32, i32) {
    %c0_i32 = arith.constant 0 : i32
    %c0_i32_0 = arith.constant 0 : i32
    return %arg0, %c0_i32 : i32, i32
  }
  func.func @transform_1(%arg0: i32, %arg1: i32) -> (i32, i32) {
    %c0_i32 = arith.constant 0 : i32
    %c0_i32_0 = arith.constant 0 : i32
    return %arg0, %c0_i32 : i32, i32
  }
  func.func @transform_2(%arg0: i32, %arg1: i32) -> (i32, i32) {
    %c0_i32 = arith.constant 0 : i32
    %c0_i32_0 = arith.constant 0 : i32
    return %arg0, %c0_i32 : i32, i32
  }
  func.func @transform_3(%arg0: i32, %arg1: i32) -> (i32, i32) {
    %c0_i32 = arith.constant 0 : i32
    %c0_i32_0 = arith.constant 0 : i32
    return %arg0, %c0_i32 : i32, i32
  }
  func.func @transform_4(%arg0: i32, %arg1: i32) -> (i32, i32, i32) {
    %c0_i32 = arith.constant 0 : i32
    %c0_i32_0 = arith.constant 0 : i32
    %c0_i32_1 = arith.constant 0 : i32
    return %arg1, %c0_i32, %c0_i32_0 : i32, i32, i32
  }
  func.func @transform_5(%arg0: i32, %arg1: i32) -> (i32, i32, i32) {
    %c0_i32 = arith.constant 0 : i32
    %c0_i32_0 = arith.constant 0 : i32
    %c0_i32_1 = arith.constant 0 : i32
    return %arg1, %c0_i32, %c0_i32_0 : i32, i32, i32
  }
  func.func @transform_6(%arg0: i32, %arg1: i32) -> (i32, i32, i32) {
    %c0_i32 = arith.constant 0 : i32
    %c0_i32_0 = arith.constant 0 : i32
    %c0_i32_1 = arith.constant 0 : i32
    return %arg1, %c0_i32, %c0_i32_0 : i32, i32, i32
  }
  func.func @transform_7(%arg0: i32, %arg1: i32) -> (i32, i32, i32) {
    %c0_i32 = arith.constant 0 : i32
    %c0_i32_0 = arith.constant 0 : i32
    %c0_i32_1 = arith.constant 0 : i32
    return %arg1, %c0_i32, %c0_i32_0 : i32, i32, i32
  }
  func.func @transform_8(%arg0: i32, %arg1: i32) -> (i32, i32, i32) {
    %c0_i32 = arith.constant 0 : i32
    %c0_i32_0 = arith.constant 0 : i32
    %c0_i32_1 = arith.constant 0 : i32
    return %arg1, %c0_i32, %c0_i32_0 : i32, i32, i32
  }
  func.func @transform_9(%arg0: i32, %arg1: i32) -> (i32, i32, i32) {
    %c0_i32 = arith.constant 0 : i32
    %c0_i32_0 = arith.constant 0 : i32
    %c0_i32_1 = arith.constant 0 : i32
    return %arg1, %c0_i32, %c0_i32_0 : i32, i32, i32
  }
  func.func @transform_10(%arg0: i32, %arg1: i32) -> (i32, i32, i32) {
    %c0_i32 = arith.constant 0 : i32
    %c0_i32_0 = arith.constant 0 : i32
    %c0_i32_1 = arith.constant 0 : i32
    return %arg1, %c0_i32, %c0_i32_0 : i32, i32, i32
  }
  func.func @transform_11(%arg0: i32, %arg1: i32) -> (i32, i32, i32) {
    %c0_i32 = arith.constant 0 : i32
    %c0_i32_0 = arith.constant 0 : i32
    %c0_i32_1 = arith.constant 0 : i32
    return %arg1, %c0_i32, %c0_i32_0 : i32, i32, i32
  }
  func.func @transform_12(%arg0: i32, %arg1: i32) -> (i32, i32, i32) {
    %c0_i32 = arith.constant 0 : i32
    %c0_i32_0 = arith.constant 0 : i32
    %c0_i32_1 = arith.constant 0 : i32
    return %arg1, %c0_i32, %c0_i32_0 : i32, i32, i32
  }
  func.func @transform_13(%arg0: i32, %arg1: i32) -> (i32, i32, i32) {
    %c0_i32 = arith.constant 0 : i32
    %c0_i32_0 = arith.constant 0 : i32
    %c0_i32_1 = arith.constant 0 : i32
    return %arg1, %c0_i32, %c0_i32_0 : i32, i32, i32
  }
  func.func @transform_14(%arg0: i32, %arg1: i32) -> (i32, i32, i32) {
    %c0_i32 = arith.constant 0 : i32
    %c0_i32_0 = arith.constant 0 : i32
    %c0_i32_1 = arith.constant 0 : i32
    return %arg1, %c0_i32, %c0_i32_0 : i32, i32, i32
  }
  func.func @transform_15(%arg0: i32, %arg1: i32) -> (i32, i32, i32) {
    %c0_i32 = arith.constant 0 : i32
    %c0_i32_0 = arith.constant 0 : i32
    %c0_i32_1 = arith.constant 0 : i32
    return %arg1, %c0_i32, %c0_i32_0 : i32, i32, i32
  }
  func.func @transform_16(%arg0: i32, %arg1: i32) -> (i32, i32, i32) {
    %c0_i32 = arith.constant 0 : i32
    %c0_i32_0 = arith.constant 0 : i32
    %c0_i32_1 = arith.constant 0 : i32
    return %arg1, %c0_i32, %c0_i32_0 : i32, i32, i32
  }
  func.func @transform_17(%arg0: i32, %arg1: i32) -> (i32, i32, i32) {
    %c0_i32 = arith.constant 0 : i32
    %c0_i32_0 = arith.constant 0 : i32
    %c0_i32_1 = arith.constant 0 : i32
    return %arg1, %c0_i32, %c0_i32_0 : i32, i32, i32
  }
  func.func @transform_18(%arg0: i32, %arg1: i32) -> (i32, i32, i32) {
    %c0_i32 = arith.constant 0 : i32
    %c0_i32_0 = arith.constant 0 : i32
    %c0_i32_1 = arith.constant 0 : i32
    return %arg1, %c0_i32, %c0_i32_0 : i32, i32, i32
  }
  func.func @transform_19(%arg0: i32, %arg1: i32) -> (i32, i32, i32) {
    %c0_i32 = arith.constant 0 : i32
    %c0_i32_0 = arith.constant 0 : i32
    %c0_i32_1 = arith.constant 0 : i32
    return %arg1, %c0_i32, %c0_i32_0 : i32, i32, i32
  }
  func.func @transform_20(%arg0: i32, %arg1: i32) -> (i32, i32, i32) {
    %c0_i32 = arith.constant 0 : i32
    %c0_i32_0 = arith.constant 0 : i32
    %c0_i32_1 = arith.constant 0 : i32
    return %arg1, %c0_i32, %c0_i32_0 : i32, i32, i32
  }
  func.func @transform_21(%arg0: i32, %arg1: i32) -> (i32, i32, i32) {
    %c0_i32 = arith.constant 0 : i32
    %c0_i32_0 = arith.constant 0 : i32
    %c0_i32_1 = arith.constant 0 : i32
    return %arg1, %c0_i32, %c0_i32_0 : i32, i32, i32
  }
  func.func @transform_22(%arg0: i32, %arg1: i32) -> (i32, i32, i32) {
    %c0_i32 = arith.constant 0 : i32
    %c0_i32_0 = arith.constant 0 : i32
    %c0_i32_1 = arith.constant 0 : i32
    return %arg1, %c0_i32, %c0_i32_0 : i32, i32, i32
  }
  func.func @transform_23(%arg0: i32, %arg1: i32) -> (i32, i32, i32) {
    %c0_i32 = arith.constant 0 : i32
    %c0_i32_0 = arith.constant 0 : i32
    %c0_i32_1 = arith.constant 0 : i32
    return %arg1, %c0_i32, %c0_i32_0 : i32, i32, i32
  }
  func.func @transform_24(%arg0: i32, %arg1: i32) -> (i32, i32) {
    %c0_i32 = arith.constant 0 : i32
    %c0_i32_0 = arith.constant 0 : i32
    %c0_i32_1 = arith.constant 0 : i32
    return %c0_i32, %c0_i32_0 : i32, i32
  }
  func.func @transform_25(%arg0: i32, %arg1: i32) -> (i32, i32) {
    %c0_i32 = arith.constant 0 : i32
    %c0_i32_0 = arith.constant 0 : i32
    %c0_i32_1 = arith.constant 0 : i32
    return %c0_i32, %c0_i32_0 : i32, i32
  }
  func.func @transform_26(%arg0: i32, %arg1: i32) -> (i32, i32) {
    %c0_i32 = arith.constant 0 : i32
    %c0_i32_0 = arith.constant 0 : i32
    return %arg0, %c0_i32 : i32, i32
  }
  func.func @transform_27(%arg0: i32, %arg1: i32) -> (i32, i32, i32, i32) {
    %c0_i32 = arith.constant 0 : i32
    %c0_i32_0 = arith.constant 0 : i32
    %c0_i32_1 = arith.constant 0 : i32
    %c0_i32_2 = arith.constant 0 : i32
    return %arg0, %c0_i32, %c0_i32_0, %c0_i32_1 : i32, i32, i32, i32
  }
}

</mosaic_0001>

<llo_original>
// kernel: tpu_custom_call.1
$region0: #{tpu_custom_call.1}
  #allocation0 [shape = 'u32[]', space=smem, size = 0x4, offset = 0x4, fixed_abs, tag = 'smem constant byte address 0x4 - core index']
  #allocation1 [shape = 'u32[144,128]{1,0:T(1,128)}', space=vmem, size = 0x12000, scoped, tag = 'internal scratch']
  #allocation2 [shape = 'f32[8,32]{1,0:T(8,128)}', space=vmem, size = 0x1000, scoped, tag = 'scratch operand']
  #allocation3 [shape = 'f32[8,32]{1,0:T(8,128)}', space=vmem, size = 0x1000, scoped, tag = 'scratch operand']
  %s0 = inlined_call_operand.hbm [shape: f32[16,32], index: 0, kind: input, shape index: {}]
  %s1 = inlined_call_operand.hbm [shape: bf16[32,32], index: 1, kind: input, shape index: {}]
  %s2 = inlined_call_operand.vmem [shape: f32[16,8], index: 2, kind: input, shape index: {}]
  %s3 = inlined_call_operand.hbm [shape: f32[16,16], index: 3, kind: input, shape index: {}]
  %s4 = inlined_call_operand.hbm [shape: f32[2,1,32], index: 4, kind: input, shape index: {}]
  %s5 = inlined_call_operand.hbm [shape: f32[2,1,32], index: 5, kind: input, shape index: {}]
  %s6 = inlined_call_operand.vmem [shape: bf16[2,32,96], index: 6, kind: input, shape index: {}]
  %s7 = inlined_call_operand.hbm [shape: f32[2,1,96], index: 7, kind: input, shape index: {}]
  %s8 = inlined_call_operand.vmem [shape: bf16[2,32,32], index: 8, kind: input, shape index: {}]
  %s9 = inlined_call_operand.hbm [shape: f32[2,1,32], index: 9, kind: input, shape index: {}]
  %s10 = inlined_call_operand.hbm [shape: f32[2,1,32], index: 10, kind: input, shape index: {}]
  %s11 = inlined_call_operand.hbm [shape: f32[2,1,32], index: 11, kind: input, shape index: {}]
  %s12 = inlined_call_operand.vmem [shape: bf16[2,32,32], index: 12, kind: input, shape index: {}]
  %s13 = inlined_call_operand.hbm [shape: f32[2,1,32], index: 13, kind: input, shape index: {}]
  %s14 = inlined_call_operand.vmem [shape: bf16[2,32,64], index: 14, kind: input, shape index: {}]
  %s15 = inlined_call_operand.hbm [shape: f32[2,1,64], index: 15, kind: input, shape index: {}]
  %s16 = inlined_call_operand.hbm [shape: bf16[2,32,32], index: 16, kind: input, shape index: {}]
  %s17 = inlined_call_operand.hbm [shape: f32[2,1,32], index: 17, kind: input, shape index: {}]
  %s18 = inlined_call_operand.hbm [shape: f32[2,1,32], index: 18, kind: input, shape index: {}]
  %s19 = inlined_call_operand.hbm [shape: f32[2,1,32], index: 19, kind: input, shape index: {}]
  %s20 = inlined_call_operand.hbm [shape: bf16[2,32,64], index: 20, kind: input, shape index: {}]
  %s21 = inlined_call_operand.hbm [shape: f32[2,1,64], index: 21, kind: input, shape index: {}]
  %s22 = inlined_call_operand.vmem [shape: bf16[2,64,32], index: 22, kind: input, shape index: {}]
  %s23 = inlined_call_operand.vmem [shape: f32[2,1,32], index: 23, kind: input, shape index: {}]
  %s24 = inlined_call_operand.vmem [shape: f32[1,32], index: 24, kind: input, shape index: {}]
  %s25 = inlined_call_operand.vmem [shape: f32[1,32], index: 25, kind: input, shape index: {}]
  %s26 = inlined_call_operand.hbm [shape: f32[16,32], index: 26, kind: output, shape index: {0}]
  %s27 = inlined_call_operand.hbm [shape: f32[2,4,8,16], index: 27, kind: output, shape index: {1}]
  %28 = xla_tuple %s26, %s27
  %s29 = sld [smem:[#allocation0]]
  $region221: #{tpu_custom_call.1} parent=0
    _
  %s31 = ssub.s32 1, %s29
  %s32 = scalar_select 0, %s31, %s29
  $region1: #{tpu_custom_call.1} parent=0
    #allocation4 [shape = 'u8[8192]{0}', space=vmem, size = 0x2000, scoped, tag = 'input window, operand 0']
    #allocation5 [shape = 's32[2]{0}', space=sflag, size = 0x8, scoped, tag = 'scoped memory for tpu_custom_call.1']
    #allocation6 [shape = 's32[2]{0}', space=sflag, size = 0x8, scoped, tag = 'scoped memory for tpu_custom_call.1']
    #allocation7 [shape = 'u8[8192]{0}', space=vmem, size = 0x2000, scoped, tag = 'input window, operand 1']
    #allocation8 [shape = 's32[2]{0}', space=sflag, size = 0x8, scoped, tag = 'scoped memory for tpu_custom_call.1']
    #allocation9 [shape = 'u8[8192]{0}', space=vmem, size = 0x2000, scoped, tag = 'input window, operand 3']
    #allocation10 [shape = 'u8[1024]{0}', space=vmem, size = 0x400, scoped, tag = 'input window, operand 4']
    #allocation11 [shape = 's32[2]{0}', space=sflag, size = 0x8, scoped, tag = 'scoped memory for tpu_custom_call.1']
    #allocation12 [shape = 'u8[1024]{0}', space=vmem, size = 0x400, scoped, tag = 'input window, operand 5']
    #allocation13 [shape = 'u8[1024]{0}', space=vmem, size = 0x400, scoped, tag = 'input window, operand 7']
    #allocation14 [shape = 's32[2]{0}', space=sflag, size = 0x8, scoped, tag = 'scoped memory for tpu_custom_call.1']
    #allocation15 [shape = 'u8[1024]{0}', space=vmem, size = 0x400, scoped, tag = 'input window, operand 9']
    #allocation16 [shape = 'u8[1024]{0}', space=vmem, size = 0x400, scoped, tag = 'input window, operand 10']
    #allocation17 [shape = 's32[2]{0}', space=sflag, size = 0x8, scoped, tag = 'scoped memory for tpu_custom_call.1']
    #allocation18 [shape = 'u8[1024]{0}', space=vmem, size = 0x400, scoped, tag = 'input window, operand 11']
    #allocation19 [shape = 'u8[1024]{0}', space=vmem, size = 0x400, scoped, tag = 'input window, operand 13']
    #allocation20 [shape = 's32[2]{0}', space=sflag, size = 0x8, scoped, tag = 'scoped memory for tpu_custom_call.1']
    #allocation21 [shape = 'u8[1024]{0}', space=vmem, size = 0x400, scoped, tag = 'input window, operand 15']
    #allocation22 [shape = 'u8[16384]{0}', space=vmem, size = 0x4000, scoped, tag = 'input window, operand 16']
    #allocation23 [shape = 's32[2]{0}', space=sflag, size = 0x8, scoped, tag = 'scoped memory for tpu_custom_call.1']
    #allocation24 [shape = 'u8[1024]{0}', space=vmem, size = 0x400, scoped, tag = 'input window, operand 17']
    #allocation25 [shape = 'u8[1024]{0}', space=vmem, size = 0x400, scoped, tag = 'input window, operand 18']
    #allocation26 [shape = 's32[2]{0}', space=sflag, size = 0x8, scoped, tag = 'scoped memory for tpu_custom_call.1']
    #allocation27 [shape = 'u8[1024]{0}', space=vmem, size = 0x400, scoped, tag = 'input window, operand 19']
    #allocation28 [shape = 'u8[16384]{0}', space=vmem, size = 0x4000, scoped, tag = 'input window, operand 20']
    #allocation29 [shape = 's32[2]{0}', space=sflag, size = 0x8, scoped, tag = 'scoped memory for tpu_custom_call.1']
    #allocation30 [shape = 'u8[1024]{0}', space=vmem, size = 0x400, scoped, tag = 'input window, operand 21']
    #allocation31 [shape = 'u8[8192]{0}', space=vmem, size = 0x2000, scoped, tag = 'output window, operand 0']
    #allocation32 [shape = 'u8[32768]{0}', space=vmem, size = 0x8000, scoped, tag = 'output window, operand 1']
    #allocation33 [shape = 's32[2]{0}', space=sflag, size = 0x8, scoped, tag = 'scoped memory for tpu_custom_call.1']
    %33 = vsyncpa [#allocation5], 0
    %s34 = scalar_lea.sflag [#allocation5], 1
    %35 = vsyncpa %s34, 0
    %36 = vsyncpa [#allocation8], 0
    %s37 = scalar_lea.sflag [#allocation8], 1
    %38 = vsyncpa %s37, 0
    %39 = vsyncpa [#allocation11], 0
    %s40 = scalar_lea.sflag [#allocation11], 1
    %41 = vsyncpa %s40, 0
    %42 = vsyncpa [#allocation14], 0
    %s43 = scalar_lea.sflag [#allocation14], 1
    %44 = vsyncpa %s43, 0
    %45 = vsyncpa [#allocation17], 0
    %s46 = scalar_lea.sflag [#allocation17], 1
    %47 = vsyncpa %s46, 0
    %48 = vsyncpa [#allocation20], 0
    %s49 = scalar_lea.sflag [#allocation20], 1
    %50 = vsyncpa %s49, 0
    %51 = vsyncpa [#allocation23], 0
    %s52 = scalar_lea.sflag [#allocation23], 1
    %53 = vsyncpa %s52, 0
    %54 = vsyncpa [#allocation26], 0
    %s55 = scalar_lea.sflag [#allocation26], 1
    %56 = vsyncpa %s55, 0
    %57 = vsyncpa [#allocation29], 0
    %s58 = scalar_lea.sflag [#allocation29], 1
    %59 = vsyncpa %s58, 0
    %60 = vsyncpa [#allocation6], 0
    %s61 = scalar_lea.sflag [#allocation6], 1
    %62 = vsyncpa %s61, 0
    %63 = vsyncpa [#allocation33], 0
    %s64 = scalar_lea.sflag [#allocation33], 1
    %65 = vsyncpa %s64, 0
    loop: start=0, step=1, limit=6
    $region2: #{tpu_custom_call.1} parent=1 // loop_pre_header
      _
    $region3: #{tpu_custom_call.1} parent=1 // loop_header
      %s67 = sphi 0, %s71
      %p68 = scmp.ge.s32.totalorder %s67, 6
      %s74 = sphi 0, %s86
      %s75 = sphi 0, %s82
      %s76 = sphi 0, %s74
      %s77 = sphi 0, %s75
      %s78 = sphi 0, %s76
      %s79 = sphi 0, %s77
      %s89 = sphi 0, %s91
      %s92 = sphi 0, %s89
      %s93 = sphi 0, %s92
      %s109 = sphi 0, %s93
      %s115 = sphi 0, %s117
      %s118 = sphi 0, %s115
      %s119 = sphi 0, %s118
      %s135 = sphi 0, %s119
      %s141 = sphi 0, %s143
      %s144 = sphi 0, %s141
      %s145 = sphi 0, %s144
      %s161 = sphi 0, %s145
      %s167 = sphi 0, %s169
      %s170 = sphi 0, %s167
      %s171 = sphi 0, %s170
      %s187 = sphi 0, %s171
      %s193 = sphi 0, %s195
      %s196 = sphi 0, %s193
      %s197 = sphi 0, %s196
      %s213 = sphi 0, %s197
      %s219 = sphi 0, %s221
      %s222 = sphi 0, %s219
      %s223 = sphi 0, %s222
      %s239 = sphi 0, %s223
      %s245 = sphi 0, %s247
      %s248 = sphi 0, %s245
      %s249 = sphi 0, %s248
      %s265 = sphi 0, %s249
      %s271 = sphi 0, %s273
      %s274 = sphi 0, %s271
      %s275 = sphi 0, %s274
      %s291 = sphi 0, %s275
      %s297 = sphi 0, %s299
      %s300 = sphi 0, %s297
      %s301 = sphi 0, %s300
      %s317 = sphi 0, %s301
      %s323 = sphi 0, %s325
      %s326 = sphi 0, %s323
      %s327 = sphi 0, %s326
      %s343 = sphi 0, %s327
      %s349 = sphi 0, %s351
      %s352 = sphi 0, %s349
      %s353 = sphi 0, %s352
      %s369 = sphi 0, %s353
      %s375 = sphi 0, %s377
      %s378 = sphi 0, %s375
      %s379 = sphi 0, %s378
      %s395 = sphi 0, %s379
      %s401 = sphi 0, %s403
      %s404 = sphi 0, %s401
      %s405 = sphi 0, %s404
      %s421 = sphi 0, %s405
      %s427 = sphi 0, %s429
      %s430 = sphi 0, %s427
      %s431 = sphi 0, %s430
      %s447 = sphi 0, %s431
      %s453 = sphi 0, %s455
      %s456 = sphi 0, %s453
      %s457 = sphi 0, %s456
      %s473 = sphi 0, %s457
      %s479 = sphi 0, %s481
      %s482 = sphi 0, %s479
      %s483 = sphi 0, %s482
      %s499 = sphi 0, %s483
      %s505 = sphi 0, %s507
      %s508 = sphi 0, %s505
      %s509 = sphi 0, %s508
      %s525 = sphi 0, %s509
      %s531 = sphi 0, %s533
      %s534 = sphi 0, %s531
      %s535 = sphi 0, %s534
      %s551 = sphi 0, %s535
      %s557 = sphi 0, %s559
      %s560 = sphi 0, %s557
      %s561 = sphi 0, %s560
      %s577 = sphi 0, %s561
      %s583 = sphi 0, %s585
      %s586 = sphi 0, %s583
      %s587 = sphi 0, %s586
      %s603 = sphi 0, %s587
      %s609 = sphi 0, %s611
      %s612 = sphi 0, %s609
      %s613 = sphi 0, %s612
      %s629 = sphi 0, %s613
      %s635 = sphi 0, %s637
      %s638 = sphi 0, %s635
      %s639 = sphi 0, %s638
      %s655 = sphi 0, %s639
      %s661 = sphi 0, %s663
      %s664 = sphi 0, %s661
      %s665 = sphi 0, %s664
      %s681 = sphi 0, %s665
      %s687 = sphi 0, %s689
      %s690 = sphi 0, %s687
      %s691 = sphi 0, %s690
      %s707 = sphi 0, %s691
      %s711 = sphi 0, %s711
      %s713 = sphi 0, %s711
      %s714 = sphi 0, %s713
      %s728 = sphi 0, %s714
      %s732 = sphi 0, %s732
      %s734 = sphi 0, %s732
      %s735 = sphi 0, %s734
      %s749 = sphi 0, %s735
      %s755 = sphi 0, %s757
      %s758 = sphi 0, %s755
      %s759 = sphi 0, %s758
      %s775 = sphi 0, %s759
      %s781 = sphi 0, %s783
      %s784 = sphi 0, %s781
      %s785 = sphi 0, %s784
      %s801 = sphi 0, %s785
    $region4: #{tpu_custom_call.1} parent=1 // loop_header_branch
      %70 = sbr.rel (%p68) target = $region8
    $region5: #{tpu_custom_call.1} parent=1 // loop_body
      %s72 = ssub.s32 %s67, 1
      %s73 = ssub.s32 %s67, 2
      %s80 = sadd.s32 1, %s75
      %p81 = scmp.ge.s32.totalorder %s80, 2
      %s82 = scalar_select %p81, 0, %s80
      %s83 = sadd.s32 1, %s74
      %s84 = scalar_select %p81, %s83, %s74
      %p85 = scmp.ge.s32.totalorder %s84, 2
      %s86 = scalar_select %p85, 0, %s84
      %s87 = ssub.s32 %s74, %s86
      %p88 = scmp.eq.s32.totalorder %s87, 0
      %s90 = sadd.s32 %s89, 1
      %s91 = scalar_select %p88, %s89, %s90
      %p94 = pneg %p88
      %p95 = scmp.eq.s32.totalorder %s67, 3
      %p96 = por %p94, %p95
      %p97 = scmp.ne.s32.totalorder %s89, %s92
      %p98 = scmp.eq.s32.totalorder %s67, 0
      %p99 = por %p97, %p98
      %p100 = scmp.ne.s32.totalorder %s89, %s92
      %p101 = scmp.eq.s32.totalorder %s72, 3
      %p102 = por %p100, %p101
      %p103 = scmp.ne.s32.totalorder %s92, %s93
      %p104 = scmp.eq.s32.totalorder %s72, 0
      %p105 = por %p103, %p104
      %p106 = scmp.ne.s32.totalorder %s92, %s93
      %p107 = scmp.eq.s32.totalorder %s73, 3
      %p108 = por %p106, %p107
      %p110 = scmp.ne.s32.totalorder %s93, %s109
      %p111 = scmp.eq.s32.totalorder %s73, 0
      %p112 = por %p110, %p111
      %s113 = ssub.s32 %s74, %s86
      %p114 = scmp.eq.s32.totalorder %s113, 0
      %s116 = sadd.s32 %s115, 1
      %s117 = scalar_select %p114, %s115, %s116
      %p120 = pneg %p114
      %p121 = scmp.eq.s32.totalorder %s67, 3
      %p122 = por %p120, %p121
      %p123 = scmp.ne.s32.totalorder %s115, %s118
      %p124 = scmp.eq.s32.totalorder %s67, 0
      %p125 = por %p123, %p124
      %p126 = scmp.ne.s32.totalorder %s115, %s118
      %p127 = scmp.eq.s32.totalorder %s72, 3
      %p128 = por %p126, %p127
      %p129 = scmp.ne.s32.totalorder %s118, %s119
      %p130 = scmp.eq.s32.totalorder %s72, 0
      %p131 = por %p129, %p130
      %p132 = scmp.ne.s32.totalorder %s118, %s119
      %p133 = scmp.eq.s32.totalorder %s73, 3
      %p134 = por %p132, %p133
      %p136 = scmp.ne.s32.totalorder %s119, %s135
      %p137 = scmp.eq.s32.totalorder %s73, 0
      %p138 = por %p136, %p137
      %s139 = ssub.s32 %s74, %s86
      %p140 = scmp.eq.s32.totalorder %s139, 0
      %s142 = sadd.s32 %s141, 1
      %s143 = scalar_select %p140, %s141, %s142
      %p146 = pneg %p140
      %p147 = scmp.eq.s32.totalorder %s67, 3
      %p148 = por %p146, %p147
      %p149 = scmp.ne.s32.totalorder %s141, %s144
      %p150 = scmp.eq.s32.totalorder %s67, 0
      %p151 = por %p149, %p150
      %p152 = scmp.ne.s32.totalorder %s141, %s144
      %p153 = scmp.eq.s32.totalorder %s72, 3
      %p154 = por %p152, %p153
      %p155 = scmp.ne.s32.totalorder %s144, %s145
      %p156 = scmp.eq.s32.totalorder %s72, 0
      %p157 = por %p155, %p156
      %p158 = scmp.ne.s32.totalorder %s144, %s145
      %p159 = scmp.eq.s32.totalorder %s73, 3
      %p160 = por %p158, %p159
      %p162 = scmp.ne.s32.totalorder %s145, %s161
      %p163 = scmp.eq.s32.totalorder %s73, 0
      %p164 = por %p162, %p163
      %s165 = ssub.s32 %s74, %s86
      %p166 = scmp.eq.s32.totalorder %s165, 0
      %s168 = sadd.s32 %s167, 1
      %s169 = scalar_select %p166, %s167, %s168
      %p172 = pneg %p166
      %p173 = scmp.eq.s32.totalorder %s67, 3
      %p174 = por %p172, %p173
      %p175 = scmp.ne.s32.totalorder %s167, %s170
      %p176 = scmp.eq.s32.totalorder %s67, 0
      %p177 = por %p175, %p176
      %p178 = scmp.ne.s32.totalorder %s167, %s170
      %p179 = scmp.eq.s32.totalorder %s72, 3
      %p180 = por %p178, %p179
      %p181 = scmp.ne.s32.totalorder %s170, %s171
      %p182 = scmp.eq.s32.totalorder %s72, 0
      %p183 = por %p181, %p182
      %p184 = scmp.ne.s32.totalorder %s170, %s171
      %p185 = scmp.eq.s32.totalorder %s73, 3
      %p186 = por %p184, %p185
      %p188 = scmp.ne.s32.totalorder %s171, %s187
      %p189 = scmp.eq.s32.totalorder %s73, 0
      %p190 = por %p188, %p189
      %s191 = ssub.s32 %s75, %s82
      %p192 = scmp.eq.s32.totalorder %s191, 0
      %s194 = sadd.s32 %s193, 1
      %s195 = scalar_select %p192, %s193, %s194
      %p198 = pneg %p192
      %p199 = scmp.eq.s32.totalorder %s67, 3
      %p200 = por %p198, %p199
      %p201 = scmp.ne.s32.totalorder %s193, %s196
      %p202 = scmp.eq.s32.totalorder %s67, 0
      %p203 = por %p201, %p202
      %p204 = scmp.ne.s32.totalorder %s193, %s196
      %p205 = scmp.eq.s32.totalorder %s72, 3
      %p206 = por %p204, %p205
      %p207 = scmp.ne.s32.totalorder %s196, %s197
      %p208 = scmp.eq.s32.totalorder %s72, 0
      %p209 = por %p207, %p208
      %p210 = scmp.ne.s32.totalorder %s196, %s197
      %p211 = scmp.eq.s32.totalorder %s73, 3
      %p212 = por %p210, %p211
      %p214 = scmp.ne.s32.totalorder %s197, %s213
      %p215 = scmp.eq.s32.totalorder %s73, 0
      %p216 = por %p214, %p215
      %s217 = ssub.s32 %s75, %s82
      %p218 = scmp.eq.s32.totalorder %s217, 0
      %s220 = sadd.s32 %s219, 1
      %s221 = scalar_select %p218, %s219, %s220
      %p224 = pneg %p218
      %p225 = scmp.eq.s32.totalorder %s67, 3
      %p226 = por %p224, %p225
      %p227 = scmp.ne.s32.totalorder %s219, %s222
      %p228 = scmp.eq.s32.totalorder %s67, 0
      %p229 = por %p227, %p228
      %p230 = scmp.ne.s32.totalorder %s219, %s222
      %p231 = scmp.eq.s32.totalorder %s72, 3
      %p232 = por %p230, %p231
      %p233 = scmp.ne.s32.totalorder %s222, %s223
      %p234 = scmp.eq.s32.totalorder %s72, 0
      %p235 = por %p233, %p234
      %p236 = scmp.ne.s32.totalorder %s222, %s223
      %p237 = scmp.eq.s32.totalorder %s73, 3
      %p238 = por %p236, %p237
      %p240 = scmp.ne.s32.totalorder %s223, %s239
      %p241 = scmp.eq.s32.totalorder %s73, 0
      %p242 = por %p240, %p241
      %s243 = ssub.s32 %s75, %s82
      %p244 = scmp.eq.s32.totalorder %s243, 0
      %s246 = sadd.s32 %s245, 1
      %s247 = scalar_select %p244, %s245, %s246
      %p250 = pneg %p244
      %p251 = scmp.eq.s32.totalorder %s67, 3
      %p252 = por %p250, %p251
      %p253 = scmp.ne.s32.totalorder %s245, %s248
      %p254 = scmp.eq.s32.totalorder %s67, 0
      %p255 = por %p253, %p254
      %p256 = scmp.ne.s32.totalorder %s245, %s248
      %p257 = scmp.eq.s32.totalorder %s72, 3
      %p258 = por %p256, %p257
      %p259 = scmp.ne.s32.totalorder %s248, %s249
      %p260 = scmp.eq.s32.totalorder %s72, 0
      %p261 = por %p259, %p260
      %p262 = scmp.ne.s32.totalorder %s248, %s249
      %p263 = scmp.eq.s32.totalorder %s73, 3
      %p264 = por %p262, %p263
      %p266 = scmp.ne.s32.totalorder %s249, %s265
      %p267 = scmp.eq.s32.totalorder %s73, 0
      %p268 = por %p266, %p267
      %s269 = ssub.s32 %s75, %s82
      %p270 = scmp.eq.s32.totalorder %s269, 0
      %s272 = sadd.s32 %s271, 1
      %s273 = scalar_select %p270, %s271, %s272
      %p276 = pneg %p270
      %p277 = scmp.eq.s32.totalorder %s67, 3
      %p278 = por %p276, %p277
      %p279 = scmp.ne.s32.totalorder %s271, %s274
      %p280 = scmp.eq.s32.totalorder %s67, 0
      %p281 = por %p279, %p280
      %p282 = scmp.ne.s32.totalorder %s271, %s274
      %p283 = scmp.eq.s32.totalorder %s72, 3
      %p284 = por %p282, %p283
      %p285 = scmp.ne.s32.totalorder %s274, %s275
      %p286 = scmp.eq.s32.totalorder %s72, 0
      %p287 = por %p285, %p286
      %p288 = scmp.ne.s32.totalorder %s274, %s275
      %p289 = scmp.eq.s32.totalorder %s73, 3
      %p290 = por %p288, %p289
      %p292 = scmp.ne.s32.totalorder %s275, %s291
      %p293 = scmp.eq.s32.totalorder %s73, 0
      %p294 = por %p292, %p293
      %s295 = ssub.s32 %s75, %s82
      %p296 = scmp.eq.s32.totalorder %s295, 0
      %s298 = sadd.s32 %s297, 1
      %s299 = scalar_select %p296, %s297, %s298
      %p302 = pneg %p296
      %p303 = scmp.eq.s32.totalorder %s67, 3
      %p304 = por %p302, %p303
      %p305 = scmp.ne.s32.totalorder %s297, %s300
      %p306 = scmp.eq.s32.totalorder %s67, 0
      %p307 = por %p305, %p306
      %p308 = scmp.ne.s32.totalorder %s297, %s300
      %p309 = scmp.eq.s32.totalorder %s72, 3
      %p310 = por %p308, %p309
      %p311 = scmp.ne.s32.totalorder %s300, %s301
      %p312 = scmp.eq.s32.totalorder %s72, 0
      %p313 = por %p311, %p312
      %p314 = scmp.ne.s32.totalorder %s300, %s301
      %p315 = scmp.eq.s32.totalorder %s73, 3
      %p316 = por %p314, %p315
      %p318 = scmp.ne.s32.totalorder %s301, %s317
      %p319 = scmp.eq.s32.totalorder %s73, 0
      %p320 = por %p318, %p319
      %s321 = ssub.s32 %s75, %s82
      %p322 = scmp.eq.s32.totalorder %s321, 0
      %s324 = sadd.s32 %s323, 1
      %s325 = scalar_select %p322, %s323, %s324
      %p328 = pneg %p322
      %p329 = scmp.eq.s32.totalorder %s67, 3
      %p330 = por %p328, %p329
      %p331 = scmp.ne.s32.totalorder %s323, %s326
      %p332 = scmp.eq.s32.totalorder %s67, 0
      %p333 = por %p331, %p332
      %p334 = scmp.ne.s32.totalorder %s323, %s326
      %p335 = scmp.eq.s32.totalorder %s72, 3
      %p336 = por %p334, %p335
      %p337 = scmp.ne.s32.totalorder %s326, %s327
      %p338 = scmp.eq.s32.totalorder %s72, 0
      %p339 = por %p337, %p338
      %p340 = scmp.ne.s32.totalorder %s326, %s327
      %p341 = scmp.eq.s32.totalorder %s73, 3
      %p342 = por %p340, %p341
      %p344 = scmp.ne.s32.totalorder %s327, %s343
      %p345 = scmp.eq.s32.totalorder %s73, 0
      %p346 = por %p344, %p345
      %s347 = ssub.s32 %s75, %s82
      %p348 = scmp.eq.s32.totalorder %s347, 0
      %s350 = sadd.s32 %s349, 1
      %s351 = scalar_select %p348, %s349, %s350
      %p354 = pneg %p348
      %p355 = scmp.eq.s32.totalorder %s67, 3
      %p356 = por %p354, %p355
      %p357 = scmp.ne.s32.totalorder %s349, %s352
      %p358 = scmp.eq.s32.totalorder %s67, 0
      %p359 = por %p357, %p358
      %p360 = scmp.ne.s32.totalorder %s349, %s352
      %p361 = scmp.eq.s32.totalorder %s72, 3
      %p362 = por %p360, %p361
      %p363 = scmp.ne.s32.totalorder %s352, %s353
      %p364 = scmp.eq.s32.totalorder %s72, 0
      %p365 = por %p363, %p364
      %p366 = scmp.ne.s32.totalorder %s352, %s353
      %p367 = scmp.eq.s32.totalorder %s73, 3
      %p368 = por %p366, %p367
      %p370 = scmp.ne.s32.totalorder %s353, %s369
      %p371 = scmp.eq.s32.totalorder %s73, 0
      %p372 = por %p370, %p371
      %s373 = ssub.s32 %s75, %s82
      %p374 = scmp.eq.s32.totalorder %s373, 0
      %s376 = sadd.s32 %s375, 1
      %s377 = scalar_select %p374, %s375, %s376
      %p380 = pneg %p374
      %p381 = scmp.eq.s32.totalorder %s67, 3
      %p382 = por %p380, %p381
      %p383 = scmp.ne.s32.totalorder %s375, %s378
      %p384 = scmp.eq.s32.totalorder %s67, 0
      %p385 = por %p383, %p384
      %p386 = scmp.ne.s32.totalorder %s375, %s378
      %p387 = scmp.eq.s32.totalorder %s72, 3
      %p388 = por %p386, %p387
      %p389 = scmp.ne.s32.totalorder %s378, %s379
      %p390 = scmp.eq.s32.totalorder %s72, 0
      %p391 = por %p389, %p390
      %p392 = scmp.ne.s32.totalorder %s378, %s379
      %p393 = scmp.eq.s32.totalorder %s73, 3
      %p394 = por %p392, %p393
      %p396 = scmp.ne.s32.totalorder %s379, %s395
      %p397 = scmp.eq.s32.totalorder %s73, 0
      %p398 = por %p396, %p397
      %s399 = ssub.s32 %s75, %s82
      %p400 = scmp.eq.s32.totalorder %s399, 0
      %s402 = sadd.s32 %s401, 1
      %s403 = scalar_select %p400, %s401, %s402
      %p406 = pneg %p400
      %p407 = scmp.eq.s32.totalorder %s67, 3
      %p408 = por %p406, %p407
      %p409 = scmp.ne.s32.totalorder %s401, %s404
      %p410 = scmp.eq.s32.totalorder %s67, 0
      %p411 = por %p409, %p410
      %p412 = scmp.ne.s32.totalorder %s401, %s404
      %p413 = scmp.eq.s32.totalorder %s72, 3
      %p414 = por %p412, %p413
      %p415 = scmp.ne.s32.totalorder %s404, %s405
      %p416 = scmp.eq.s32.totalorder %s72, 0
      %p417 = por %p415, %p416
      %p418 = scmp.ne.s32.totalorder %s404, %s405
      %p419 = scmp.eq.s32.totalorder %s73, 3
      %p420 = por %p418, %p419
      %p422 = scmp.ne.s32.totalorder %s405, %s421
      %p423 = scmp.eq.s32.totalorder %s73, 0
      %p424 = por %p422, %p423
      %s425 = ssub.s32 %s75, %s82
      %p426 = scmp.eq.s32.totalorder %s425, 0
      %s428 = sadd.s32 %s427, 1
      %s429 = scalar_select %p426, %s427, %s428
      %p432 = pneg %p426
      %p433 = scmp.eq.s32.totalorder %s67, 3
      %p434 = por %p432, %p433
      %p435 = scmp.ne.s32.totalorder %s427, %s430
      %p436 = scmp.eq.s32.totalorder %s67, 0
      %p437 = por %p435, %p436
      %p438 = scmp.ne.s32.totalorder %s427, %s430
      %p439 = scmp.eq.s32.totalorder %s72, 3
      %p440 = por %p438, %p439
      %p441 = scmp.ne.s32.totalorder %s430, %s431
      %p442 = scmp.eq.s32.totalorder %s72, 0
      %p443 = por %p441, %p442
      %p444 = scmp.ne.s32.totalorder %s430, %s431
      %p445 = scmp.eq.s32.totalorder %s73, 3
      %p446 = por %p444, %p445
      %p448 = scmp.ne.s32.totalorder %s431, %s447
      %p449 = scmp.eq.s32.totalorder %s73, 0
      %p450 = por %p448, %p449
      %s451 = ssub.s32 %s75, %s82
      %p452 = scmp.eq.s32.totalorder %s451, 0
      %s454 = sadd.s32 %s453, 1
      %s455 = scalar_select %p452, %s453, %s454
      %p458 = pneg %p452
      %p459 = scmp.eq.s32.totalorder %s67, 3
      %p460 = por %p458, %p459
      %p461 = scmp.ne.s32.totalorder %s453, %s456
      %p462 = scmp.eq.s32.totalorder %s67, 0
      %p463 = por %p461, %p462
      %p464 = scmp.ne.s32.totalorder %s453, %s456
      %p465 = scmp.eq.s32.totalorder %s72, 3
      %p466 = por %p464, %p465
      %p467 = scmp.ne.s32.totalorder %s456, %s457
      %p468 = scmp.eq.s32.totalorder %s72, 0
      %p469 = por %p467, %p468
      %p470 = scmp.ne.s32.totalorder %s456, %s457
      %p471 = scmp.eq.s32.totalorder %s73, 3
      %p472 = por %p470, %p471
      %p474 = scmp.ne.s32.totalorder %s457, %s473
      %p475 = scmp.eq.s32.totalorder %s73, 0
      %p476 = por %p474, %p475
      %s477 = ssub.s32 %s75, %s82
      %p478 = scmp.eq.s32.totalorder %s477, 0
      %s480 = sadd.s32 %s479, 1
      %s481 = scalar_select %p478, %s479, %s480
      %p484 = pneg %p478
      %p485 = scmp.eq.s32.totalorder %s67, 3
      %p486 = por %p484, %p485
      %p487 = scmp.ne.s32.totalorder %s479, %s482
      %p488 = scmp.eq.s32.totalorder %s67, 0
      %p489 = por %p487, %p488
      %p490 = scmp.ne.s32.totalorder %s479, %s482
      %p491 = scmp.eq.s32.totalorder %s72, 3
      %p492 = por %p490, %p491
      %p493 = scmp.ne.s32.totalorder %s482, %s483
      %p494 = scmp.eq.s32.totalorder %s72, 0
      %p495 = por %p493, %p494
      %p496 = scmp.ne.s32.totalorder %s482, %s483
      %p497 = scmp.eq.s32.totalorder %s73, 3
      %p498 = por %p496, %p497
      %p500 = scmp.ne.s32.totalorder %s483, %s499
      %p501 = scmp.eq.s32.totalorder %s73, 0
      %p502 = por %p500, %p501
      %s503 = ssub.s32 %s75, %s82
      %p504 = scmp.eq.s32.totalorder %s503, 0
      %s506 = sadd.s32 %s505, 1
      %s507 = scalar_select %p504, %s505, %s506
      %p510 = pneg %p504
      %p511 = scmp.eq.s32.totalorder %s67, 3
      %p512 = por %p510, %p511
      %p513 = scmp.ne.s32.totalorder %s505, %s508
      %p514 = scmp.eq.s32.totalorder %s67, 0
      %p515 = por %p513, %p514
      %p516 = scmp.ne.s32.totalorder %s505, %s508
      %p517 = scmp.eq.s32.totalorder %s72, 3
      %p518 = por %p516, %p517
      %p519 = scmp.ne.s32.totalorder %s508, %s509
      %p520 = scmp.eq.s32.totalorder %s72, 0
      %p521 = por %p519, %p520
      %p522 = scmp.ne.s32.totalorder %s508, %s509
      %p523 = scmp.eq.s32.totalorder %s73, 3
      %p524 = por %p522, %p523
      %p526 = scmp.ne.s32.totalorder %s509, %s525
      %p527 = scmp.eq.s32.totalorder %s73, 0
      %p528 = por %p526, %p527
      %s529 = ssub.s32 %s75, %s82
      %p530 = scmp.eq.s32.totalorder %s529, 0
      %s532 = sadd.s32 %s531, 1
      %s533 = scalar_select %p530, %s531, %s532
      %p536 = pneg %p530
      %p537 = scmp.eq.s32.totalorder %s67, 3
      %p538 = por %p536, %p537
      %p539 = scmp.ne.s32.totalorder %s531, %s534
      %p540 = scmp.eq.s32.totalorder %s67, 0
      %p541 = por %p539, %p540
      %p542 = scmp.ne.s32.totalorder %s531, %s534
      %p543 = scmp.eq.s32.totalorder %s72, 3
      %p544 = por %p542, %p543
      %p545 = scmp.ne.s32.totalorder %s534, %s535
      %p546 = scmp.eq.s32.totalorder %s72, 0
      %p547 = por %p545, %p546
      %p548 = scmp.ne.s32.totalorder %s534, %s535
      %p549 = scmp.eq.s32.totalorder %s73, 3
      %p550 = por %p548, %p549
      %p552 = scmp.ne.s32.totalorder %s535, %s551
      %p553 = scmp.eq.s32.totalorder %s73, 0
      %p554 = por %p552, %p553
      %s555 = ssub.s32 %s75, %s82
      %p556 = scmp.eq.s32.totalorder %s555, 0
      %s558 = sadd.s32 %s557, 1
      %s559 = scalar_select %p556, %s557, %s558
      %p562 = pneg %p556
      %p563 = scmp.eq.s32.totalorder %s67, 3
      %p564 = por %p562, %p563
      %p565 = scmp.ne.s32.totalorder %s557, %s560
      %p566 = scmp.eq.s32.totalorder %s67, 0
      %p567 = por %p565, %p566
      %p568 = scmp.ne.s32.totalorder %s557, %s560
      %p569 = scmp.eq.s32.totalorder %s72, 3
      %p570 = por %p568, %p569
      %p571 = scmp.ne.s32.totalorder %s560, %s561
      %p572 = scmp.eq.s32.totalorder %s72, 0
      %p573 = por %p571, %p572
      %p574 = scmp.ne.s32.totalorder %s560, %s561
      %p575 = scmp.eq.s32.totalorder %s73, 3
      %p576 = por %p574, %p575
      %p578 = scmp.ne.s32.totalorder %s561, %s577
      %p579 = scmp.eq.s32.totalorder %s73, 0
      %p580 = por %p578, %p579
      %s581 = ssub.s32 %s75, %s82
      %p582 = scmp.eq.s32.totalorder %s581, 0
      %s584 = sadd.s32 %s583, 1
      %s585 = scalar_select %p582, %s583, %s584
      %p588 = pneg %p582
      %p589 = scmp.eq.s32.totalorder %s67, 3
      %p590 = por %p588, %p589
      %p591 = scmp.ne.s32.totalorder %s583, %s586
      %p592 = scmp.eq.s32.totalorder %s67, 0
      %p593 = por %p591, %p592
      %p594 = scmp.ne.s32.totalorder %s583, %s586
      %p595 = scmp.eq.s32.totalorder %s72, 3
      %p596 = por %p594, %p595
      %p597 = scmp.ne.s32.totalorder %s586, %s587
      %p598 = scmp.eq.s32.totalorder %s72, 0
      %p599 = por %p597, %p598
      %p600 = scmp.ne.s32.totalorder %s586, %s587
      %p601 = scmp.eq.s32.totalorder %s73, 3
      %p602 = por %p600, %p601
      %p604 = scmp.ne.s32.totalorder %s587, %s603
      %p605 = scmp.eq.s32.totalorder %s73, 0
      %p606 = por %p604, %p605
      %s607 = ssub.s32 %s75, %s82
      %p608 = scmp.eq.s32.totalorder %s607, 0
      %s610 = sadd.s32 %s609, 1
      %s611 = scalar_select %p608, %s609, %s610
      %p614 = pneg %p608
      %p615 = scmp.eq.s32.totalorder %s67, 3
      %p616 = por %p614, %p615
      %p617 = scmp.ne.s32.totalorder %s609, %s612
      %p618 = scmp.eq.s32.totalorder %s67, 0
      %p619 = por %p617, %p618
      %p620 = scmp.ne.s32.totalorder %s609, %s612
      %p621 = scmp.eq.s32.totalorder %s72, 3
      %p622 = por %p620, %p621
      %p623 = scmp.ne.s32.totalorder %s612, %s613
      %p624 = scmp.eq.s32.totalorder %s72, 0
      %p625 = por %p623, %p624
      %p626 = scmp.ne.s32.totalorder %s612, %s613
      %p627 = scmp.eq.s32.totalorder %s73, 3
      %p628 = por %p626, %p627
      %p630 = scmp.ne.s32.totalorder %s613, %s629
      %p631 = scmp.eq.s32.totalorder %s73, 0
      %p632 = por %p630, %p631
      %s633 = ssub.s32 %s75, %s82
      %p634 = scmp.eq.s32.totalorder %s633, 0
      %s636 = sadd.s32 %s635, 1
      %s637 = scalar_select %p634, %s635, %s636
      %p640 = pneg %p634
      %p641 = scmp.eq.s32.totalorder %s67, 3
      %p642 = por %p640, %p641
      %p643 = scmp.ne.s32.totalorder %s635, %s638
      %p644 = scmp.eq.s32.totalorder %s67, 0
      %p645 = por %p643, %p644
      %p646 = scmp.ne.s32.totalorder %s635, %s638
      %p647 = scmp.eq.s32.totalorder %s72, 3
      %p648 = por %p646, %p647
      %p649 = scmp.ne.s32.totalorder %s638, %s639
      %p650 = scmp.eq.s32.totalorder %s72, 0
      %p651 = por %p649, %p650
      %p652 = scmp.ne.s32.totalorder %s638, %s639
      %p653 = scmp.eq.s32.totalorder %s73, 3
      %p654 = por %p652, %p653
      %p656 = scmp.ne.s32.totalorder %s639, %s655
      %p657 = scmp.eq.s32.totalorder %s73, 0
      %p658 = por %p656, %p657
      %s659 = ssub.s32 %s75, %s82
      %p660 = scmp.eq.s32.totalorder %s659, 0
      %s662 = sadd.s32 %s661, 1
      %s663 = scalar_select %p660, %s661, %s662
      %p666 = pneg %p660
      %p667 = scmp.eq.s32.totalorder %s67, 3
      %p668 = por %p666, %p667
      %p669 = scmp.ne.s32.totalorder %s661, %s664
      %p670 = scmp.eq.s32.totalorder %s67, 0
      %p671 = por %p669, %p670
      %p672 = scmp.ne.s32.totalorder %s661, %s664
      %p673 = scmp.eq.s32.totalorder %s72, 3
      %p674 = por %p672, %p673
      %p675 = scmp.ne.s32.totalorder %s664, %s665
      %p676 = scmp.eq.s32.totalorder %s72, 0
      %p677 = por %p675, %p676
      %p678 = scmp.ne.s32.totalorder %s664, %s665
      %p679 = scmp.eq.s32.totalorder %s73, 3
      %p680 = por %p678, %p679
      %p682 = scmp.ne.s32.totalorder %s665, %s681
      %p683 = scmp.eq.s32.totalorder %s73, 0
      %p684 = por %p682, %p683
      %s685 = ssub.s32 %s75, %s82
      %p686 = scmp.eq.s32.totalorder %s685, 0
      %s688 = sadd.s32 %s687, 1
      %s689 = scalar_select %p686, %s687, %s688
      %p692 = pneg %p686
      %p693 = scmp.eq.s32.totalorder %s67, 3
      %p694 = por %p692, %p693
      %p695 = scmp.ne.s32.totalorder %s687, %s690
      %p696 = scmp.eq.s32.totalorder %s67, 0
      %p697 = por %p695, %p696
      %p698 = scmp.ne.s32.totalorder %s687, %s690
      %p699 = scmp.eq.s32.totalorder %s72, 3
      %p700 = por %p698, %p699
      %p701 = scmp.ne.s32.totalorder %s690, %s691
      %p702 = scmp.eq.s32.totalorder %s72, 0
      %p703 = por %p701, %p702
      %p704 = scmp.ne.s32.totalorder %s690, %s691
      %p705 = scmp.eq.s32.totalorder %s73, 3
      %p706 = por %p704, %p705
      %p708 = scmp.ne.s32.totalorder %s691, %s707
      %p709 = scmp.eq.s32.totalorder %s73, 0
      %p710 = por %p708, %p709
      %s712 = sadd.s32 %s711, 1
      %p715 = scmp.eq.s32.totalorder %s67, 3
      %p716 = scmp.ne.s32.totalorder %s711, %s713
      %p717 = scmp.eq.s32.totalorder %s67, 0
      %p718 = por %p716, %p717
      %p719 = scmp.ne.s32.totalorder %s711, %s713
      %p720 = scmp.eq.s32.totalorder %s72, 3
      %p721 = por %p719, %p720
      %p722 = scmp.ne.s32.totalorder %s713, %s714
      %p723 = scmp.eq.s32.totalorder %s72, 0
      %p724 = por %p722, %p723
      %p725 = scmp.ne.s32.totalorder %s713, %s714
      %p726 = scmp.eq.s32.totalorder %s73, 3
      %p727 = por %p725, %p726
      %p729 = scmp.ne.s32.totalorder %s714, %s728
      %p730 = scmp.eq.s32.totalorder %s73, 0
      %p731 = por %p729, %p730
      %s733 = sadd.s32 %s732, 1
      %p736 = scmp.eq.s32.totalorder %s67, 3
      %p737 = scmp.ne.s32.totalorder %s732, %s734
      %p738 = scmp.eq.s32.totalorder %s67, 0
      %p739 = por %p737, %p738
      %p740 = scmp.ne.s32.totalorder %s732, %s734
      %p741 = scmp.eq.s32.totalorder %s72, 3
      %p742 = por %p740, %p741
      %p743 = scmp.ne.s32.totalorder %s734, %s735
      %p744 = scmp.eq.s32.totalorder %s72, 0
      %p745 = por %p743, %p744
      %p746 = scmp.ne.s32.totalorder %s734, %s735
      %p747 = scmp.eq.s32.totalorder %s73, 3
      %p748 = por %p746, %p747
      %p750 = scmp.ne.s32.totalorder %s735, %s749
      %p751 = scmp.eq.s32.totalorder %s73, 0
      %p752 = por %p750, %p751
      %s753 = ssub.s32 %s74, %s86
      %p754 = scmp.eq.s32.totalorder %s753, 0
      %s756 = sadd.s32 %s755, 1
      %s757 = scalar_select %p754, %s755, %s756
      %p760 = pneg %p754
      %p761 = scmp.eq.s32.totalorder %s67, 3
      %p762 = por %p760, %p761
      %p763 = scmp.ne.s32.totalorder %s755, %s758
      %p764 = scmp.eq.s32.totalorder %s67, 0
      %p765 = por %p763, %p764
      %p766 = scmp.ne.s32.totalorder %s755, %s758
      %p767 = scmp.eq.s32.totalorder %s72, 3
      %p768 = por %p766, %p767
      %p769 = scmp.ne.s32.totalorder %s758, %s759
      %p770 = scmp.eq.s32.totalorder %s72, 0
      %p771 = por %p769, %p770
      %p772 = scmp.ne.s32.totalorder %s758, %s759
      %p773 = scmp.eq.s32.totalorder %s73, 3
      %p774 = por %p772, %p773
      %p776 = scmp.ne.s32.totalorder %s759, %s775
      %p777 = scmp.eq.s32.totalorder %s73, 0
      %p778 = por %p776, %p777
      %s779 = ssub.s32 %s74, %s86
      %p780 = scmp.eq.s32.totalorder %s779, 0
      %s782 = sadd.s32 %s781, 1
      %s783 = scalar_select %p780, %s781, %s782
      %p786 = pneg %p780
      %p787 = scmp.eq.s32.totalorder %s67, 3
      %p788 = por %p786, %p787
      %p789 = scmp.ne.s32.totalorder %s781, %s784
      %p790 = scmp.eq.s32.totalorder %s67, 0
      %p791 = por %p789, %p790
      %p792 = scmp.ne.s32.totalorder %s781, %s784
      %p793 = scmp.eq.s32.totalorder %s72, 3
      %p794 = por %p792, %p793
      %p795 = scmp.ne.s32.totalorder %s784, %s785
      %p796 = scmp.eq.s32.totalorder %s72, 0
      %p797 = por %p795, %p796
      %p798 = scmp.ne.s32.totalorder %s784, %s785
      %p799 = scmp.eq.s32.totalorder %s73, 3
      %p800 = por %p798, %p799
      %p802 = scmp.ne.s32.totalorder %s785, %s801
      %p803 = scmp.eq.s32.totalorder %s73, 0
      %p804 = por %p802, %p803
      %p805 = scmp.le.s32.totalorder 1, %s67
      %p806 = scmp.lt.s32.totalorder %s67, 5
      %p807 = pnand %p805, %p806
      %p808 = pneg %p807
      // Predicated region
      $region9: #{tpu_custom_call.1} parent=5 // pred_check
        _
      $region10: #{tpu_custom_call.1} parent=5 // pred_check_branch
        %810 = sbr.rel (%p807) target = $region12
      $region11: #{tpu_custom_call.1} parent=5 // pred_region
        %s811 = ssub.s32 %s67, 1
        // Predicated region
        $region13: #{tpu_custom_call.1} parent=11 // pred_check
          %p812 = pneg %p724
        $region14: #{tpu_custom_call.1} parent=11 // pred_check_branch
          %814 = sbr.rel (%p812) target = $region16
        $region15: #{tpu_custom_call.1} parent=11 // pred_region
          _
        $region16: #{tpu_custom_call.1} parent=11 // pred_fallthru
          _
        // Predicated region
        $region17: #{tpu_custom_call.1} parent=11 // pred_check
          %p815 = pneg %p745
        $region18: #{tpu_custom_call.1} parent=11 // pred_check_branch
          %817 = sbr.rel (%p815) target = $region20
        $region19: #{tpu_custom_call.1} parent=11 // pred_region
          _
        $region20: #{tpu_custom_call.1} parent=11 // pred_fallthru
          _
      $region12: #{tpu_custom_call.1} parent=5 // pred_fallthru
        _
      %p818 = scmp.lt.s32.totalorder %s67, 4
      // Predicated region
      $region21: #{tpu_custom_call.1} parent=5 // pred_check
        %p819 = pneg %p818
      $region22: #{tpu_custom_call.1} parent=5 // pred_check_branch
        %821 = sbr.rel (%p819) target = $region24
      $region23: #{tpu_custom_call.1} parent=5 // pred_region
        // Predicated region
        $region25: #{tpu_custom_call.1} parent=23 // pred_check
          %p822 = pneg %p99
        $region26: #{tpu_custom_call.1} parent=23 // pred_check_branch
          %824 = sbr.rel (%p822) target = $region28
        $region27: #{tpu_custom_call.1} parent=23 // pred_region
          %s825 = sand.u32 %s89, 1
          %s826 = scalar_lea.sflag [#allocation5], %s825
          %s827 = sand.u32 %s89, 1
          %s828 = smul.addr %s827, 8
          %s829 = scalar_lea.vmem [#allocation4], %s828
          %s831 = ssub.s32 128, 128
          %832 = vsyncadd %s826, %s831
          %s833 = smul.addr %s74, 128
          %s834 = scalar_lea.hbm %s0, %s833
          %s836 = sshll.u32 %s829, 4
          %s837 = int_to_ptr.vmem [resolvable:$true] %s836
          %839 = dma.hbm_to_vmem [thread:$0]  %s834, 128, %s837, %s826
        $region28: #{tpu_custom_call.1} parent=23 // pred_fallthru
          _
        // Predicated region
        $region29: #{tpu_custom_call.1} parent=23 // pred_check
          %p840 = pneg %p125
        $region30: #{tpu_custom_call.1} parent=23 // pred_check_branch
          %842 = sbr.rel (%p840) target = $region32
        $region31: #{tpu_custom_call.1} parent=23 // pred_region
          %s843 = sand.u32 %s67, 1
          %s844 = scalar_lea.sflag [#allocation8], %s843
          %s845 = sand.u32 %s115, 1
          %s846 = smul.addr %s845, 8
          %s847 = scalar_lea.vmem [#allocation7], %s846
          %s848 = smul.u32 2, %s74
          %s850 = ssub.s32 128, 128
          %851 = vsyncadd %s844, %s850
          %s852 = smul.addr %s848, 64
          %s853 = scalar_lea.hbm %s1, %s852
          %s854 = sshll.u32 %s847, 4
          %s855 = int_to_ptr.vmem [resolvable:$true] %s854
          %860 = dma.hbm_to_vmem [thread:$0]  %s853, 128, %s855, %s844, 64, 64, 4
        $region32: #{tpu_custom_call.1} parent=23 // pred_fallthru
          _
        // Predicated region
        $region33: #{tpu_custom_call.1} parent=23 // pred_check
          %p861 = pneg %p151
        $region34: #{tpu_custom_call.1} parent=23 // pred_check_branch
          %863 = sbr.rel (%p861) target = $region36
        $region35: #{tpu_custom_call.1} parent=23 // pred_region
          %p864 = scmp.lt.s32.totalorder %s74, 1
          %s865 = scalar_select %p864, %s74, 1
          %s866 = smul.addr %s865, 8
          %s867 = scalar_lea.vmem %s2, %s866
        $region36: #{tpu_custom_call.1} parent=23 // pred_fallthru
          _
        // Predicated region
        $region37: #{tpu_custom_call.1} parent=23 // pred_check
          %p868 = pneg %p177
        $region38: #{tpu_custom_call.1} parent=23 // pred_check_branch
          %870 = sbr.rel (%p868) target = $region40
        $region39: #{tpu_custom_call.1} parent=23 // pred_region
          %s871 = sand.u32 %s67, 1
          %s872 = scalar_lea.sflag [#allocation8], %s871
          %s873 = sand.u32 %s167, 1
          %s874 = smul.addr %s873, 8
          %s875 = scalar_lea.vmem [#allocation9], %s874
          %s877 = ssub.s32 128, 128
          %878 = vsyncadd %s872, %s877
          %s879 = smul.addr %s74, 128
          %s880 = scalar_lea.hbm %s3, %s879
          %s882 = sshll.u32 %s875, 4
          %s883 = int_to_ptr.vmem [resolvable:$true] %s882
          %885 = dma.hbm_to_vmem [thread:$0]  %s880, 128, %s883, %s872
        $region40: #{tpu_custom_call.1} parent=23 // pred_fallthru
          _
        // Predicated region
        $region41: #{tpu_custom_call.1} parent=23 // pred_check
          %p886 = pneg %p203
        $region42: #{tpu_custom_call.1} parent=23 // pred_check_branch
          %888 = sbr.rel (%p886) target = $region44
        $region43: #{tpu_custom_call.1} parent=23 // pred_region
          %s889 = sand.u32 %s67, 1
          %s890 = scalar_lea.sflag [#allocation11], %s889
          %s891 = sand.u32 %s193, 1
          %s892 = scalar_lea.vmem [#allocation10], %s891
          %s894 = ssub.s32 16, 16
          %895 = vsyncadd %s890, %s894
          %s896 = smul.addr %s75, 16
          %s897 = scalar_lea.hbm %s4, %s896
          %s899 = sshll.u32 %s892, 4
          %s900 = int_to_ptr.vmem [resolvable:$true] %s899
          %902 = dma.hbm_to_vmem [thread:$0]  %s897, 16, %s900, %s890
        $region44: #{tpu_custom_call.1} parent=23 // pred_fallthru
          _
        // Predicated region
        $region45: #{tpu_custom_call.1} parent=23 // pred_check
          %p903 = pneg %p229
        $region46: #{tpu_custom_call.1} parent=23 // pred_check_branch
          %905 = sbr.rel (%p903) target = $region48
        $region47: #{tpu_custom_call.1} parent=23 // pred_region
          %s906 = sand.u32 %s67, 1
          %s907 = scalar_lea.sflag [#allocation11], %s906
          %s908 = sand.u32 %s219, 1
          %s909 = scalar_lea.vmem [#allocation12], %s908
          %s911 = ssub.s32 16, 16
          %912 = vsyncadd %s907, %s911
          %s913 = smul.addr %s75, 16
          %s914 = scalar_lea.hbm %s5, %s913
          %s916 = sshll.u32 %s909, 4
          %s917 = int_to_ptr.vmem [resolvable:$true] %s916
          %919 = dma.hbm_to_vmem [thread:$0]  %s914, 16, %s917, %s907
        $region48: #{tpu_custom_call.1} parent=23 // pred_fallthru
          _
        // Predicated region
        $region49: #{tpu_custom_call.1} parent=23 // pred_check
          %p920 = pneg %p255
        $region50: #{tpu_custom_call.1} parent=23 // pred_check_branch
          %922 = sbr.rel (%p920) target = $region52
        $region51: #{tpu_custom_call.1} parent=23 // pred_region
          %p923 = scmp.lt.s32.totalorder %s75, 1
          %s924 = scalar_select %p923, %s75, 1
          %s925 = smul.addr %s924, 4
          %s926 = smul.addr %s925, 4
          %s927 = scalar_lea.vmem %s6, %s926
        $region52: #{tpu_custom_call.1} parent=23 // pred_fallthru
          _
        // Predicated region
        $region53: #{tpu_custom_call.1} parent=23 // pred_check
          %p928 = pneg %p281
        $region54: #{tpu_custom_call.1} parent=23 // pred_check_branch
          %930 = sbr.rel (%p928) target = $region56
        $region55: #{tpu_custom_call.1} parent=23 // pred_region
          %s931 = sand.u32 %s67, 1
          %s932 = scalar_lea.sflag [#allocation14], %s931
          %s933 = sand.u32 %s271, 1
          %s934 = scalar_lea.vmem [#allocation13], %s933
          %s936 = ssub.s32 16, 16
          %937 = vsyncadd %s932, %s936
          %s938 = smul.addr %s75, 16
          %s939 = scalar_lea.hbm %s7, %s938
          %s941 = sshll.u32 %s934, 4
          %s942 = int_to_ptr.vmem [resolvable:$true] %s941
          %944 = dma.hbm_to_vmem [thread:$0]  %s939, 16, %s942, %s932
        $region56: #{tpu_custom_call.1} parent=23 // pred_fallthru
          _
        // Predicated region
        $region57: #{tpu_custom_call.1} parent=23 // pred_check
          %p945 = pneg %p307
        $region58: #{tpu_custom_call.1} parent=23 // pred_check_branch
          %947 = sbr.rel (%p945) target = $region60
        $region59: #{tpu_custom_call.1} parent=23 // pred_region
          %p948 = scmp.lt.s32.totalorder %s75, 1
          %s949 = scalar_select %p948, %s75, 1
          %s950 = smul.addr %s949, 4
          %s951 = smul.addr %s950, 4
          %s952 = scalar_lea.vmem %s8, %s951
        $region60: #{tpu_custom_call.1} parent=23 // pred_fallthru
          _
        // Predicated region
        $region61: #{tpu_custom_call.1} parent=23 // pred_check
          %p953 = pneg %p333
        $region62: #{tpu_custom_call.1} parent=23 // pred_check_branch
          %955 = sbr.rel (%p953) target = $region64
        $region63: #{tpu_custom_call.1} parent=23 // pred_region
          %s956 = sand.u32 %s67, 1
          %s957 = scalar_lea.sflag [#allocation14], %s956
          %s958 = sand.u32 %s323, 1
          %s959 = scalar_lea.vmem [#allocation15], %s958
          %s961 = ssub.s32 16, 16
          %962 = vsyncadd %s957, %s961
          %s963 = smul.addr %s75, 16
          %s964 = scalar_lea.hbm %s9, %s963
          %s966 = sshll.u32 %s959, 4
          %s967 = int_to_ptr.vmem [resolvable:$true] %s966
          %969 = dma.hbm_to_vmem [thread:$0]  %s964, 16, %s967, %s957
        $region64: #{tpu_custom_call.1} parent=23 // pred_fallthru
          _
        // Predicated region
        $region65: #{tpu_custom_call.1} parent=23 // pred_check
          %p970 = pneg %p359
        $region66: #{tpu_custom_call.1} parent=23 // pred_check_branch
          %972 = sbr.rel (%p970) target = $region68
        $region67: #{tpu_custom_call.1} parent=23 // pred_region
          %s973 = sand.u32 %s67, 1
          %s974 = scalar_lea.sflag [#allocation17], %s973
          %s975 = sand.u32 %s349, 1
          %s976 = scalar_lea.vmem [#allocation16], %s975
          %s978 = ssub.s32 16, 16
          %979 = vsyncadd %s974, %s978
          %s980 = smul.addr %s75, 16
          %s981 = scalar_lea.hbm %s10, %s980
          %s983 = sshll.u32 %s976, 4
          %s984 = int_to_ptr.vmem [resolvable:$true] %s983
          %986 = dma.hbm_to_vmem [thread:$0]  %s981, 16, %s984, %s974
        $region68: #{tpu_custom_call.1} parent=23 // pred_fallthru
          _
        // Predicated region
        $region69: #{tpu_custom_call.1} parent=23 // pred_check
          %p987 = pneg %p385
        $region70: #{tpu_custom_call.1} parent=23 // pred_check_branch
          %989 = sbr.rel (%p987) target = $region72
        $region71: #{tpu_custom_call.1} parent=23 // pred_region
          %s990 = sand.u32 %s67, 1
          %s991 = scalar_lea.sflag [#allocation17], %s990
          %s992 = sand.u32 %s375, 1
          %s993 = scalar_lea.vmem [#allocation18], %s992
          %s995 = ssub.s32 16, 16
          %996 = vsyncadd %s991, %s995
          %s997 = smul.addr %s75, 16
          %s998 = scalar_lea.hbm %s11, %s997
          %s1000 = sshll.u32 %s993, 4
          %s1001 = int_to_ptr.vmem [resolvable:$true] %s1000
          %1003 = dma.hbm_to_vmem [thread:$0]  %s998, 16, %s1001, %s991
        $region72: #{tpu_custom_call.1} parent=23 // pred_fallthru
          _
        // Predicated region
        $region73: #{tpu_custom_call.1} parent=23 // pred_check
          %p1004 = pneg %p411
        $region74: #{tpu_custom_call.1} parent=23 // pred_check_branch
          %1006 = sbr.rel (%p1004) target = $region76
        $region75: #{tpu_custom_call.1} parent=23 // pred_region
          %p1007 = scmp.lt.s32.totalorder %s75, 1
          %s1008 = scalar_select %p1007, %s75, 1
          %s1009 = smul.addr %s1008, 4
          %s1010 = smul.addr %s1009, 4
          %s1011 = scalar_lea.vmem %s12, %s1010
        $region76: #{tpu_custom_call.1} parent=23 // pred_fallthru
          _
        // Predicated region
        $region77: #{tpu_custom_call.1} parent=23 // pred_check
          %p1012 = pneg %p437
        $region78: #{tpu_custom_call.1} parent=23 // pred_check_branch
          %1014 = sbr.rel (%p1012) target = $region80
        $region79: #{tpu_custom_call.1} parent=23 // pred_region
          %s1015 = sand.u32 %s67, 1
          %s1016 = scalar_lea.sflag [#allocation20], %s1015
          %s1017 = sand.u32 %s427, 1
          %s1018 = scalar_lea.vmem [#allocation19], %s1017
          %s1020 = ssub.s32 16, 16
          %1021 = vsyncadd %s1016, %s1020
          %s1022 = smul.addr %s75, 16
          %s1023 = scalar_lea.hbm %s13, %s1022
          %s1025 = sshll.u32 %s1018, 4
          %s1026 = int_to_ptr.vmem [resolvable:$true] %s1025
          %1028 = dma.hbm_to_vmem [thread:$0]  %s1023, 16, %s1026, %s1016
        $region80: #{tpu_custom_call.1} parent=23 // pred_fallthru
          _
        // Predicated region
        $region81: #{tpu_custom_call.1} parent=23 // pred_check
          %p1029 = pneg %p463
        $region82: #{tpu_custom_call.1} parent=23 // pred_check_branch
          %1031 = sbr.rel (%p1029) target = $region84
        $region83: #{tpu_custom_call.1} parent=23 // pred_region
          %p1032 = scmp.lt.s32.totalorder %s75, 1
          %s1033 = scalar_select %p1032, %s75, 1
          %s1034 = smul.addr %s1033, 4
          %s1035 = smul.addr %s1034, 4
          %s1036 = scalar_lea.vmem %s14, %s1035
        $region84: #{tpu_custom_call.1} parent=23 // pred_fallthru
          _
        // Predicated region
        $region85: #{tpu_custom_call.1} parent=23 // pred_check
          %p1037 = pneg %p489
        $region86: #{tpu_custom_call.1} parent=23 // pred_check_branch
          %1039 = sbr.rel (%p1037) target = $region88
        $region87: #{tpu_custom_call.1} parent=23 // pred_region
          %s1040 = sand.u32 %s67, 1
          %s1041 = scalar_lea.sflag [#allocation20], %s1040
          %s1042 = sand.u32 %s479, 1
          %s1043 = scalar_lea.vmem [#allocation21], %s1042
          %s1045 = ssub.s32 16, 16
          %1046 = vsyncadd %s1041, %s1045
          %s1047 = smul.addr %s75, 16
          %s1048 = scalar_lea.hbm %s15, %s1047
          %s1050 = sshll.u32 %s1043, 4
          %s1051 = int_to_ptr.vmem [resolvable:$true] %s1050
          %1053 = dma.hbm_to_vmem [thread:$0]  %s1048, 16, %s1051, %s1041
        $region88: #{tpu_custom_call.1} parent=23 // pred_fallthru
          _
        // Predicated region
        $region89: #{tpu_custom_call.1} parent=23 // pred_check
          %p1054 = pneg %p515
        $region90: #{tpu_custom_call.1} parent=23 // pred_check_branch
          %1056 = sbr.rel (%p1054) target = $region92
        $region91: #{tpu_custom_call.1} parent=23 // pred_region
          %s1057 = sand.u32 %s67, 1
          %s1058 = scalar_lea.sflag [#allocation23], %s1057
          %s1059 = sand.u32 %s505, 1
          %s1060 = smul.addr %s1059, 16
          %s1061 = scalar_lea.vmem [#allocation22], %s1060
          %s1063 = ssub.s32 256, 256
          %1064 = vsyncadd %s1058, %s1063
          %s1065 = smul.addr %s75, 4
          %s1066 = smul.addr %s1065, 64
          %s1067 = scalar_lea.hbm %s16, %s1066
          %s1068 = sshll.u32 %s1061, 4
          %s1069 = int_to_ptr.vmem [resolvable:$true] %s1068
          %1074 = dma.hbm_to_vmem [thread:$0]  %s1067, 256, %s1069, %s1058, 64, 64, 4
        $region92: #{tpu_custom_call.1} parent=23 // pred_fallthru
          _
        // Predicated region
        $region93: #{tpu_custom_call.1} parent=23 // pred_check
          %p1075 = pneg %p541
        $region94: #{tpu_custom_call.1} parent=23 // pred_check_branch
          %1077 = sbr.rel (%p1075) target = $region96
        $region95: #{tpu_custom_call.1} parent=23 // pred_region
          %s1078 = sand.u32 %s67, 1
          %s1079 = scalar_lea.sflag [#allocation23], %s1078
          %s1080 = sand.u32 %s531, 1
          %s1081 = scalar_lea.vmem [#allocation24], %s1080
          %s1083 = ssub.s32 16, 16
          %1084 = vsyncadd %s1079, %s1083
          %s1085 = smul.addr %s75, 16
          %s1086 = scalar_lea.hbm %s17, %s1085
          %s1088 = sshll.u32 %s1081, 4
          %s1089 = int_to_ptr.vmem [resolvable:$true] %s1088
          %1091 = dma.hbm_to_vmem [thread:$0]  %s1086, 16, %s1089, %s1079
        $region96: #{tpu_custom_call.1} parent=23 // pred_fallthru
          _
        // Predicated region
        $region97: #{tpu_custom_call.1} parent=23 // pred_check
          %p1092 = pneg %p567
        $region98: #{tpu_custom_call.1} parent=23 // pred_check_branch
          %1094 = sbr.rel (%p1092) target = $region100
        $region99: #{tpu_custom_call.1} parent=23 // pred_region
          %s1095 = sand.u32 %s67, 1
          %s1096 = scalar_lea.sflag [#allocation26], %s1095
          %s1097 = sand.u32 %s557, 1
          %s1098 = scalar_lea.vmem [#allocation25], %s1097
          %s1100 = ssub.s32 16, 16
          %1101 = vsyncadd %s1096, %s1100
          %s1102 = smul.addr %s75, 16
          %s1103 = scalar_lea.hbm %s18, %s1102
          %s1105 = sshll.u32 %s1098, 4
          %s1106 = int_to_ptr.vmem [resolvable:$true] %s1105
          %1108 = dma.hbm_to_vmem [thread:$0]  %s1103, 16, %s1106, %s1096
        $region100: #{tpu_custom_call.1} parent=23 // pred_fallthru
          _
        // Predicated region
        $region101: #{tpu_custom_call.1} parent=23 // pred_check
          %p1109 = pneg %p593
        $region102: #{tpu_custom_call.1} parent=23 // pred_check_branch
          %1111 = sbr.rel (%p1109) target = $region104
        $region103: #{tpu_custom_call.1} parent=23 // pred_region
          %s1112 = sand.u32 %s67, 1
          %s1113 = scalar_lea.sflag [#allocation26], %s1112
          %s1114 = sand.u32 %s583, 1
          %s1115 = scalar_lea.vmem [#allocation27], %s1114
          %s1117 = ssub.s32 16, 16
          %1118 = vsyncadd %s1113, %s1117
          %s1119 = smul.addr %s75, 16
          %s1120 = scalar_lea.hbm %s19, %s1119
          %s1122 = sshll.u32 %s1115, 4
          %s1123 = int_to_ptr.vmem [resolvable:$true] %s1122
          %1125 = dma.hbm_to_vmem [thread:$0]  %s1120, 16, %s1123, %s1113
        $region104: #{tpu_custom_call.1} parent=23 // pred_fallthru
          _
        // Predicated region
        $region105: #{tpu_custom_call.1} parent=23 // pred_check
          %p1126 = pneg %p619
        $region106: #{tpu_custom_call.1} parent=23 // pred_check_branch
          %1128 = sbr.rel (%p1126) target = $region108
        $region107: #{tpu_custom_call.1} parent=23 // pred_region
          %s1129 = sand.u32 %s67, 1
          %s1130 = scalar_lea.sflag [#allocation29], %s1129
          %s1131 = sand.u32 %s609, 1
          %s1132 = smul.addr %s1131, 16
          %s1133 = scalar_lea.vmem [#allocation28], %s1132
          %s1135 = ssub.s32 256, 256
          %1136 = vsyncadd %s1130, %s1135
          %s1137 = smul.addr %s75, 4
          %s1138 = smul.addr %s1137, 64
          %s1139 = scalar_lea.hbm %s20, %s1138
          %s1140 = sshll.u32 %s1133, 4
          %s1141 = int_to_ptr.vmem [resolvable:$true] %s1140
          %1146 = dma.hbm_to_vmem [thread:$0]  %s1139, 256, %s1141, %s1130, 64, 64, 4
        $region108: #{tpu_custom_call.1} parent=23 // pred_fallthru
          _
        // Predicated region
        $region109: #{tpu_custom_call.1} parent=23 // pred_check
          %p1147 = pneg %p645
        $region110: #{tpu_custom_call.1} parent=23 // pred_check_branch
          %1149 = sbr.rel (%p1147) target = $region112
        $region111: #{tpu_custom_call.1} parent=23 // pred_region
          %s1150 = sand.u32 %s67, 1
          %s1151 = scalar_lea.sflag [#allocation29], %s1150
          %s1152 = sand.u32 %s635, 1
          %s1153 = scalar_lea.vmem [#allocation30], %s1152
          %s1155 = ssub.s32 16, 16
          %1156 = vsyncadd %s1151, %s1155
          %s1157 = smul.addr %s75, 16
          %s1158 = scalar_lea.hbm %s21, %s1157
          %s1160 = sshll.u32 %s1153, 4
          %s1161 = int_to_ptr.vmem [resolvable:$true] %s1160
          %1163 = dma.hbm_to_vmem [thread:$0]  %s1158, 16, %s1161, %s1151
        $region112: #{tpu_custom_call.1} parent=23 // pred_fallthru
          _
        // Predicated region
        $region113: #{tpu_custom_call.1} parent=23 // pred_check
          %p1164 = pneg %p671
        $region114: #{tpu_custom_call.1} parent=23 // pred_check_branch
          %1166 = sbr.rel (%p1164) target = $region116
        $region115: #{tpu_custom_call.1} parent=23 // pred_region
          %p1167 = scmp.lt.s32.totalorder %s75, 1
          %s1168 = scalar_select %p1167, %s75, 1
          %s1169 = smul.addr %s1168, 8
          %s1170 = smul.addr %s1169, 4
          %s1171 = scalar_lea.vmem %s22, %s1170
        $region116: #{tpu_custom_call.1} parent=23 // pred_fallthru
          _
        // Predicated region
        $region117: #{tpu_custom_call.1} parent=23 // pred_check
          %p1172 = pneg %p697
        $region118: #{tpu_custom_call.1} parent=23 // pred_check_branch
          %1174 = sbr.rel (%p1172) target = $region120
        $region119: #{tpu_custom_call.1} parent=23 // pred_region
          %p1175 = scmp.lt.s32.totalorder %s75, 1
          %s1176 = scalar_select %p1175, %s75, 1
          %s1177 = scalar_lea.vmem %s23, %s1176
        $region120: #{tpu_custom_call.1} parent=23 // pred_fallthru
          _
      $region24: #{tpu_custom_call.1} parent=5 // pred_fallthru
        _
      %p1178 = scmp.le.s32.totalorder 1, %s67
      %p1179 = scmp.lt.s32.totalorder %s67, 5
      %p1180 = pnand %p1178, %p1179
      %p1181 = pneg %p1180
      // Predicated region
      $region121: #{tpu_custom_call.1} parent=5 // pred_check
        _
      $region122: #{tpu_custom_call.1} parent=5 // pred_check_branch
        %1183 = sbr.rel (%p1180) target = $region124
      $region123: #{tpu_custom_call.1} parent=5 // pred_region
        %s1184 = ssub.s32 %s67, 1
        %s1185 = sand.u32 %s92, 1
        %s1186 = scalar_lea.sflag [#allocation5], %s1185
        %s1187 = sand.u32 %s92, 1
        %s1188 = smul.addr %s1187, 8
        %s1189 = scalar_lea.vmem [#allocation4], %s1188
        // Predicated region
        $region125: #{tpu_custom_call.1} parent=123 // pred_check
          %p1190 = pneg %p105
        $region126: #{tpu_custom_call.1} parent=123 // pred_check_branch
          %1192 = sbr.rel (%p1190) target = $region128
        $region127: #{tpu_custom_call.1} parent=123 // pred_region
          %1193 = dma.done %s1186, 128
        $region128: #{tpu_custom_call.1} parent=123 // pred_fallthru
          _
        %s1194 = sand.u32 %s72, 1
        %s1195 = scalar_lea.sflag [#allocation8], %s1194
        %s1196 = sand.u32 %s118, 1
        %s1197 = smul.addr %s1196, 8
        %s1198 = scalar_lea.vmem [#allocation7], %s1197
        // Predicated region
        $region129: #{tpu_custom_call.1} parent=123 // pred_check
          %p1199 = pneg %p131
        $region130: #{tpu_custom_call.1} parent=123 // pred_check_branch
          %1201 = sbr.rel (%p1199) target = $region132
        $region131: #{tpu_custom_call.1} parent=123 // pred_region
          %1202 = dma.done %s1195, 128
        $region132: #{tpu_custom_call.1} parent=123 // pred_fallthru
          _
        %s1203 = sand.u32 %s72, 1
        %s1204 = scalar_lea.sflag [#allocation8], %s1203
        %s1205 = sand.u32 %s170, 1
        %s1206 = smul.addr %s1205, 8
        %s1207 = scalar_lea.vmem [#allocation9], %s1206
        // Predicated region
        $region133: #{tpu_custom_call.1} parent=123 // pred_check
          %p1208 = pneg %p183
        $region134: #{tpu_custom_call.1} parent=123 // pred_check_branch
          %1210 = sbr.rel (%p1208) target = $region136
        $region135: #{tpu_custom_call.1} parent=123 // pred_region
          %1211 = dma.done %s1204, 128
        $region136: #{tpu_custom_call.1} parent=123 // pred_fallthru
          _
        %s1212 = sand.u32 %s72, 1
        %s1213 = scalar_lea.sflag [#allocation11], %s1212
        %s1214 = sand.u32 %s196, 1
        %s1215 = scalar_lea.vmem [#allocation10], %s1214
        // Predicated region
        $region137: #{tpu_custom_call.1} parent=123 // pred_check
          %p1216 = pneg %p209
        $region138: #{tpu_custom_call.1} parent=123 // pred_check_branch
          %1218 = sbr.rel (%p1216) target = $region140
        $region139: #{tpu_custom_call.1} parent=123 // pred_region
          %1219 = dma.done %s1213, 16
        $region140: #{tpu_custom_call.1} parent=123 // pred_fallthru
          _
        %s1220 = sand.u32 %s72, 1
        %s1221 = scalar_lea.sflag [#allocation11], %s1220
        %s1222 = sand.u32 %s222, 1
        %s1223 = scalar_lea.vmem [#allocation12], %s1222
        // Predicated region
        $region141: #{tpu_custom_call.1} parent=123 // pred_check
          %p1224 = pneg %p235
        $region142: #{tpu_custom_call.1} parent=123 // pred_check_branch
          %1226 = sbr.rel (%p1224) target = $region144
        $region143: #{tpu_custom_call.1} parent=123 // pred_region
          %1227 = dma.done %s1221, 16
        $region144: #{tpu_custom_call.1} parent=123 // pred_fallthru
          _
        %s1228 = sand.u32 %s72, 1
        %s1229 = scalar_lea.sflag [#allocation14], %s1228
        %s1230 = sand.u32 %s274, 1
        %s1231 = scalar_lea.vmem [#allocation13], %s1230
        // Predicated region
        $region145: #{tpu_custom_call.1} parent=123 // pred_check
          %p1232 = pneg %p287
        $region146: #{tpu_custom_call.1} parent=123 // pred_check_branch
          %1234 = sbr.rel (%p1232) target = $region148
        $region147: #{tpu_custom_call.1} parent=123 // pred_region
          %1235 = dma.done %s1229, 16
        $region148: #{tpu_custom_call.1} parent=123 // pred_fallthru
          _
        %s1236 = sand.u32 %s72, 1
        %s1237 = scalar_lea.sflag [#allocation14], %s1236
        %s1238 = sand.u32 %s326, 1
        %s1239 = scalar_lea.vmem [#allocation15], %s1238
        // Predicated region
        $region149: #{tpu_custom_call.1} parent=123 // pred_check
          %p1240 = pneg %p339
        $region150: #{tpu_custom_call.1} parent=123 // pred_check_branch
          %1242 = sbr.rel (%p1240) target = $region152
        $region151: #{tpu_custom_call.1} parent=123 // pred_region
          %1243 = dma.done %s1237, 16
        $region152: #{tpu_custom_call.1} parent=123 // pred_fallthru
          _
        %s1244 = sand.u32 %s72, 1
        %s1245 = scalar_lea.sflag [#allocation17], %s1244
        %s1246 = sand.u32 %s352, 1
        %s1247 = scalar_lea.vmem [#allocation16], %s1246
        // Predicated region
        $region153: #{tpu_custom_call.1} parent=123 // pred_check
          %p1248 = pneg %p365
        $region154: #{tpu_custom_call.1} parent=123 // pred_check_branch
          %1250 = sbr.rel (%p1248) target = $region156
        $region155: #{tpu_custom_call.1} parent=123 // pred_region
          %1251 = dma.done %s1245, 16
        $region156: #{tpu_custom_call.1} parent=123 // pred_fallthru
          _
        %s1252 = sand.u32 %s72, 1
        %s1253 = scalar_lea.sflag [#allocation17], %s1252
        %s1254 = sand.u32 %s378, 1
        %s1255 = scalar_lea.vmem [#allocation18], %s1254
        // Predicated region
        $region157: #{tpu_custom_call.1} parent=123 // pred_check
          %p1256 = pneg %p391
        $region158: #{tpu_custom_call.1} parent=123 // pred_check_branch
          %1258 = sbr.rel (%p1256) target = $region160
        $region159: #{tpu_custom_call.1} parent=123 // pred_region
          %1259 = dma.done %s1253, 16
        $region160: #{tpu_custom_call.1} parent=123 // pred_fallthru
          _
        %s1260 = sand.u32 %s72, 1
        %s1261 = scalar_lea.sflag [#allocation20], %s1260
        %s1262 = sand.u32 %s430, 1
        %s1263 = scalar_lea.vmem [#allocation19], %s1262
        // Predicated region
        $region161: #{tpu_custom_call.1} parent=123 // pred_check
          %p1264 = pneg %p443
        $region162: #{tpu_custom_call.1} parent=123 // pred_check_branch
          %1266 = sbr.rel (%p1264) target = $region164
        $region163: #{tpu_custom_call.1} parent=123 // pred_region
          %1267 = dma.done %s1261, 16
        $region164: #{tpu_custom_call.1} parent=123 // pred_fallthru
          _
        %s1268 = sand.u32 %s72, 1
        %s1269 = scalar_lea.sflag [#allocation20], %s1268
        %s1270 = sand.u32 %s482, 1
        %s1271 = scalar_lea.vmem [#allocation21], %s1270
        // Predicated region
        $region165: #{tpu_custom_call.1} parent=123 // pred_check
          %p1272 = pneg %p495
        $region166: #{tpu_custom_call.1} parent=123 // pred_check_branch
          %1274 = sbr.rel (%p1272) target = $region168
        $region167: #{tpu_custom_call.1} parent=123 // pred_region
          %1275 = dma.done %s1269, 16
        $region168: #{tpu_custom_call.1} parent=123 // pred_fallthru
          _
        %s1276 = sand.u32 %s72, 1
        %s1277 = scalar_lea.sflag [#allocation23], %s1276
        %s1278 = sand.u32 %s508, 1
        %s1279 = smul.addr %s1278, 16
        %s1280 = scalar_lea.vmem [#allocation22], %s1279
        // Predicated region
        $region169: #{tpu_custom_call.1} parent=123 // pred_check
          %p1281 = pneg %p521
        $region170: #{tpu_custom_call.1} parent=123 // pred_check_branch
          %1283 = sbr.rel (%p1281) target = $region172
        $region171: #{tpu_custom_call.1} parent=123 // pred_region
          %1284 = dma.done %s1277, 256
        $region172: #{tpu_custom_call.1} parent=123 // pred_fallthru
          _
        %s1285 = sand.u32 %s72, 1
        %s1286 = scalar_lea.sflag [#allocation23], %s1285
        %s1287 = sand.u32 %s534, 1
        %s1288 = scalar_lea.vmem [#allocation24], %s1287
        // Predicated region
        $region173: #{tpu_custom_call.1} parent=123 // pred_check
          %p1289 = pneg %p547
        $region174: #{tpu_custom_call.1} parent=123 // pred_check_branch
          %1291 = sbr.rel (%p1289) target = $region176
        $region175: #{tpu_custom_call.1} parent=123 // pred_region
          %1292 = dma.done %s1286, 16
        $region176: #{tpu_custom_call.1} parent=123 // pred_fallthru
          _
        %s1293 = sand.u32 %s72, 1
        %s1294 = scalar_lea.sflag [#allocation26], %s1293
        %s1295 = sand.u32 %s560, 1
        %s1296 = scalar_lea.vmem [#allocation25], %s1295
        // Predicated region
        $region177: #{tpu_custom_call.1} parent=123 // pred_check
          %p1297 = pneg %p573
        $region178: #{tpu_custom_call.1} parent=123 // pred_check_branch
          %1299 = sbr.rel (%p1297) target = $region180
        $region179: #{tpu_custom_call.1} parent=123 // pred_region
          %1300 = dma.done %s1294, 16
        $region180: #{tpu_custom_call.1} parent=123 // pred_fallthru
          _
        %s1301 = sand.u32 %s72, 1
        %s1302 = scalar_lea.sflag [#allocation26], %s1301
        %s1303 = sand.u32 %s586, 1
        %s1304 = scalar_lea.vmem [#allocation27], %s1303
        // Predicated region
        $region181: #{tpu_custom_call.1} parent=123 // pred_check
          %p1305 = pneg %p599
        $region182: #{tpu_custom_call.1} parent=123 // pred_check_branch
          %1307 = sbr.rel (%p1305) target = $region184
        $region183: #{tpu_custom_call.1} parent=123 // pred_region
          %1308 = dma.done %s1302, 16
        $region184: #{tpu_custom_call.1} parent=123 // pred_fallthru
          _
        %s1309 = sand.u32 %s72, 1
        %s1310 = scalar_lea.sflag [#allocation29], %s1309
        %s1311 = sand.u32 %s612, 1
        %s1312 = smul.addr %s1311, 16
        %s1313 = scalar_lea.vmem [#allocation28], %s1312
        // Predicated region
        $region185: #{tpu_custom_call.1} parent=123 // pred_check
          %p1314 = pneg %p625
        $region186: #{tpu_custom_call.1} parent=123 // pred_check_branch
          %1316 = sbr.rel (%p1314) target = $region188
        $region187: #{tpu_custom_call.1} parent=123 // pred_region
          %1317 = dma.done %s1310, 256
        $region188: #{tpu_custom_call.1} parent=123 // pred_fallthru
          _
        %s1318 = sand.u32 %s72, 1
        %s1319 = scalar_lea.sflag [#allocation29], %s1318
        %s1320 = sand.u32 %s638, 1
        %s1321 = scalar_lea.vmem [#allocation30], %s1320
        // Predicated region
        $region189: #{tpu_custom_call.1} parent=123 // pred_check
          %p1322 = pneg %p651
        $region190: #{tpu_custom_call.1} parent=123 // pred_check_branch
          %1324 = sbr.rel (%p1322) target = $region192
        $region191: #{tpu_custom_call.1} parent=123 // pred_region
          %1325 = dma.done %s1319, 16
        $region192: #{tpu_custom_call.1} parent=123 // pred_fallthru
          _
        %s1326 = sand.u32 %s92, 1
        %s1327 = scalar_lea.sflag [#allocation5], %s1326
        %s1328 = sand.u32 %s92, 1
        %s1329 = smul.addr %s1328, 8
        %s1330 = scalar_lea.vmem [#allocation4], %s1329
        %p1331 = pneg %p105
        %p1332 = pneg %p102
        %s1333 = sand.u32 %s72, 1
        %s1334 = scalar_lea.sflag [#allocation8], %s1333
        %s1335 = sand.u32 %s118, 1
        %s1336 = smul.addr %s1335, 8
        %s1337 = scalar_lea.vmem [#allocation7], %s1336
        %p1338 = pneg %p131
        %p1339 = pneg %p128
        %p1340 = scmp.lt.s32.totalorder %s76, 1
        %s1341 = scalar_select %p1340, %s76, 1
        %s1342 = smul.addr %s1341, 8
        %s1343 = scalar_lea.vmem %s2, %s1342
        %p1344 = pneg %p157
        %p1345 = pneg %p154
        %s1346 = sand.u32 %s72, 1
        %s1347 = scalar_lea.sflag [#allocation8], %s1346
        %s1348 = sand.u32 %s170, 1
        %s1349 = smul.addr %s1348, 8
        %s1350 = scalar_lea.vmem [#allocation9], %s1349
        %p1351 = pneg %p183
        %p1352 = pneg %p180
        %s1353 = sand.u32 %s72, 1
        %s1354 = scalar_lea.sflag [#allocation11], %s1353
        %s1355 = sand.u32 %s196, 1
        %s1356 = scalar_lea.vmem [#allocation10], %s1355
        %p1357 = pneg %p209
        %p1358 = pneg %p206
        %s1359 = sand.u32 %s72, 1
        %s1360 = scalar_lea.sflag [#allocation11], %s1359
        %s1361 = sand.u32 %s222, 1
        %s1362 = scalar_lea.vmem [#allocation12], %s1361
        %p1363 = pneg %p235
        %p1364 = pneg %p232
        %p1365 = scmp.lt.s32.totalorder %s77, 1
        %s1366 = scalar_select %p1365, %s77, 1
        %s1367 = smul.addr %s1366, 4
        %s1368 = smul.addr %s1367, 4
        %s1369 = scalar_lea.vmem %s6, %s1368
        %p1370 = pneg %p261
        %p1371 = pneg %p258
        %s1372 = sand.u32 %s72, 1
        %s1373 = scalar_lea.sflag [#allocation14], %s1372
        %s1374 = sand.u32 %s274, 1
        %s1375 = scalar_lea.vmem [#allocation13], %s1374
        %p1376 = pneg %p287
        %p1377 = pneg %p284
        %p1378 = scmp.lt.s32.totalorder %s77, 1
        %s1379 = scalar_select %p1378, %s77, 1
        %s1380 = smul.addr %s1379, 4
        %s1381 = smul.addr %s1380, 4
        %s1382 = scalar_lea.vmem %s8, %s1381
        %p1383 = pneg %p313
        %p1384 = pneg %p310
        %s1385 = sand.u32 %s72, 1
        %s1386 = scalar_lea.sflag [#allocation14], %s1385
        %s1387 = sand.u32 %s326, 1
        %s1388 = scalar_lea.vmem [#allocation15], %s1387
        %p1389 = pneg %p339
        %p1390 = pneg %p336
        %s1391 = sand.u32 %s72, 1
        %s1392 = scalar_lea.sflag [#allocation17], %s1391
        %s1393 = sand.u32 %s352, 1
        %s1394 = scalar_lea.vmem [#allocation16], %s1393
        %p1395 = pneg %p365
        %p1396 = pneg %p362
        %s1397 = sand.u32 %s72, 1
        %s1398 = scalar_lea.sflag [#allocation17], %s1397
        %s1399 = sand.u32 %s378, 1
        %s1400 = scalar_lea.vmem [#allocation18], %s1399
        %p1401 = pneg %p391
        %p1402 = pneg %p388
        %p1403 = scmp.lt.s32.totalorder %s77, 1
        %s1404 = scalar_select %p1403, %s77, 1
        %s1405 = smul.addr %s1404, 4
        %s1406 = smul.addr %s1405, 4
        %s1407 = scalar_lea.vmem %s12, %s1406
        %p1408 = pneg %p417
        %p1409 = pneg %p414
        %s1410 = sand.u32 %s72, 1
        %s1411 = scalar_lea.sflag [#allocation20], %s1410
        %s1412 = sand.u32 %s430, 1
        %s1413 = scalar_lea.vmem [#allocation19], %s1412
        %p1414 = pneg %p443
        %p1415 = pneg %p440
        %p1416 = scmp.lt.s32.totalorder %s77, 1
        %s1417 = scalar_select %p1416, %s77, 1
        %s1418 = smul.addr %s1417, 4
        %s1419 = smul.addr %s1418, 4
        %s1420 = scalar_lea.vmem %s14, %s1419
        %p1421 = pneg %p469
        %p1422 = pneg %p466
        %s1423 = sand.u32 %s72, 1
        %s1424 = scalar_lea.sflag [#allocation20], %s1423
        %s1425 = sand.u32 %s482, 1
        %s1426 = scalar_lea.vmem [#allocation21], %s1425
        %p1427 = pneg %p495
        %p1428 = pneg %p492
        %s1429 = sand.u32 %s72, 1
        %s1430 = scalar_lea.sflag [#allocation23], %s1429
        %s1431 = sand.u32 %s508, 1
        %s1432 = smul.addr %s1431, 16
        %s1433 = scalar_lea.vmem [#allocation22], %s1432
        %p1434 = pneg %p521
        %p1435 = pneg %p518
        %s1436 = sand.u32 %s72, 1
        %s1437 = scalar_lea.sflag [#allocation23], %s1436
        %s1438 = sand.u32 %s534, 1
        %s1439 = scalar_lea.vmem [#allocation24], %s1438
        %p1440 = pneg %p547
        %p1441 = pneg %p544
        %s1442 = sand.u32 %s72, 1
        %s1443 = scalar_lea.sflag [#allocation26], %s1442
        %s1444 = sand.u32 %s560, 1
        %s1445 = scalar_lea.vmem [#allocation25], %s1444
        %p1446 = pneg %p573
        %p1447 = pneg %p570
        %s1448 = sand.u32 %s72, 1
        %s1449 = scalar_lea.sflag [#allocation26], %s1448
        %s1450 = sand.u32 %s586, 1
        %s1451 = scalar_lea.vmem [#allocation27], %s1450
        %p1452 = pneg %p599
        %p1453 = pneg %p596
        %s1454 = sand.u32 %s72, 1
        %s1455 = scalar_lea.sflag [#allocation29], %s1454
        %s1456 = sand.u32 %s612, 1
        %s1457 = smul.addr %s1456, 16
        %s1458 = scalar_lea.vmem [#allocation28], %s1457
        %p1459 = pneg %p625
        %p1460 = pneg %p622
        %s1461 = sand.u32 %s72, 1
        %s1462 = scalar_lea.sflag [#allocation29], %s1461
        %s1463 = sand.u32 %s638, 1
        %s1464 = scalar_lea.vmem [#allocation30], %s1463
        %p1465 = pneg %p651
        %p1466 = pneg %p648
        %p1467 = scmp.lt.s32.totalorder %s77, 1
        %s1468 = scalar_select %p1467, %s77, 1
        %s1469 = smul.addr %s1468, 8
        %s1470 = smul.addr %s1469, 4
        %s1471 = scalar_lea.vmem %s22, %s1470
        %p1472 = pneg %p677
        %p1473 = pneg %p674
        %p1474 = scmp.lt.s32.totalorder %s77, 1
        %s1475 = scalar_select %p1474, %s77, 1
        %s1476 = scalar_lea.vmem %s23, %s1475
        %p1477 = pneg %p703
        %p1478 = pneg %p700
        %p1479 = pneg %p724
        %p1480 = pneg %p721
        %p1481 = pneg %p745
        %p1482 = pneg %p742
        %p1483 = pneg %p771
        %p1484 = pneg %p768
        %s1485 = sand.u32 %s758, 1
        %s1486 = scalar_lea.sflag [#allocation6], %s1485
        %s1487 = sand.u32 %s758, 1
        %s1488 = smul.addr %s1487, 8
        %s1489 = scalar_lea.vmem [#allocation31], %s1488
        %p1490 = pneg %p797
        %p1491 = pneg %p794
        %s1492 = sand.u32 %s784, 1
        %s1493 = scalar_lea.sflag [#allocation33], %s1492
        %s1494 = sand.u32 %s784, 1
        %s1495 = smul.addr %s1494, 32
        %s1496 = scalar_lea.vmem [#allocation32], %s1495
        %s1497 = smul.u32 2, %s76
        %p1498 = scmp.lt.s32.totalorder %s76, 1
        %s1499 = scalar_select %p1498, %s76, 1
        %s1500 = smul.addr %s1499, 8
        %s1501 = scalar_lea.vmem %s2, %s1500
        %p1502 = scmp.lt.s32.totalorder %s77, 1
        %s1503 = scalar_select %p1502, %s77, 1
        %s1504 = smul.addr %s1503, 4
        %s1505 = smul.addr %s1504, 4
        %s1506 = scalar_lea.vmem %s6, %s1505
        %p1507 = scmp.lt.s32.totalorder %s77, 1
        %s1508 = scalar_select %p1507, %s77, 1
        %s1509 = smul.addr %s1508, 4
        %s1510 = smul.addr %s1509, 4
        %s1511 = scalar_lea.vmem %s8, %s1510
        %p1512 = scmp.lt.s32.totalorder %s77, 1
        %s1513 = scalar_select %p1512, %s77, 1
        %s1514 = smul.addr %s1513, 4
        %s1515 = smul.addr %s1514, 4
        %s1516 = scalar_lea.vmem %s12, %s1515
        %p1517 = scmp.lt.s32.totalorder %s77, 1
        %s1518 = scalar_select %p1517, %s77, 1
        %s1519 = smul.addr %s1518, 4
        %s1520 = smul.addr %s1519, 4
        %s1521 = scalar_lea.vmem %s14, %s1520
        %p1522 = scmp.lt.s32.totalorder %s77, 1
        %s1523 = scalar_select %p1522, %s77, 1
        %s1524 = smul.addr %s1523, 8
        %s1525 = smul.addr %s1524, 4
        %s1526 = scalar_lea.vmem %s22, %s1525
        %p1527 = scmp.lt.s32.totalorder %s77, 1
        %s1528 = scalar_select %p1527, %s77, 1
        %s1529 = scalar_lea.vmem %s23, %s1528
        %p1531 = scmp.eq.s32.totalorder %s77, 0
        // Predicated region
        $region193: #{tpu_custom_call.1} parent=123 // pred_check
          %p1532 = pneg %p1531
        $region194: #{tpu_custom_call.1} parent=123 // pred_check_branch
          %1534 = sbr.rel (%p1532) target = $region196
        $region195: #{tpu_custom_call.1} parent=123 // pred_region
          %v1535 = vld [vmem:[%s1189] sm:$0xff]
          %vm1536 = vcmask 261120
          %1537 = vst.msk [vmem:[#allocation2] sm:$0xff] %vm1536, %v1535
        $region196: #{tpu_custom_call.1} parent=123 // pred_fallthru
          _
        %v1538 = vld [vmem:[#allocation2] sm:$0xff]
        %v1539 = vld [vmem:[%s1215] sm:$0x1]
        %v1540 = vld [vmem:[%s1223] sm:$0x1]
        %vm1541 = vcmask 261120
        %v1542 = vsel %vm1541, %v1538, 0.0
        %1543 = vadd.xlane.f32.xlu0 %v1542
        %v1544 = vpop.xlane.xlu0 %1543
        %v1545 = vrcp.pop 32.0
        %v1546 = vmul.f32 %v1544, %v1545
        %v1547 = vmul.f32 %v1538, %v1538
        %v1548 = vsel %vm1541, %v1547, 0.0
        %1549 = vadd.xlane.f32.xlu0 %v1548
        %v1550 = vpop.xlane.xlu0 %1549
        %v1551 = vmul.f32 %v1550, %v1545
        %v1552 = vmul.f32 %v1546, %v1546
        %v1553 = vsub.f32 %v1551, %v1552
        %v1554 = vsub.f32 %v1538, %v1546
        %v1555 = vadd.f32 %v1553, 1e-05
        %v1556 = vrsqrt.pop %v1555
        %v1557 = vmul.f32 %v1554, %v1556
        %v1559 = vlaneseq
        %v1560 = vshrl.u32 %v1559, 7
        %v1561 = vsub.s32 0, %v1560
        %v1562 = vrot.slane %v1539, %v1561
        %v1564 = vmul.f32 %v1557, %v1562
        %v1566 = vlaneseq
        %v1567 = vshrl.u32 %v1566, 7
        %v1568 = vsub.s32 0, %v1567
        %v1569 = vrot.slane %v1540, %v1568
        %v1571 = vadd.f32 %v1564, %v1569
        %v1572 = vpack.c.bf16 %v1571, %v1571
        %v1573 = vld [vmem:[%s1506] sm:$0xf]
        %v1574 = vld [vmem:[%s1506 + $0x4] sm:$0xf]
        %v1575 = vld [vmem:[%s1506 + $0x8] sm:$0xf]
        %v1576 = vld [vmem:[%s1506 + $0xc] sm:$0xf]
        %v1577 = vld [vmem:[%s1231] sm:$0x1]
        %v1579 = vlaneseq
        %v1580 = vshrl.u32 %v1579, 7
        %v1581 = vsub.s32 0, %v1580
        %v1582 = vrot.slane %v1577, %v1581
        %v1588 = vunpack.c.l.b16 %v1573
        %v1589 = vunpack.c.l.b16 %v1574
        %v1590 = vunpack.c.l.b16 %v1575
        %v1591 = vunpack.c.l.b16 %v1576
        %v1592 = vpack.c.b16 %v1589, %v1588
        %v1593 = vpack.c.b16 %v1591, %v1590
        %v1597 = vsel %vm1541, %v1572, 0
        %1599 = vmatprep.subr.bf16.mxu0 0
        %1600 = vmatpush1.bf16.msra.mxu0 0
        %1601 = vmatprep.subr.bf16.mxu0 0
        %1602 = vmatpush1.bf16.msra.mxu0 0
        %1603 = vmatprep.subr.bf16.mxu0 0
        %1604 = vmatpush1.bf16.msra.mxu0 0
        %1605 = vmatprep.subr.bf16.mxu0 0
        %1606 = vmatpush1.bf16.msra.mxu0 0
        %1607 = vmatprep.subr.bf16.mxu0 0
        %1608 = vmatpush1.bf16.msra.mxu0 0
        %1609 = vmatprep.subr.bf16.mxu0 0
        %1610 = vmatpush1.bf16.msra.mxu0 0
        %1611 = vmatprep.subr.bf16.mxu0 0
        %1612 = vmatpush1.bf16.msra.mxu0 %v1593
        %1613 = vmatprep.subr.bf16.mxu0 0
        %1614 = vmatpush1.bf16.msra.mxu0 %v1592
        %1615 = vmatprep.subr.bf16.mxu0 0
        %1616 = vmatpush2.bf16.msra.mxu0 0
        %1617 = vmatprep.subr.bf16.mxu0 0
        %1618 = vmatpush2.bf16.msra.mxu0 0
        %1619 = vmatprep.subr.bf16.mxu0 0
        %1620 = vmatpush2.bf16.msra.mxu0 0
        %1621 = vmatprep.subr.bf16.mxu0 0
        %1622 = vmatpush2.bf16.msra.mxu0 0
        %1623 = vmatprep.subr.bf16.mxu0 0
        %1624 = vmatpush2.bf16.msra.mxu0 0
        %1625 = vmatprep.subr.bf16.mxu0 0
        %1626 = vmatpush2.bf16.msra.mxu0 0
        %1627 = vmatprep.subr.bf16.mxu0 0
        %1628 = vmatpush2.bf16.msra.mxu0 0
        %1629 = vmatprep.subr.bf16.mxu0 0
        %1630 = vmatpush2.bf16.msra.mxu0 0
        %1631 = vmatprep.mubr.bf16.mxu0 0
        %1632 = vmatmul.mubr.bf16.gmra.mxu0 %v1597
        %v1633 = vpop.f32.mrf.mxu0
        %v1634 = vadd.f32 %v1582, %v1633
        %v1635 = vpop.f32.mrf.mxu0
        %v1636 = vpop.f32.mrf.mxu0
        %v1637 = vpop.f32.mrf.mxu0
        %1638 = vdwg.mxu0
        %v1639 = vld [vmem:[%s1501] sm:$0xff]
        %v1640 = vpack.c.bf16 %v1634, %v1634
        %1642 = vrot.lane.b32.xlu0 %v1640, 96
        %v1643 = vpop.permute.xlu0 %1642
        %vm1644 = vcmask 64512
        %v1646 = vsel %vm1644, %v1640, 0
        %v1649 = vsel %vm1644, %v1643, 0
        %1651 = vmatprep.subr.bf16.mxu0 0
        %1652 = vmatpush1.bf16.xpose.msra.mxu0 0
        %1653 = vmatprep.subr.bf16.mxu0 0
        %1654 = vmatpush1.bf16.xpose.msra.mxu0 0
        %1655 = vmatprep.subr.bf16.mxu0 0
        %1656 = vmatpush1.bf16.xpose.msra.mxu0 0
        %1657 = vmatprep.subr.bf16.mxu0 0
        %1658 = vmatpush1.bf16.xpose.msra.mxu0 0
        %1659 = vmatprep.subr.bf16.mxu0 0
        %1660 = vmatpush1.bf16.xpose.msra.mxu0 0
        %1661 = vmatprep.subr.bf16.mxu0 0
        %1662 = vmatpush1.bf16.xpose.msra.mxu0 0
        %1663 = vmatprep.subr.bf16.mxu0 0
        %1664 = vmatpush1.bf16.xpose.msra.mxu0 0
        %1665 = vmatprep.subr.bf16.mxu0 0
        %1666 = vmatpush1.bf16.xpose.msra.mxu0 %v1649
        %1667 = vmatprep.subr.bf16.mxu0 0
        %1668 = vmatpush2.bf16.xpose.msra.mxu0 0
        %1669 = vmatprep.subr.bf16.mxu0 0
        %1670 = vmatpush2.bf16.xpose.msra.mxu0 0
        %1671 = vmatprep.subr.bf16.mxu0 0
        %1672 = vmatpush2.bf16.xpose.msra.mxu0 0
        %1673 = vmatprep.subr.bf16.mxu0 0
        %1674 = vmatpush2.bf16.xpose.msra.mxu0 0
        %1675 = vmatprep.subr.bf16.mxu0 0
        %1676 = vmatpush2.bf16.xpose.msra.mxu0 0
        %1677 = vmatprep.subr.bf16.mxu0 0
        %1678 = vmatpush2.bf16.xpose.msra.mxu0 0
        %1679 = vmatprep.subr.bf16.mxu0 0
        %1680 = vmatpush2.bf16.xpose.msra.mxu0 0
        %1681 = vmatprep.subr.bf16.mxu0 0
        %1682 = vmatpush2.bf16.xpose.msra.mxu0 0
        %1683 = vmatprep.mubr.bf16.mxu0 0
        %1684 = vmatmul.mubr.bf16.gmra.mxu0 %v1646
        %v1685 = vpop.f32.mrf.mxu0
        %v1686 = vadd.f32 0.0, %v1685
        %v1687 = vpop.f32.mrf.mxu0
        %v1688 = vpop.f32.mrf.mxu0
        %v1689 = vpop.f32.mrf.mxu0
        %1690 = vdwg.mxu0
        %v1691 = vmul.f32 %v1686, 0.35355338
        %v1692 = vadd.f32 %v1691, %v1639
        %v1693 = vsel %vm1644, %v1692, -inf
        %1694 = vmax.xlane.f32.xlu0 %v1693
        %v1695 = vpop.xlane.xlu0 %1694
        %v1696 = vsub.f32 %v1692, %v1695
        %v1697 = vmul.f32 %v1696, 1.442695
        %v1698 = vpow.pop %v1697
        %v1699 = vsel %vm1644, %v1698, 0.0
        %1700 = vadd.xlane.f32.xlu0 %v1699
        %v1701 = vpop.xlane.xlu0 %1700
        %v1702 = vrcp.pop %v1701
        %v1703 = vmul.f32 %v1698, %v1702
        %v1704 = vpack.c.bf16 %v1703, %v1703
        %1705 = vrot.lane.b32.xlu0 %v1640, 64
        %v1706 = vpop.permute.xlu0 %1705
        %v1708 = vsel %vm1644, %v1704, 0
        %vm1710 = vcmask 1043456
        %v1712 = vsel %vm1710, %v1706, 0
        %1714 = vmatprep.subr.bf16.mxu0 0
        %1715 = vmatpush1.bf16.msra.mxu0 0
        %1716 = vmatprep.subr.bf16.mxu0 0
        %1717 = vmatpush1.bf16.msra.mxu0 0
        %1718 = vmatprep.subr.bf16.mxu0 0
        %1719 = vmatpush1.bf16.msra.mxu0 0
        %1720 = vmatprep.subr.bf16.mxu0 0
        %1721 = vmatpush1.bf16.msra.mxu0 0
        %1722 = vmatprep.subr.bf16.mxu0 0
        %1723 = vmatpush1.bf16.msra.mxu0 0
        %1724 = vmatprep.subr.bf16.mxu0 0
        %1725 = vmatpush1.bf16.msra.mxu0 0
        %1726 = vmatprep.subr.bf16.mxu0 0
        %1727 = vmatpush1.bf16.msra.mxu0 0
        %1728 = vmatprep.subr.bf16.mxu0 0
        %1729 = vmatpush1.bf16.msra.mxu0 %v1712
        %1730 = vmatprep.subr.bf16.mxu0 0
        %1731 = vmatpush2.bf16.msra.mxu0 0
        %1732 = vmatprep.subr.bf16.mxu0 0
        %1733 = vmatpush2.bf16.msra.mxu0 0
        %1734 = vmatprep.subr.bf16.mxu0 0
        %1735 = vmatpush2.bf16.msra.mxu0 0
        %1736 = vmatprep.subr.bf16.mxu0 0
        %1737 = vmatpush2.bf16.msra.mxu0 0
        %1738 = vmatprep.subr.bf16.mxu0 0
        %1739 = vmatpush2.bf16.msra.mxu0 0
        %1740 = vmatprep.subr.bf16.mxu0 0
        %1741 = vmatpush2.bf16.msra.mxu0 0
        %1742 = vmatprep.subr.bf16.mxu0 0
        %1743 = vmatpush2.bf16.msra.mxu0 0
        %1744 = vmatprep.subr.bf16.mxu0 0
        %1745 = vmatpush2.bf16.msra.mxu0 0
        %1746 = vmatprep.mubr.bf16.mxu0 0
        %1747 = vmatmul.mubr.bf16.gmra.mxu0 %v1708
        %v1748 = vpop.f32.mrf.mxu0
        %v1749 = vadd.f32 0.0, %v1748
        %v1750 = vpop.f32.mrf.mxu0
        %v1751 = vpop.f32.mrf.mxu0
        %v1752 = vpop.f32.mrf.mxu0
        %1753 = vdwg.mxu0
        %1754 = vst.msk [vmem:[#allocation3] sm:$0xff] %vm1644, %v1749
        %1755 = vrot.lane.b32.xlu0 %v1640, 120
        %v1756 = vpop.permute.xlu0 %1755
        %1757 = vrot.lane.b32.xlu0 %v1640, 88
        %v1758 = vpop.permute.xlu0 %1757
        %v1760 = vsel %vm1644, %v1756, 0
        %v1763 = vsel %vm1644, %v1758, 0
        %1765 = vmatprep.subr.bf16.mxu0 0
        %1766 = vmatpush1.bf16.xpose.msra.mxu0 0
        %1767 = vmatprep.subr.bf16.mxu0 0
        %1768 = vmatpush1.bf16.xpose.msra.mxu0 0
        %1769 = vmatprep.subr.bf16.mxu0 0
        %1770 = vmatpush1.bf16.xpose.msra.mxu0 0
        %1771 = vmatprep.subr.bf16.mxu0 0
        %1772 = vmatpush1.bf16.xpose.msra.mxu0 0
        %1773 = vmatprep.subr.bf16.mxu0 0
        %1774 = vmatpush1.bf16.xpose.msra.mxu0 0
        %1775 = vmatprep.subr.bf16.mxu0 0
        %1776 = vmatpush1.bf16.xpose.msra.mxu0 0
        %1777 = vmatprep.subr.bf16.mxu0 0
        %1778 = vmatpush1.bf16.xpose.msra.mxu0 0
        %1779 = vmatprep.subr.bf16.mxu0 0
        %1780 = vmatpush1.bf16.xpose.msra.mxu0 %v1763
        %1781 = vmatprep.subr.bf16.mxu0 0
        %1782 = vmatpush2.bf16.xpose.msra.mxu0 0
        %1783 = vmatprep.subr.bf16.mxu0 0
        %1784 = vmatpush2.bf16.xpose.msra.mxu0 0
        %1785 = vmatprep.subr.bf16.mxu0 0
        %1786 = vmatpush2.bf16.xpose.msra.mxu0 0
        %1787 = vmatprep.subr.bf16.mxu0 0
        %1788 = vmatpush2.bf16.xpose.msra.mxu0 0
        %1789 = vmatprep.subr.bf16.mxu0 0
        %1790 = vmatpush2.bf16.xpose.msra.mxu0 0
        %1791 = vmatprep.subr.bf16.mxu0 0
        %1792 = vmatpush2.bf16.xpose.msra.mxu0 0
        %1793 = vmatprep.subr.bf16.mxu0 0
        %1794 = vmatpush2.bf16.xpose.msra.mxu0 0
        %1795 = vmatprep.subr.bf16.mxu0 0
        %1796 = vmatpush2.bf16.xpose.msra.mxu0 0
        %1797 = vmatprep.mubr.bf16.mxu0 0
        %1798 = vmatmul.mubr.bf16.gmra.mxu0 %v1760
        %v1799 = vpop.f32.mrf.mxu0
        %v1800 = vadd.f32 0.0, %v1799
        %v1801 = vpop.f32.mrf.mxu0
        %v1802 = vpop.f32.mrf.mxu0
        %v1803 = vpop.f32.mrf.mxu0
        %1804 = vdwg.mxu0
        %v1805 = vmul.f32 %v1800, 0.35355338
        %v1806 = vadd.f32 %v1805, %v1639
        %v1807 = vsel %vm1644, %v1806, -inf
        %1808 = vmax.xlane.f32.xlu0 %v1807
        %v1809 = vpop.xlane.xlu0 %1808
        %v1810 = vsub.f32 %v1806, %v1809
        %v1811 = vmul.f32 %v1810, 1.442695
        %v1812 = vpow.pop %v1811
        %v1813 = vsel %vm1644, %v1812, 0.0
        %1814 = vadd.xlane.f32.xlu0 %v1813
        %v1815 = vpop.xlane.xlu0 %1814
        %v1816 = vrcp.pop %v1815
        %v1817 = vmul.f32 %v1812, %v1816
        %v1818 = vpack.c.bf16 %v1817, %v1817
        %1819 = vrot.lane.b32.xlu0 %v1640, 56
        %v1820 = vpop.permute.xlu0 %1819
        %v1822 = vsel %vm1644, %v1818, 0
        %v1825 = vsel %vm1710, %v1820, 0
        %1827 = vmatprep.subr.bf16.mxu0 0
        %1828 = vmatpush1.bf16.msra.mxu0 0
        %1829 = vmatprep.subr.bf16.mxu0 0
        %1830 = vmatpush1.bf16.msra.mxu0 0
        %1831 = vmatprep.subr.bf16.mxu0 0
        %1832 = vmatpush1.bf16.msra.mxu0 0
        %1833 = vmatprep.subr.bf16.mxu0 0
        %1834 = vmatpush1.bf16.msra.mxu0 0
        %1835 = vmatprep.subr.bf16.mxu0 0
        %1836 = vmatpush1.bf16.msra.mxu0 0
        %1837 = vmatprep.subr.bf16.mxu0 0
        %1838 = vmatpush1.bf16.msra.mxu0 0
        %1839 = vmatprep.subr.bf16.mxu0 0
        %1840 = vmatpush1.bf16.msra.mxu0 0
        %1841 = vmatprep.subr.bf16.mxu0 0
        %1842 = vmatpush1.bf16.msra.mxu0 %v1825
        %1843 = vmatprep.subr.bf16.mxu0 0
        %1844 = vmatpush2.bf16.msra.mxu0 0
        %1845 = vmatprep.subr.bf16.mxu0 0
        %1846 = vmatpush2.bf16.msra.mxu0 0
        %1847 = vmatprep.subr.bf16.mxu0 0
        %1848 = vmatpush2.bf16.msra.mxu0 0
        %1849 = vmatprep.subr.bf16.mxu0 0
        %1850 = vmatpush2.bf16.msra.mxu0 0
        %1851 = vmatprep.subr.bf16.mxu0 0
        %1852 = vmatpush2.bf16.msra.mxu0 0
        %1853 = vmatprep.subr.bf16.mxu0 0
        %1854 = vmatpush2.bf16.msra.mxu0 0
        %1855 = vmatprep.subr.bf16.mxu0 0
        %1856 = vmatpush2.bf16.msra.mxu0 0
        %1857 = vmatprep.subr.bf16.mxu0 0
        %1858 = vmatpush2.bf16.msra.mxu0 0
        %1859 = vmatprep.mubr.bf16.mxu0 0
        %1860 = vmatmul.mubr.bf16.gmra.mxu0 %v1822
        %v1861 = vpop.f32.mrf.mxu0
        %v1862 = vadd.f32 0.0, %v1861
        %v1863 = vpop.f32.mrf.mxu0
        %v1864 = vpop.f32.mrf.mxu0
        %v1865 = vpop.f32.mrf.mxu0
        %1866 = vdwg.mxu0
        %1868 = vrot.lane.b32.xlu0 %v1862, 8
        %v1869 = vpop.permute.xlu0 %1868
        %vm1871 = vcmask 130112
        %1872 = vst.msk [vmem:[#allocation3] sm:$0xff] %vm1871, %v1869
        %1873 = vrot.lane.b32.xlu0 %v1640, 112
        %v1874 = vpop.permute.xlu0 %1873
        %1875 = vrot.lane.b32.xlu0 %v1640, 80
        %v1876 = vpop.permute.xlu0 %1875
        %v1878 = vsel %vm1644, %v1874, 0
        %v1881 = vsel %vm1644, %v1876, 0
        %1883 = vmatprep.subr.bf16.mxu0 0
        %1884 = vmatpush1.bf16.xpose.msra.mxu0 0
        %1885 = vmatprep.subr.bf16.mxu0 0
        %1886 = vmatpush1.bf16.xpose.msra.mxu0 0
        %1887 = vmatprep.subr.bf16.mxu0 0
        %1888 = vmatpush1.bf16.xpose.msra.mxu0 0
        %1889 = vmatprep.subr.bf16.mxu0 0
        %1890 = vmatpush1.bf16.xpose.msra.mxu0 0
        %1891 = vmatprep.subr.bf16.mxu0 0
        %1892 = vmatpush1.bf16.xpose.msra.mxu0 0
        %1893 = vmatprep.subr.bf16.mxu0 0
        %1894 = vmatpush1.bf16.xpose.msra.mxu0 0
        %1895 = vmatprep.subr.bf16.mxu0 0
        %1896 = vmatpush1.bf16.xpose.msra.mxu0 0
        %1897 = vmatprep.subr.bf16.mxu0 0
        %1898 = vmatpush1.bf16.xpose.msra.mxu0 %v1881
        %1899 = vmatprep.subr.bf16.mxu0 0
        %1900 = vmatpush2.bf16.xpose.msra.mxu0 0
        %1901 = vmatprep.subr.bf16.mxu0 0
        %1902 = vmatpush2.bf16.xpose.msra.mxu0 0
        %1903 = vmatprep.subr.bf16.mxu0 0
        %1904 = vmatpush2.bf16.xpose.msra.mxu0 0
        %1905 = vmatprep.subr.bf16.mxu0 0
        %1906 = vmatpush2.bf16.xpose.msra.mxu0 0
        %1907 = vmatprep.subr.bf16.mxu0 0
        %1908 = vmatpush2.bf16.xpose.msra.mxu0 0
        %1909 = vmatprep.subr.bf16.mxu0 0
        %1910 = vmatpush2.bf16.xpose.msra.mxu0 0
        %1911 = vmatprep.subr.bf16.mxu0 0
        %1912 = vmatpush2.bf16.xpose.msra.mxu0 0
        %1913 = vmatprep.subr.bf16.mxu0 0
        %1914 = vmatpush2.bf16.xpose.msra.mxu0 0
        %1915 = vmatprep.mubr.bf16.mxu0 0
        %1916 = vmatmul.mubr.bf16.gmra.mxu0 %v1878
        %v1917 = vpop.f32.mrf.mxu0
        %v1918 = vadd.f32 0.0, %v1917
        %v1919 = vpop.f32.mrf.mxu0
        %v1920 = vpop.f32.mrf.mxu0
        %v1921 = vpop.f32.mrf.mxu0
        %1922 = vdwg.mxu0
        %v1923 = vmul.f32 %v1918, 0.35355338
        %v1924 = vadd.f32 %v1923, %v1639
        %v1925 = vsel %vm1644, %v1924, -inf
        %1926 = vmax.xlane.f32.xlu0 %v1925
        %v1927 = vpop.xlane.xlu0 %1926
        %v1928 = vsub.f32 %v1924, %v1927
        %v1929 = vmul.f32 %v1928, 1.442695
        %v1930 = vpow.pop %v1929
        %v1931 = vsel %vm1644, %v1930, 0.0
        %1932 = vadd.xlane.f32.xlu0 %v1931
        %v1933 = vpop.xlane.xlu0 %1932
        %v1934 = vrcp.pop %v1933
        %v1935 = vmul.f32 %v1930, %v1934
        %v1936 = vpack.c.bf16 %v1935, %v1935
        %1937 = vrot.lane.b32.xlu0 %v1640, 48
        %v1938 = vpop.permute.xlu0 %1937
        %v1940 = vsel %vm1644, %v1936, 0
        %v1943 = vsel %vm1710, %v1938, 0
        %1945 = vmatprep.subr.bf16.mxu0 0
        %1946 = vmatpush1.bf16.msra.mxu0 0
        %1947 = vmatprep.subr.bf16.mxu0 0
        %1948 = vmatpush1.bf16.msra.mxu0 0
        %1949 = vmatprep.subr.bf16.mxu0 0
        %1950 = vmatpush1.bf16.msra.mxu0 0
        %1951 = vmatprep.subr.bf16.mxu0 0
        %1952 = vmatpush1.bf16.msra.mxu0 0
        %1953 = vmatprep.subr.bf16.mxu0 0
        %1954 = vmatpush1.bf16.msra.mxu0 0
        %1955 = vmatprep.subr.bf16.mxu0 0
        %1956 = vmatpush1.bf16.msra.mxu0 0
        %1957 = vmatprep.subr.bf16.mxu0 0
        %1958 = vmatpush1.bf16.msra.mxu0 0
        %1959 = vmatprep.subr.bf16.mxu0 0
        %1960 = vmatpush1.bf16.msra.mxu0 %v1943
        %1961 = vmatprep.subr.bf16.mxu0 0
        %1962 = vmatpush2.bf16.msra.mxu0 0
        %1963 = vmatprep.subr.bf16.mxu0 0
        %1964 = vmatpush2.bf16.msra.mxu0 0
        %1965 = vmatprep.subr.bf16.mxu0 0
        %1966 = vmatpush2.bf16.msra.mxu0 0
        %1967 = vmatprep.subr.bf16.mxu0 0
        %1968 = vmatpush2.bf16.msra.mxu0 0
        %1969 = vmatprep.subr.bf16.mxu0 0
        %1970 = vmatpush2.bf16.msra.mxu0 0
        %1971 = vmatprep.subr.bf16.mxu0 0
        %1972 = vmatpush2.bf16.msra.mxu0 0
        %1973 = vmatprep.subr.bf16.mxu0 0
        %1974 = vmatpush2.bf16.msra.mxu0 0
        %1975 = vmatprep.subr.bf16.mxu0 0
        %1976 = vmatpush2.bf16.msra.mxu0 0
        %1977 = vmatprep.mubr.bf16.mxu0 0
        %1978 = vmatmul.mubr.bf16.gmra.mxu0 %v1940
        %v1979 = vpop.f32.mrf.mxu0
        %v1980 = vadd.f32 0.0, %v1979
        %v1981 = vpop.f32.mrf.mxu0
        %v1982 = vpop.f32.mrf.mxu0
        %v1983 = vpop.f32.mrf.mxu0
        %1984 = vdwg.mxu0
        %1986 = vrot.lane.b32.xlu0 %v1980, 16
        %v1987 = vpop.permute.xlu0 %1986
        %vm1989 = vcmask 195712
        %1990 = vst.msk [vmem:[#allocation3] sm:$0xff] %vm1989, %v1987
        %1991 = vrot.lane.b32.xlu0 %v1640, 104
        %v1992 = vpop.permute.xlu0 %1991
        %1993 = vrot.lane.b32.xlu0 %v1640, 72
        %v1994 = vpop.permute.xlu0 %1993
        %v1996 = vsel %vm1644, %v1992, 0
        %v1999 = vsel %vm1644, %v1994, 0
        %2001 = vmatprep.subr.bf16.mxu0 0
        %2002 = vmatpush1.bf16.xpose.msra.mxu0 0
        %2003 = vmatprep.subr.bf16.mxu0 0
        %2004 = vmatpush1.bf16.xpose.msra.mxu0 0
        %2005 = vmatprep.subr.bf16.mxu0 0
        %2006 = vmatpush1.bf16.xpose.msra.mxu0 0
        %2007 = vmatprep.subr.bf16.mxu0 0
        %2008 = vmatpush1.bf16.xpose.msra.mxu0 0
        %2009 = vmatprep.subr.bf16.mxu0 0
        %2010 = vmatpush1.bf16.xpose.msra.mxu0 0
        %2011 = vmatprep.subr.bf16.mxu0 0
        %2012 = vmatpush1.bf16.xpose.msra.mxu0 0
        %2013 = vmatprep.subr.bf16.mxu0 0
        %2014 = vmatpush1.bf16.xpose.msra.mxu0 0
        %2015 = vmatprep.subr.bf16.mxu0 0
        %2016 = vmatpush1.bf16.xpose.msra.mxu0 %v1999
        %2017 = vmatprep.subr.bf16.mxu0 0
        %2018 = vmatpush2.bf16.xpose.msra.mxu0 0
        %2019 = vmatprep.subr.bf16.mxu0 0
        %2020 = vmatpush2.bf16.xpose.msra.mxu0 0
        %2021 = vmatprep.subr.bf16.mxu0 0
        %2022 = vmatpush2.bf16.xpose.msra.mxu0 0
        %2023 = vmatprep.subr.bf16.mxu0 0
        %2024 = vmatpush2.bf16.xpose.msra.mxu0 0
        %2025 = vmatprep.subr.bf16.mxu0 0
        %2026 = vmatpush2.bf16.xpose.msra.mxu0 0
        %2027 = vmatprep.subr.bf16.mxu0 0
        %2028 = vmatpush2.bf16.xpose.msra.mxu0 0
        %2029 = vmatprep.subr.bf16.mxu0 0
        %2030 = vmatpush2.bf16.xpose.msra.mxu0 0
        %2031 = vmatprep.subr.bf16.mxu0 0
        %2032 = vmatpush2.bf16.xpose.msra.mxu0 0
        %2033 = vmatprep.mubr.bf16.mxu0 0
        %2034 = vmatmul.mubr.bf16.gmra.mxu0 %v1996
        %v2035 = vpop.f32.mrf.mxu0
        %v2036 = vadd.f32 0.0, %v2035
        %v2037 = vpop.f32.mrf.mxu0
        %v2038 = vpop.f32.mrf.mxu0
        %v2039 = vpop.f32.mrf.mxu0
        %2040 = vdwg.mxu0
        %v2041 = vmul.f32 %v2036, 0.35355338
        %v2042 = vadd.f32 %v2041, %v1639
        %v2043 = vsel %vm1644, %v2042, -inf
        %2044 = vmax.xlane.f32.xlu0 %v2043
        %v2045 = vpop.xlane.xlu0 %2044
        %v2046 = vsub.f32 %v2042, %v2045
        %v2047 = vmul.f32 %v2046, 1.442695
        %v2048 = vpow.pop %v2047
        %v2049 = vsel %vm1644, %v2048, 0.0
        %2050 = vadd.xlane.f32.xlu0 %v2049
        %v2051 = vpop.xlane.xlu0 %2050
        %v2052 = vrcp.pop %v2051
        %v2053 = vmul.f32 %v2048, %v2052
        %v2054 = vpack.c.bf16 %v2053, %v2053
        %2055 = vrot.lane.b32.xlu0 %v1640, 40
        %v2056 = vpop.permute.xlu0 %2055
        %v2058 = vsel %vm1644, %v2054, 0
        %v2061 = vsel %vm1710, %v2056, 0
        %2063 = vmatprep.subr.bf16.mxu0 0
        %2064 = vmatpush1.bf16.msra.mxu0 0
        %2065 = vmatprep.subr.bf16.mxu0 0
        %2066 = vmatpush1.bf16.msra.mxu0 0
        %2067 = vmatprep.subr.bf16.mxu0 0
        %2068 = vmatpush1.bf16.msra.mxu0 0
        %2069 = vmatprep.subr.bf16.mxu0 0
        %2070 = vmatpush1.bf16.msra.mxu0 0
        %2071 = vmatprep.subr.bf16.mxu0 0
        %2072 = vmatpush1.bf16.msra.mxu0 0
        %2073 = vmatprep.subr.bf16.mxu0 0
        %2074 = vmatpush1.bf16.msra.mxu0 0
        %2075 = vmatprep.subr.bf16.mxu0 0
        %2076 = vmatpush1.bf16.msra.mxu0 0
        %2077 = vmatprep.subr.bf16.mxu0 0
        %2078 = vmatpush1.bf16.msra.mxu0 %v2061
        %2079 = vmatprep.subr.bf16.mxu0 0
        %2080 = vmatpush2.bf16.msra.mxu0 0
        %2081 = vmatprep.subr.bf16.mxu0 0
        %2082 = vmatpush2.bf16.msra.mxu0 0
        %2083 = vmatprep.subr.bf16.mxu0 0
        %2084 = vmatpush2.bf16.msra.mxu0 0
        %2085 = vmatprep.subr.bf16.mxu0 0
        %2086 = vmatpush2.bf16.msra.mxu0 0
        %2087 = vmatprep.subr.bf16.mxu0 0
        %2088 = vmatpush2.bf16.msra.mxu0 0
        %2089 = vmatprep.subr.bf16.mxu0 0
        %2090 = vmatpush2.bf16.msra.mxu0 0
        %2091 = vmatprep.subr.bf16.mxu0 0
        %2092 = vmatpush2.bf16.msra.mxu0 0
        %2093 = vmatprep.subr.bf16.mxu0 0
        %2094 = vmatpush2.bf16.msra.mxu0 0
        %2095 = vmatprep.mubr.bf16.mxu0 0
        %2096 = vmatmul.mubr.bf16.gmra.mxu0 %v2058
        %v2097 = vpop.f32.mrf.mxu0
        %v2098 = vadd.f32 0.0, %v2097
        %v2099 = vpop.f32.mrf.mxu0
        %v2100 = vpop.f32.mrf.mxu0
        %v2101 = vpop.f32.mrf.mxu0
        %2102 = vdwg.mxu0
        %2104 = vrot.lane.b32.xlu0 %v2098, 24
        %v2105 = vpop.permute.xlu0 %2104
        %vm2107 = vcmask 261312
        %2108 = vst.msk [vmem:[#allocation3] sm:$0xff] %vm2107, %v2105
        %v2109 = vld [vmem:[#allocation3] sm:$0xff]
        %v2110 = vpack.c.bf16 %v2109, %v2109
        %v2111 = vld [vmem:[%s1511] sm:$0xf]
        %v2112 = vld [vmem:[%s1511 + $0x4] sm:$0xf]
        %v2113 = vld [vmem:[%s1511 + $0x8] sm:$0xf]
        %v2114 = vld [vmem:[%s1511 + $0xc] sm:$0xf]
        %v2115 = vld [vmem:[%s1239] sm:$0x1]
        %v2117 = vlaneseq
        %v2118 = vshrl.u32 %v2117, 7
        %v2119 = vsub.s32 0, %v2118
        %v2120 = vrot.slane %v2115, %v2119
        %v2126 = vunpack.c.l.b16 %v2111
        %v2127 = vunpack.c.l.b16 %v2112
        %v2128 = vunpack.c.l.b16 %v2113
        %v2129 = vunpack.c.l.b16 %v2114
        %v2130 = vpack.c.b16 %v2127, %v2126
        %v2131 = vpack.c.b16 %v2129, %v2128
        %v2135 = vsel %vm1541, %v2110, 0
        %2137 = vmatprep.subr.bf16.mxu0 0
        %2138 = vmatpush1.bf16.msra.mxu0 0
        %2139 = vmatprep.subr.bf16.mxu0 0
        %2140 = vmatpush1.bf16.msra.mxu0 0
        %2141 = vmatprep.subr.bf16.mxu0 0
        %2142 = vmatpush1.bf16.msra.mxu0 0
        %2143 = vmatprep.subr.bf16.mxu0 0
        %2144 = vmatpush1.bf16.msra.mxu0 0
        %2145 = vmatprep.subr.bf16.mxu0 0
        %2146 = vmatpush1.bf16.msra.mxu0 0
        %2147 = vmatprep.subr.bf16.mxu0 0
        %2148 = vmatpush1.bf16.msra.mxu0 0
        %2149 = vmatprep.subr.bf16.mxu0 0
        %2150 = vmatpush1.bf16.msra.mxu0 %v2131
        %2151 = vmatprep.subr.bf16.mxu0 0
        %2152 = vmatpush1.bf16.msra.mxu0 %v2130
        %2153 = vmatprep.subr.bf16.mxu0 0
        %2154 = vmatpush2.bf16.msra.mxu0 0
        %2155 = vmatprep.subr.bf16.mxu0 0
        %2156 = vmatpush2.bf16.msra.mxu0 0
        %2157 = vmatprep.subr.bf16.mxu0 0
        %2158 = vmatpush2.bf16.msra.mxu0 0
        %2159 = vmatprep.subr.bf16.mxu0 0
        %2160 = vmatpush2.bf16.msra.mxu0 0
        %2161 = vmatprep.subr.bf16.mxu0 0
        %2162 = vmatpush2.bf16.msra.mxu0 0
        %2163 = vmatprep.subr.bf16.mxu0 0
        %2164 = vmatpush2.bf16.msra.mxu0 0
        %2165 = vmatprep.subr.bf16.mxu0 0
        %2166 = vmatpush2.bf16.msra.mxu0 0
        %2167 = vmatprep.subr.bf16.mxu0 0
        %2168 = vmatpush2.bf16.msra.mxu0 0
        %2169 = vmatprep.mubr.bf16.mxu0 0
        %2170 = vmatmul.mubr.bf16.gmra.mxu0 %v2135
        %v2171 = vpop.f32.mrf.mxu0
        %v2172 = vadd.f32 %v2120, %v2171
        %v2173 = vpop.f32.mrf.mxu0
        %v2174 = vpop.f32.mrf.mxu0
        %v2175 = vpop.f32.mrf.mxu0
        %2176 = vdwg.mxu0
        %v2177 = vadd.f32 %v1538, %v2172
        %v2178 = vld [vmem:[%s1247] sm:$0x1]
        %v2179 = vld [vmem:[%s1255] sm:$0x1]
        %v2180 = vsel %vm1541, %v2177, 0.0
        %2181 = vadd.xlane.f32.xlu0 %v2180
        %v2182 = vpop.xlane.xlu0 %2181
        %v2183 = vmul.f32 %v2182, %v1545
        %v2184 = vmul.f32 %v2177, %v2177
        %v2185 = vsel %vm1541, %v2184, 0.0
        %2186 = vadd.xlane.f32.xlu0 %v2185
        %v2187 = vpop.xlane.xlu0 %2186
        %v2188 = vmul.f32 %v2187, %v1545
        %v2189 = vmul.f32 %v2183, %v2183
        %v2190 = vsub.f32 %v2188, %v2189
        %v2191 = vsub.f32 %v2177, %v2183
        %v2192 = vadd.f32 %v2190, 1e-05
        %v2193 = vrsqrt.pop %v2192
        %v2194 = vmul.f32 %v2191, %v2193
        %v2196 = vlaneseq
        %v2197 = vshrl.u32 %v2196, 7
        %v2198 = vsub.s32 0, %v2197
        %v2199 = vrot.slane %v2178, %v2198
        %v2201 = vmul.f32 %v2194, %v2199
        %v2203 = vlaneseq
        %v2204 = vshrl.u32 %v2203, 7
        %v2205 = vsub.s32 0, %v2204
        %v2206 = vrot.slane %v2179, %v2205
        %v2208 = vadd.f32 %v2201, %v2206
        %v2209 = vpack.c.bf16 %v2208, %v2208
        %v2210 = vld [vmem:[%s1516] sm:$0xf]
        %v2211 = vld [vmem:[%s1516 + $0x4] sm:$0xf]
        %v2212 = vld [vmem:[%s1516 + $0x8] sm:$0xf]
        %v2213 = vld [vmem:[%s1516 + $0xc] sm:$0xf]
        %v2214 = vld [vmem:[%s1263] sm:$0x1]
        %v2216 = vlaneseq
        %v2217 = vshrl.u32 %v2216, 7
        %v2218 = vsub.s32 0, %v2217
        %v2219 = vrot.slane %v2214, %v2218
        %v2225 = vunpack.c.l.b16 %v2210
        %v2226 = vunpack.c.l.b16 %v2211
        %v2227 = vunpack.c.l.b16 %v2212
        %v2228 = vunpack.c.l.b16 %v2213
        %v2229 = vpack.c.b16 %v2226, %v2225
        %v2230 = vpack.c.b16 %v2228, %v2227
        %v2234 = vsel %vm1541, %v2209, 0
        %2236 = vmatprep.subr.bf16.mxu0 0
        %2237 = vmatpush1.bf16.msra.mxu0 0
        %2238 = vmatprep.subr.bf16.mxu0 0
        %2239 = vmatpush1.bf16.msra.mxu0 0
        %2240 = vmatprep.subr.bf16.mxu0 0
        %2241 = vmatpush1.bf16.msra.mxu0 0
        %2242 = vmatprep.subr.bf16.mxu0 0
        %2243 = vmatpush1.bf16.msra.mxu0 0
        %2244 = vmatprep.subr.bf16.mxu0 0
        %2245 = vmatpush1.bf16.msra.mxu0 0
        %2246 = vmatprep.subr.bf16.mxu0 0
        %2247 = vmatpush1.bf16.msra.mxu0 0
        %2248 = vmatprep.subr.bf16.mxu0 0
        %2249 = vmatpush1.bf16.msra.mxu0 %v2230
        %2250 = vmatprep.subr.bf16.mxu0 0
        %2251 = vmatpush1.bf16.msra.mxu0 %v2229
        %2252 = vmatprep.subr.bf16.mxu0 0
        %2253 = vmatpush2.bf16.msra.mxu0 0
        %2254 = vmatprep.subr.bf16.mxu0 0
        %2255 = vmatpush2.bf16.msra.mxu0 0
        %2256 = vmatprep.subr.bf16.mxu0 0
        %2257 = vmatpush2.bf16.msra.mxu0 0
        %2258 = vmatprep.subr.bf16.mxu0 0
        %2259 = vmatpush2.bf16.msra.mxu0 0
        %2260 = vmatprep.subr.bf16.mxu0 0
        %2261 = vmatpush2.bf16.msra.mxu0 0
        %2262 = vmatprep.subr.bf16.mxu0 0
        %2263 = vmatpush2.bf16.msra.mxu0 0
        %2264 = vmatprep.subr.bf16.mxu0 0
        %2265 = vmatpush2.bf16.msra.mxu0 0
        %2266 = vmatprep.subr.bf16.mxu0 0
        %2267 = vmatpush2.bf16.msra.mxu0 0
        %2268 = vmatprep.mubr.bf16.mxu0 0
        %2269 = vmatmul.mubr.bf16.gmra.mxu0 %v2234
        %v2270 = vpop.f32.mrf.mxu0
        %v2271 = vadd.f32 %v2219, %v2270
        %v2272 = vpop.f32.mrf.mxu0
        %v2273 = vpop.f32.mrf.mxu0
        %v2274 = vpop.f32.mrf.mxu0
        %2275 = vdwg.mxu0
        %v2276 = vld [vmem:[%s1198] sm:$0xf]
        %v2277 = vld [vmem:[%s1198 + $0x4] sm:$0xf]
        %v2278 = vld [vmem:[%s1521] sm:$0xf]
        %v2279 = vld [vmem:[%s1521 + $0x4] sm:$0xf]
        %v2280 = vld [vmem:[%s1521 + $0x8] sm:$0xf]
        %v2281 = vld [vmem:[%s1521 + $0xc] sm:$0xf]
        %v2282 = vld [vmem:[%s1271] sm:$0x1]
        %v2284 = vlaneseq
        %v2285 = vshrl.u32 %v2284, 7
        %v2286 = vsub.s32 0, %v2285
        %v2287 = vrot.slane %v2282, %v2286
        %v2291 = vunpack.c.l.b16 %v2276
        %v2292 = vunpack.c.l.b16 %v2277
        %v2293 = vpack.c.b16 %v2292, %v2291
        %v2298 = vunpack.c.l.b16 %v2278
        %v2299 = vunpack.c.l.b16 %v2279
        %v2300 = vunpack.c.l.b16 %v2280
        %v2301 = vunpack.c.l.b16 %v2281
        %v2302 = vpack.c.b16 %v2299, %v2298
        %v2303 = vpack.c.b16 %v2301, %v2300
        %v2307 = vsel %vm1541, %v2293, 0
        %2309 = vmatprep.subr.bf16.mxu0 0
        %2310 = vmatpush1.bf16.msra.mxu0 0
        %2311 = vmatprep.subr.bf16.mxu0 0
        %2312 = vmatpush1.bf16.msra.mxu0 0
        %2313 = vmatprep.subr.bf16.mxu0 0
        %2314 = vmatpush1.bf16.msra.mxu0 0
        %2315 = vmatprep.subr.bf16.mxu0 0
        %2316 = vmatpush1.bf16.msra.mxu0 0
        %2317 = vmatprep.subr.bf16.mxu0 0
        %2318 = vmatpush1.bf16.msra.mxu0 0
        %2319 = vmatprep.subr.bf16.mxu0 0
        %2320 = vmatpush1.bf16.msra.mxu0 0
        %2321 = vmatprep.subr.bf16.mxu0 0
        %2322 = vmatpush1.bf16.msra.mxu0 %v2303
        %2323 = vmatprep.subr.bf16.mxu0 0
        %2324 = vmatpush1.bf16.msra.mxu0 %v2302
        %2325 = vmatprep.subr.bf16.mxu0 0
        %2326 = vmatpush2.bf16.msra.mxu0 0
        %2327 = vmatprep.subr.bf16.mxu0 0
        %2328 = vmatpush2.bf16.msra.mxu0 0
        %2329 = vmatprep.subr.bf16.mxu0 0
        %2330 = vmatpush2.bf16.msra.mxu0 0
        %2331 = vmatprep.subr.bf16.mxu0 0
        %2332 = vmatpush2.bf16.msra.mxu0 0
        %2333 = vmatprep.subr.bf16.mxu0 0
        %2334 = vmatpush2.bf16.msra.mxu0 0
        %2335 = vmatprep.subr.bf16.mxu0 0
        %2336 = vmatpush2.bf16.msra.mxu0 0
        %2337 = vmatprep.subr.bf16.mxu0 0
        %2338 = vmatpush2.bf16.msra.mxu0 0
        %2339 = vmatprep.subr.bf16.mxu0 0
        %2340 = vmatpush2.bf16.msra.mxu0 0
        %2341 = vmatprep.mubr.bf16.mxu0 0
        %2342 = vmatmul.mubr.bf16.gmra.mxu0 %v2307
        %v2343 = vpop.f32.mrf.mxu0
        %v2344 = vadd.f32 %v2287, %v2343
        %v2345 = vpop.f32.mrf.mxu0
        %v2346 = vpop.f32.mrf.mxu0
        %v2347 = vadd.f32 %v2287, %v2346
        %v2348 = vpop.f32.mrf.mxu0
        %2349 = vdwg.mxu0
        %v2350 = vld [vmem:[%s1207] sm:$0xff]
        %v2351 = vpack.c.bf16 %v2271, %v2271
        %v2352 = vpack.c.bf16 %v2347, %v2344
        %v2354 = vsel %vm1644, %v2351, 0
        %v2357 = vsel %vm1644, %v2352, 0
        %2359 = vmatprep.subr.bf16.mxu0 0
        %2360 = vmatpush1.bf16.xpose.msra.mxu0 0
        %2361 = vmatprep.subr.bf16.mxu0 0
        %2362 = vmatpush1.bf16.xpose.msra.mxu0 0
        %2363 = vmatprep.subr.bf16.mxu0 0
        %2364 = vmatpush1.bf16.xpose.msra.mxu0 0
        %2365 = vmatprep.subr.bf16.mxu0 0
        %2366 = vmatpush1.bf16.xpose.msra.mxu0 0
        %2367 = vmatprep.subr.bf16.mxu0 0
        %2368 = vmatpush1.bf16.xpose.msra.mxu0 0
        %2369 = vmatprep.subr.bf16.mxu0 0
        %2370 = vmatpush1.bf16.xpose.msra.mxu0 0
        %2371 = vmatprep.subr.bf16.mxu0 0
        %2372 = vmatpush1.bf16.xpose.msra.mxu0 0
        %2373 = vmatprep.subr.bf16.mxu0 0
        %2374 = vmatpush1.bf16.xpose.msra.mxu0 %v2357
        %2375 = vmatprep.subr.bf16.mxu0 0
        %2376 = vmatpush2.bf16.xpose.msra.mxu0 0
        %2377 = vmatprep.subr.bf16.mxu0 0
        %2378 = vmatpush2.bf16.xpose.msra.mxu0 0
        %2379 = vmatprep.subr.bf16.mxu0 0
        %2380 = vmatpush2.bf16.xpose.msra.mxu0 0
        %2381 = vmatprep.subr.bf16.mxu0 0
        %2382 = vmatpush2.bf16.xpose.msra.mxu0 0
        %2383 = vmatprep.subr.bf16.mxu0 0
        %2384 = vmatpush2.bf16.xpose.msra.mxu0 0
        %2385 = vmatprep.subr.bf16.mxu0 0
        %2386 = vmatpush2.bf16.xpose.msra.mxu0 0
        %2387 = vmatprep.subr.bf16.mxu0 0
        %2388 = vmatpush2.bf16.xpose.msra.mxu0 0
        %2389 = vmatprep.subr.bf16.mxu0 0
        %2390 = vmatpush2.bf16.xpose.msra.mxu0 0
        %2391 = vmatprep.mubr.bf16.mxu0 0
        %2392 = vmatmul.mubr.bf16.gmra.mxu0 %v2354
        %v2393 = vpop.f32.mrf.mxu0
        %v2394 = vadd.f32 0.0, %v2393
        %v2395 = vpop.f32.mrf.mxu0
        %v2396 = vpop.f32.mrf.mxu0
        %v2397 = vpop.f32.mrf.mxu0
        %2398 = vdwg.mxu0
        %v2399 = vmul.f32 %v2394, 0.35355338
        %v2400 = vadd.f32 %v2399, %v2350
        %vm2401 = vcmask 130048
        %v2402 = vsel %vm2401, %v2400, -inf
        %2403 = vmax.xlane.f32.xlu0 %v2402
        %v2404 = vpop.xlane.xlu0 %2403
        %v2405 = vsub.f32 %v2400, %v2404
        %v2406 = vmul.f32 %v2405, 1.442695
        %v2407 = vpow.pop %v2406
        %v2408 = vsel %vm2401, %v2407, 0.0
        %2409 = vadd.xlane.f32.xlu0 %v2408
        %v2410 = vpop.xlane.xlu0 %2409
        %v2411 = vrcp.pop %v2410
        %v2412 = vmul.f32 %v2407, %v2411
        %2413 = vst.msk [vmem:[%s1496] sm:$0xff] %vm2401, %v2412
        %v2414 = vpack.c.bf16 %v2412, %v2412
        %2416 = vrot.lane.b32.xlu0 %v2352, 96
        %v2417 = vpop.permute.xlu0 %2416
        %v2420 = vsel %vm2401, %v2414, 0
        %2422 = vmatprep.subr.bf16.mxu0 0
        %2423 = vmatpush1.bf16.msra.mxu0 0
        %2424 = vmatprep.subr.bf16.mxu0 0
        %2425 = vmatpush1.bf16.msra.mxu0 0
        %2426 = vmatprep.subr.bf16.mxu0 0
        %2427 = vmatpush1.bf16.msra.mxu0 0
        %2428 = vmatprep.subr.bf16.mxu0 0
        %2429 = vmatpush1.bf16.msra.mxu0 0
        %2430 = vmatprep.subr.bf16.mxu0 0
        %2431 = vmatpush1.bf16.msra.mxu0 0
        %2432 = vmatprep.subr.bf16.mxu0 0
        %2433 = vmatpush1.bf16.msra.mxu0 0
        %2434 = vmatprep.subr.bf16.mxu0 0
        %2435 = vmatpush1.bf16.msra.mxu0 0
        %2436 = vmatprep.subr.bf16.mxu0 0
        %2437 = vmatpush1.bf16.msra.mxu0 %v2417
        %2438 = vmatprep.subr.bf16.mxu0 0
        %2439 = vmatpush2.bf16.msra.mxu0 0
        %2440 = vmatprep.subr.bf16.mxu0 0
        %2441 = vmatpush2.bf16.msra.mxu0 0
        %2442 = vmatprep.subr.bf16.mxu0 0
        %2443 = vmatpush2.bf16.msra.mxu0 0
        %2444 = vmatprep.subr.bf16.mxu0 0
        %2445 = vmatpush2.bf16.msra.mxu0 0
        %2446 = vmatprep.subr.bf16.mxu0 0
        %2447 = vmatpush2.bf16.msra.mxu0 0
        %2448 = vmatprep.subr.bf16.mxu0 0
        %2449 = vmatpush2.bf16.msra.mxu0 0
        %2450 = vmatprep.subr.bf16.mxu0 0
        %2451 = vmatpush2.bf16.msra.mxu0 0
        %2452 = vmatprep.subr.bf16.mxu0 0
        %2453 = vmatpush2.bf16.msra.mxu0 0
        %2454 = vmatprep.mubr.bf16.mxu0 0
        %2455 = vmatmul.mubr.bf16.gmra.mxu0 %v2420
        %v2456 = vpop.f32.mrf.mxu0
        %v2457 = vadd.f32 0.0, %v2456
        %v2458 = vpop.f32.mrf.mxu0
        %v2459 = vpop.f32.mrf.mxu0
        %v2460 = vpop.f32.mrf.mxu0
        %2461 = vdwg.mxu0
        %2462 = vst.msk [vmem:[#allocation3] sm:$0xff] %vm1644, %v2457
        %2464 = vrot.lane.b32.xlu0 %v2351, 120
        %v2465 = vpop.permute.xlu0 %2464
        %2466 = vrot.lane.b32.xlu0 %v2352, 120
        %v2467 = vpop.permute.xlu0 %2466
        %v2469 = vsel %vm1644, %v2465, 0
        %v2472 = vsel %vm1644, %v2467, 0
        %2474 = vmatprep.subr.bf16.mxu0 0
        %2475 = vmatpush1.bf16.xpose.msra.mxu0 0
        %2476 = vmatprep.subr.bf16.mxu0 0
        %2477 = vmatpush1.bf16.xpose.msra.mxu0 0
        %2478 = vmatprep.subr.bf16.mxu0 0
        %2479 = vmatpush1.bf16.xpose.msra.mxu0 0
        %2480 = vmatprep.subr.bf16.mxu0 0
        %2481 = vmatpush1.bf16.xpose.msra.mxu0 0
        %2482 = vmatprep.subr.bf16.mxu0 0
        %2483 = vmatpush1.bf16.xpose.msra.mxu0 0
        %2484 = vmatprep.subr.bf16.mxu0 0
        %2485 = vmatpush1.bf16.xpose.msra.mxu0 0
        %2486 = vmatprep.subr.bf16.mxu0 0
        %2487 = vmatpush1.bf16.xpose.msra.mxu0 0
        %2488 = vmatprep.subr.bf16.mxu0 0
        %2489 = vmatpush1.bf16.xpose.msra.mxu0 %v2472
        %2490 = vmatprep.subr.bf16.mxu0 0
        %2491 = vmatpush2.bf16.xpose.msra.mxu0 0
        %2492 = vmatprep.subr.bf16.mxu0 0
        %2493 = vmatpush2.bf16.xpose.msra.mxu0 0
        %2494 = vmatprep.subr.bf16.mxu0 0
        %2495 = vmatpush2.bf16.xpose.msra.mxu0 0
        %2496 = vmatprep.subr.bf16.mxu0 0
        %2497 = vmatpush2.bf16.xpose.msra.mxu0 0
        %2498 = vmatprep.subr.bf16.mxu0 0
        %2499 = vmatpush2.bf16.xpose.msra.mxu0 0
        %2500 = vmatprep.subr.bf16.mxu0 0
        %2501 = vmatpush2.bf16.xpose.msra.mxu0 0
        %2502 = vmatprep.subr.bf16.mxu0 0
        %2503 = vmatpush2.bf16.xpose.msra.mxu0 0
        %2504 = vmatprep.subr.bf16.mxu0 0
        %2505 = vmatpush2.bf16.xpose.msra.mxu0 0
        %2506 = vmatprep.mubr.bf16.mxu0 0
        %2507 = vmatmul.mubr.bf16.gmra.mxu0 %v2469
        %v2508 = vpop.f32.mrf.mxu0
        %v2509 = vadd.f32 0.0, %v2508
        %v2510 = vpop.f32.mrf.mxu0
        %v2511 = vpop.f32.mrf.mxu0
        %v2512 = vpop.f32.mrf.mxu0
        %2513 = vdwg.mxu0
        %v2514 = vmul.f32 %v2509, 0.35355338
        %v2515 = vadd.f32 %v2514, %v2350
        %v2516 = vsel %vm2401, %v2515, -inf
        %2517 = vmax.xlane.f32.xlu0 %v2516
        %v2518 = vpop.xlane.xlu0 %2517
        %v2519 = vsub.f32 %v2515, %v2518
        %v2520 = vmul.f32 %v2519, 1.442695
        %v2521 = vpow.pop %v2520
        %v2522 = vsel %vm2401, %v2521, 0.0
        %2523 = vadd.xlane.f32.xlu0 %v2522
        %v2524 = vpop.xlane.xlu0 %2523
        %v2525 = vrcp.pop %v2524
        %v2526 = vmul.f32 %v2521, %v2525
        %s2527 = scalar_lea.vmem %s1496, 8 [#allocation32]
        %2528 = vst.msk [vmem:[%s2527] sm:$0xff] %vm2401, %v2526
        %v2529 = vpack.c.bf16 %v2526, %v2526
        %2530 = vrot.lane.b32.xlu0 %v2352, 88
        %v2531 = vpop.permute.xlu0 %2530
        %v2534 = vsel %vm2401, %v2529, 0
        %2536 = vmatprep.subr.bf16.mxu0 0
        %2537 = vmatpush1.bf16.msra.mxu0 0
        %2538 = vmatprep.subr.bf16.mxu0 0
        %2539 = vmatpush1.bf16.msra.mxu0 0
        %2540 = vmatprep.subr.bf16.mxu0 0
        %2541 = vmatpush1.bf16.msra.mxu0 0
        %2542 = vmatprep.subr.bf16.mxu0 0
        %2543 = vmatpush1.bf16.msra.mxu0 0
        %2544 = vmatprep.subr.bf16.mxu0 0
        %2545 = vmatpush1.bf16.msra.mxu0 0
        %2546 = vmatprep.subr.bf16.mxu0 0
        %2547 = vmatpush1.bf16.msra.mxu0 0
        %2548 = vmatprep.subr.bf16.mxu0 0
        %2549 = vmatpush1.bf16.msra.mxu0 0
        %2550 = vmatprep.subr.bf16.mxu0 0
        %2551 = vmatpush1.bf16.msra.mxu0 %v2531
        %2552 = vmatprep.subr.bf16.mxu0 0
        %2553 = vmatpush2.bf16.msra.mxu0 0
        %2554 = vmatprep.subr.bf16.mxu0 0
        %2555 = vmatpush2.bf16.msra.mxu0 0
        %2556 = vmatprep.subr.bf16.mxu0 0
        %2557 = vmatpush2.bf16.msra.mxu0 0
        %2558 = vmatprep.subr.bf16.mxu0 0
        %2559 = vmatpush2.bf16.msra.mxu0 0
        %2560 = vmatprep.subr.bf16.mxu0 0
        %2561 = vmatpush2.bf16.msra.mxu0 0
        %2562 = vmatprep.subr.bf16.mxu0 0
        %2563 = vmatpush2.bf16.msra.mxu0 0
        %2564 = vmatprep.subr.bf16.mxu0 0
        %2565 = vmatpush2.bf16.msra.mxu0 0
        %2566 = vmatprep.subr.bf16.mxu0 0
        %2567 = vmatpush2.bf16.msra.mxu0 0
        %2568 = vmatprep.mubr.bf16.mxu0 0
        %2569 = vmatmul.mubr.bf16.gmra.mxu0 %v2534
        %v2570 = vpop.f32.mrf.mxu0
        %v2571 = vadd.f32 0.0, %v2570
        %v2572 = vpop.f32.mrf.mxu0
        %v2573 = vpop.f32.mrf.mxu0
        %v2574 = vpop.f32.mrf.mxu0
        %2575 = vdwg.mxu0
        %2577 = vrot.lane.b32.xlu0 %v2571, 8
        %v2578 = vpop.permute.xlu0 %2577
        %2580 = vst.msk [vmem:[#allocation3] sm:$0xff] %vm1871, %v2578
        %2581 = vrot.lane.b32.xlu0 %v2351, 112
        %v2582 = vpop.permute.xlu0 %2581
        %2583 = vrot.lane.b32.xlu0 %v2352, 112
        %v2584 = vpop.permute.xlu0 %2583
        %v2586 = vsel %vm1644, %v2582, 0
        %v2589 = vsel %vm1644, %v2584, 0
        %2591 = vmatprep.subr.bf16.mxu0 0
        %2592 = vmatpush1.bf16.xpose.msra.mxu0 0
        %2593 = vmatprep.subr.bf16.mxu0 0
        %2594 = vmatpush1.bf16.xpose.msra.mxu0 0
        %2595 = vmatprep.subr.bf16.mxu0 0
        %2596 = vmatpush1.bf16.xpose.msra.mxu0 0
        %2597 = vmatprep.subr.bf16.mxu0 0
        %2598 = vmatpush1.bf16.xpose.msra.mxu0 0
        %2599 = vmatprep.subr.bf16.mxu0 0
        %2600 = vmatpush1.bf16.xpose.msra.mxu0 0
        %2601 = vmatprep.subr.bf16.mxu0 0
        %2602 = vmatpush1.bf16.xpose.msra.mxu0 0
        %2603 = vmatprep.subr.bf16.mxu0 0
        %2604 = vmatpush1.bf16.xpose.msra.mxu0 0
        %2605 = vmatprep.subr.bf16.mxu0 0
        %2606 = vmatpush1.bf16.xpose.msra.mxu0 %v2589
        %2607 = vmatprep.subr.bf16.mxu0 0
        %2608 = vmatpush2.bf16.xpose.msra.mxu0 0
        %2609 = vmatprep.subr.bf16.mxu0 0
        %2610 = vmatpush2.bf16.xpose.msra.mxu0 0
        %2611 = vmatprep.subr.bf16.mxu0 0
        %2612 = vmatpush2.bf16.xpose.msra.mxu0 0
        %2613 = vmatprep.subr.bf16.mxu0 0
        %2614 = vmatpush2.bf16.xpose.msra.mxu0 0
        %2615 = vmatprep.subr.bf16.mxu0 0
        %2616 = vmatpush2.bf16.xpose.msra.mxu0 0
        %2617 = vmatprep.subr.bf16.mxu0 0
        %2618 = vmatpush2.bf16.xpose.msra.mxu0 0
        %2619 = vmatprep.subr.bf16.mxu0 0
        %2620 = vmatpush2.bf16.xpose.msra.mxu0 0
        %2621 = vmatprep.subr.bf16.mxu0 0
        %2622 = vmatpush2.bf16.xpose.msra.mxu0 0
        %2623 = vmatprep.mubr.bf16.mxu0 0
        %2624 = vmatmul.mubr.bf16.gmra.mxu0 %v2586
        %v2625 = vpop.f32.mrf.mxu0
        %v2626 = vadd.f32 0.0, %v2625
        %v2627 = vpop.f32.mrf.mxu0
        %v2628 = vpop.f32.mrf.mxu0
        %v2629 = vpop.f32.mrf.mxu0
        %2630 = vdwg.mxu0
        %v2631 = vmul.f32 %v2626, 0.35355338
        %v2632 = vadd.f32 %v2631, %v2350
        %v2633 = vsel %vm2401, %v2632, -inf
        %2634 = vmax.xlane.f32.xlu0 %v2633
        %v2635 = vpop.xlane.xlu0 %2634
        %v2636 = vsub.f32 %v2632, %v2635
        %v2637 = vmul.f32 %v2636, 1.442695
        %v2638 = vpow.pop %v2637
        %v2639 = vsel %vm2401, %v2638, 0.0
        %2640 = vadd.xlane.f32.xlu0 %v2639
        %v2641 = vpop.xlane.xlu0 %2640
        %v2642 = vrcp.pop %v2641
        %v2643 = vmul.f32 %v2638, %v2642
        %s2644 = scalar_lea.vmem %s1496, 16 [#allocation32]
        %2645 = vst.msk [vmem:[%s2644] sm:$0xff] %vm2401, %v2643
        %v2646 = vpack.c.bf16 %v2643, %v2643
        %2647 = vrot.lane.b32.xlu0 %v2352, 80
        %v2648 = vpop.permute.xlu0 %2647
        %v2651 = vsel %vm2401, %v2646, 0
        %2653 = vmatprep.subr.bf16.mxu0 0
        %2654 = vmatpush1.bf16.msra.mxu0 0
        %2655 = vmatprep.subr.bf16.mxu0 0
        %2656 = vmatpush1.bf16.msra.mxu0 0
        %2657 = vmatprep.subr.bf16.mxu0 0
        %2658 = vmatpush1.bf16.msra.mxu0 0
        %2659 = vmatprep.subr.bf16.mxu0 0
        %2660 = vmatpush1.bf16.msra.mxu0 0
        %2661 = vmatprep.subr.bf16.mxu0 0
        %2662 = vmatpush1.bf16.msra.mxu0 0
        %2663 = vmatprep.subr.bf16.mxu0 0
        %2664 = vmatpush1.bf16.msra.mxu0 0
        %2665 = vmatprep.subr.bf16.mxu0 0
        %2666 = vmatpush1.bf16.msra.mxu0 0
        %2667 = vmatprep.subr.bf16.mxu0 0
        %2668 = vmatpush1.bf16.msra.mxu0 %v2648
        %2669 = vmatprep.subr.bf16.mxu0 0
        %2670 = vmatpush2.bf16.msra.mxu0 0
        %2671 = vmatprep.subr.bf16.mxu0 0
        %2672 = vmatpush2.bf16.msra.mxu0 0
        %2673 = vmatprep.subr.bf16.mxu0 0
        %2674 = vmatpush2.bf16.msra.mxu0 0
        %2675 = vmatprep.subr.bf16.mxu0 0
        %2676 = vmatpush2.bf16.msra.mxu0 0
        %2677 = vmatprep.subr.bf16.mxu0 0
        %2678 = vmatpush2.bf16.msra.mxu0 0
        %2679 = vmatprep.subr.bf16.mxu0 0
        %2680 = vmatpush2.bf16.msra.mxu0 0
        %2681 = vmatprep.subr.bf16.mxu0 0
        %2682 = vmatpush2.bf16.msra.mxu0 0
        %2683 = vmatprep.subr.bf16.mxu0 0
        %2684 = vmatpush2.bf16.msra.mxu0 0
        %2685 = vmatprep.mubr.bf16.mxu0 0
        %2686 = vmatmul.mubr.bf16.gmra.mxu0 %v2651
        %v2687 = vpop.f32.mrf.mxu0
        %v2688 = vadd.f32 0.0, %v2687
        %v2689 = vpop.f32.mrf.mxu0
        %v2690 = vpop.f32.mrf.mxu0
        %v2691 = vpop.f32.mrf.mxu0
        %2692 = vdwg.mxu0
        %2694 = vrot.lane.b32.xlu0 %v2688, 16
        %v2695 = vpop.permute.xlu0 %2694
        %2697 = vst.msk [vmem:[#allocation3] sm:$0xff] %vm1989, %v2695
        %2698 = vrot.lane.b32.xlu0 %v2351, 104
        %v2699 = vpop.permute.xlu0 %2698
        %2700 = vrot.lane.b32.xlu0 %v2352, 104
        %v2701 = vpop.permute.xlu0 %2700
        %v2703 = vsel %vm1644, %v2699, 0
        %v2706 = vsel %vm1644, %v2701, 0
        %2708 = vmatprep.subr.bf16.mxu0 0
        %2709 = vmatpush1.bf16.xpose.msra.mxu0 0
        %2710 = vmatprep.subr.bf16.mxu0 0
        %2711 = vmatpush1.bf16.xpose.msra.mxu0 0
        %2712 = vmatprep.subr.bf16.mxu0 0
        %2713 = vmatpush1.bf16.xpose.msra.mxu0 0
        %2714 = vmatprep.subr.bf16.mxu0 0
        %2715 = vmatpush1.bf16.xpose.msra.mxu0 0
        %2716 = vmatprep.subr.bf16.mxu0 0
        %2717 = vmatpush1.bf16.xpose.msra.mxu0 0
        %2718 = vmatprep.subr.bf16.mxu0 0
        %2719 = vmatpush1.bf16.xpose.msra.mxu0 0
        %2720 = vmatprep.subr.bf16.mxu0 0
        %2721 = vmatpush1.bf16.xpose.msra.mxu0 0
        %2722 = vmatprep.subr.bf16.mxu0 0
        %2723 = vmatpush1.bf16.xpose.msra.mxu0 %v2706
        %2724 = vmatprep.subr.bf16.mxu0 0
        %2725 = vmatpush2.bf16.xpose.msra.mxu0 0
        %2726 = vmatprep.subr.bf16.mxu0 0
        %2727 = vmatpush2.bf16.xpose.msra.mxu0 0
        %2728 = vmatprep.subr.bf16.mxu0 0
        %2729 = vmatpush2.bf16.xpose.msra.mxu0 0
        %2730 = vmatprep.subr.bf16.mxu0 0
        %2731 = vmatpush2.bf16.xpose.msra.mxu0 0
        %2732 = vmatprep.subr.bf16.mxu0 0
        %2733 = vmatpush2.bf16.xpose.msra.mxu0 0
        %2734 = vmatprep.subr.bf16.mxu0 0
        %2735 = vmatpush2.bf16.xpose.msra.mxu0 0
        %2736 = vmatprep.subr.bf16.mxu0 0
        %2737 = vmatpush2.bf16.xpose.msra.mxu0 0
        %2738 = vmatprep.subr.bf16.mxu0 0
        %2739 = vmatpush2.bf16.xpose.msra.mxu0 0
        %2740 = vmatprep.mubr.bf16.mxu0 0
        %2741 = vmatmul.mubr.bf16.gmra.mxu0 %v2703
        %v2742 = vpop.f32.mrf.mxu0
        %v2743 = vadd.f32 0.0, %v2742
        %v2744 = vpop.f32.mrf.mxu0
        %v2745 = vpop.f32.mrf.mxu0
        %v2746 = vpop.f32.mrf.mxu0
        %2747 = vdwg.mxu0
        %v2748 = vmul.f32 %v2743, 0.35355338
        %v2749 = vadd.f32 %v2748, %v2350
        %v2750 = vsel %vm2401, %v2749, -inf
        %2751 = vmax.xlane.f32.xlu0 %v2750
        %v2752 = vpop.xlane.xlu0 %2751
        %v2753 = vsub.f32 %v2749, %v2752
        %v2754 = vmul.f32 %v2753, 1.442695
        %v2755 = vpow.pop %v2754
        %v2756 = vsel %vm2401, %v2755, 0.0
        %2757 = vadd.xlane.f32.xlu0 %v2756
        %v2758 = vpop.xlane.xlu0 %2757
        %v2759 = vrcp.pop %v2758
        %v2760 = vmul.f32 %v2755, %v2759
        %s2761 = scalar_lea.vmem %s1496, 24 [#allocation32]
        %2762 = vst.msk [vmem:[%s2761] sm:$0xff] %vm2401, %v2760
        %v2763 = vpack.c.bf16 %v2760, %v2760
        %2764 = vrot.lane.b32.xlu0 %v2352, 72
        %v2765 = vpop.permute.xlu0 %2764
        %v2768 = vsel %vm2401, %v2763, 0
        %2770 = vmatprep.subr.bf16.mxu0 0
        %2771 = vmatpush1.bf16.msra.mxu0 0
        %2772 = vmatprep.subr.bf16.mxu0 0
        %2773 = vmatpush1.bf16.msra.mxu0 0
        %2774 = vmatprep.subr.bf16.mxu0 0
        %2775 = vmatpush1.bf16.msra.mxu0 0
        %2776 = vmatprep.subr.bf16.mxu0 0
        %2777 = vmatpush1.bf16.msra.mxu0 0
        %2778 = vmatprep.subr.bf16.mxu0 0
        %2779 = vmatpush1.bf16.msra.mxu0 0
        %2780 = vmatprep.subr.bf16.mxu0 0
        %2781 = vmatpush1.bf16.msra.mxu0 0
        %2782 = vmatprep.subr.bf16.mxu0 0
        %2783 = vmatpush1.bf16.msra.mxu0 0
        %2784 = vmatprep.subr.bf16.mxu0 0
        %2785 = vmatpush1.bf16.msra.mxu0 %v2765
        %2786 = vmatprep.subr.bf16.mxu0 0
        %2787 = vmatpush2.bf16.msra.mxu0 0
        %2788 = vmatprep.subr.bf16.mxu0 0
        %2789 = vmatpush2.bf16.msra.mxu0 0
        %2790 = vmatprep.subr.bf16.mxu0 0
        %2791 = vmatpush2.bf16.msra.mxu0 0
        %2792 = vmatprep.subr.bf16.mxu0 0
        %2793 = vmatpush2.bf16.msra.mxu0 0
        %2794 = vmatprep.subr.bf16.mxu0 0
        %2795 = vmatpush2.bf16.msra.mxu0 0
        %2796 = vmatprep.subr.bf16.mxu0 0
        %2797 = vmatpush2.bf16.msra.mxu0 0
        %2798 = vmatprep.subr.bf16.mxu0 0
        %2799 = vmatpush2.bf16.msra.mxu0 0
        %2800 = vmatprep.subr.bf16.mxu0 0
        %2801 = vmatpush2.bf16.msra.mxu0 0
        %2802 = vmatprep.mubr.bf16.mxu0 0
        %2803 = vmatmul.mubr.bf16.gmra.mxu0 %v2768
        %v2804 = vpop.f32.mrf.mxu0
        %v2805 = vadd.f32 0.0, %v2804
        %v2806 = vpop.f32.mrf.mxu0
        %v2807 = vpop.f32.mrf.mxu0
        %v2808 = vpop.f32.mrf.mxu0
        %2809 = vdwg.mxu0
        %2811 = vrot.lane.b32.xlu0 %v2805, 24
        %v2812 = vpop.permute.xlu0 %2811
        %2814 = vst.msk [vmem:[#allocation3] sm:$0xff] %vm2107, %v2812
        %v2815 = vld [vmem:[#allocation3] sm:$0xff]
        %v2816 = vpack.c.bf16 %v2815, %v2815
        %v2817 = vld [vmem:[%s1280] sm:$0xf]
        %v2818 = vld [vmem:[%s1280 + $0x4] sm:$0xf]
        %v2819 = vld [vmem:[%s1280 + $0x8] sm:$0xf]
        %v2820 = vld [vmem:[%s1280 + $0xc] sm:$0xf]
        %v2821 = vld [vmem:[%s1288] sm:$0x1]
        %v2823 = vlaneseq
        %v2824 = vshrl.u32 %v2823, 7
        %v2825 = vsub.s32 0, %v2824
        %v2826 = vrot.slane %v2821, %v2825
        %v2832 = vunpack.c.l.b16 %v2817
        %v2833 = vunpack.c.l.b16 %v2818
        %v2834 = vunpack.c.l.b16 %v2819
        %v2835 = vunpack.c.l.b16 %v2820
        %v2836 = vpack.c.b16 %v2833, %v2832
        %v2837 = vpack.c.b16 %v2835, %v2834
        %v2841 = vsel %vm1541, %v2816, 0
        %2843 = vmatprep.subr.bf16.mxu0 0
        %2844 = vmatpush1.bf16.msra.mxu0 0
        %2845 = vmatprep.subr.bf16.mxu0 0
        %2846 = vmatpush1.bf16.msra.mxu0 0
        %2847 = vmatprep.subr.bf16.mxu0 0
        %2848 = vmatpush1.bf16.msra.mxu0 0
        %2849 = vmatprep.subr.bf16.mxu0 0
        %2850 = vmatpush1.bf16.msra.mxu0 0
        %2851 = vmatprep.subr.bf16.mxu0 0
        %2852 = vmatpush1.bf16.msra.mxu0 0
        %2853 = vmatprep.subr.bf16.mxu0 0
        %2854 = vmatpush1.bf16.msra.mxu0 0
        %2855 = vmatprep.subr.bf16.mxu0 0
        %2856 = vmatpush1.bf16.msra.mxu0 %v2837
        %2857 = vmatprep.subr.bf16.mxu0 0
        %2858 = vmatpush1.bf16.msra.mxu0 %v2836
        %2859 = vmatprep.subr.bf16.mxu0 0
        %2860 = vmatpush2.bf16.msra.mxu0 0
        %2861 = vmatprep.subr.bf16.mxu0 0
        %2862 = vmatpush2.bf16.msra.mxu0 0
        %2863 = vmatprep.subr.bf16.mxu0 0
        %2864 = vmatpush2.bf16.msra.mxu0 0
        %2865 = vmatprep.subr.bf16.mxu0 0
        %2866 = vmatpush2.bf16.msra.mxu0 0
        %2867 = vmatprep.subr.bf16.mxu0 0
        %2868 = vmatpush2.bf16.msra.mxu0 0
        %2869 = vmatprep.subr.bf16.mxu0 0
        %2870 = vmatpush2.bf16.msra.mxu0 0
        %2871 = vmatprep.subr.bf16.mxu0 0
        %2872 = vmatpush2.bf16.msra.mxu0 0
        %2873 = vmatprep.subr.bf16.mxu0 0
        %2874 = vmatpush2.bf16.msra.mxu0 0
        %2875 = vmatprep.mubr.bf16.mxu0 0
        %2876 = vmatmul.mubr.bf16.gmra.mxu0 %v2841
        %v2877 = vpop.f32.mrf.mxu0
        %v2878 = vadd.f32 %v2826, %v2877
        %v2879 = vpop.f32.mrf.mxu0
        %v2880 = vpop.f32.mrf.mxu0
        %v2881 = vpop.f32.mrf.mxu0
        %2882 = vdwg.mxu0
        %v2883 = vadd.f32 %v2177, %v2878
        %v2884 = vld [vmem:[%s1296] sm:$0x1]
        %v2885 = vld [vmem:[%s1304] sm:$0x1]
        %v2886 = vsel %vm1541, %v2883, 0.0
        %2887 = vadd.xlane.f32.xlu0 %v2886
        %v2888 = vpop.xlane.xlu0 %2887
        %v2889 = vmul.f32 %v2888, %v1545
        %v2890 = vmul.f32 %v2883, %v2883
        %v2891 = vsel %vm1541, %v2890, 0.0
        %2892 = vadd.xlane.f32.xlu0 %v2891
        %v2893 = vpop.xlane.xlu0 %2892
        %v2894 = vmul.f32 %v2893, %v1545
        %v2895 = vmul.f32 %v2889, %v2889
        %v2896 = vsub.f32 %v2894, %v2895
        %v2897 = vsub.f32 %v2883, %v2889
        %v2898 = vadd.f32 %v2896, 1e-05
        %v2899 = vrsqrt.pop %v2898
        %v2900 = vmul.f32 %v2897, %v2899
        %v2902 = vlaneseq
        %v2903 = vshrl.u32 %v2902, 7
        %v2904 = vsub.s32 0, %v2903
        %v2905 = vrot.slane %v2884, %v2904
        %v2907 = vmul.f32 %v2900, %v2905
        %v2909 = vlaneseq
        %v2910 = vshrl.u32 %v2909, 7
        %v2911 = vsub.s32 0, %v2910
        %v2912 = vrot.slane %v2885, %v2911
        %v2914 = vadd.f32 %v2907, %v2912
        %v2915 = vpack.c.bf16 %v2914, %v2914
        %v2916 = vld [vmem:[%s1313] sm:$0xf]
        %v2917 = vld [vmem:[%s1313 + $0x4] sm:$0xf]
        %v2918 = vld [vmem:[%s1313 + $0x8] sm:$0xf]
        %v2919 = vld [vmem:[%s1313 + $0xc] sm:$0xf]
        %v2920 = vld [vmem:[%s1321] sm:$0x1]
        %v2922 = vlaneseq
        %v2923 = vshrl.u32 %v2922, 7
        %v2924 = vsub.s32 0, %v2923
        %v2925 = vrot.slane %v2920, %v2924
        %v2931 = vunpack.c.l.b16 %v2916
        %v2932 = vunpack.c.l.b16 %v2917
        %v2933 = vunpack.c.l.b16 %v2918
        %v2934 = vunpack.c.l.b16 %v2919
        %v2935 = vpack.c.b16 %v2932, %v2931
        %v2936 = vpack.c.b16 %v2934, %v2933
        %v2940 = vsel %vm1541, %v2915, 0
        %2942 = vmatprep.subr.bf16.mxu0 0
        %2943 = vmatpush1.bf16.msra.mxu0 0
        %2944 = vmatprep.subr.bf16.mxu0 0
        %2945 = vmatpush1.bf16.msra.mxu0 0
        %2946 = vmatprep.subr.bf16.mxu0 0
        %2947 = vmatpush1.bf16.msra.mxu0 0
        %2948 = vmatprep.subr.bf16.mxu0 0
        %2949 = vmatpush1.bf16.msra.mxu0 0
        %2950 = vmatprep.subr.bf16.mxu0 0
        %2951 = vmatpush1.bf16.msra.mxu0 0
        %2952 = vmatprep.subr.bf16.mxu0 0
        %2953 = vmatpush1.bf16.msra.mxu0 0
        %2954 = vmatprep.subr.bf16.mxu0 0
        %2955 = vmatpush1.bf16.msra.mxu0 %v2936
        %2956 = vmatprep.subr.bf16.mxu0 0
        %2957 = vmatpush1.bf16.msra.mxu0 %v2935
        %2958 = vmatprep.subr.bf16.mxu0 0
        %2959 = vmatpush2.bf16.msra.mxu0 0
        %2960 = vmatprep.subr.bf16.mxu0 0
        %2961 = vmatpush2.bf16.msra.mxu0 0
        %2962 = vmatprep.subr.bf16.mxu0 0
        %2963 = vmatpush2.bf16.msra.mxu0 0
        %2964 = vmatprep.subr.bf16.mxu0 0
        %2965 = vmatpush2.bf16.msra.mxu0 0
        %2966 = vmatprep.subr.bf16.mxu0 0
        %2967 = vmatpush2.bf16.msra.mxu0 0
        %2968 = vmatprep.subr.bf16.mxu0 0
        %2969 = vmatpush2.bf16.msra.mxu0 0
        %2970 = vmatprep.subr.bf16.mxu0 0
        %2971 = vmatpush2.bf16.msra.mxu0 0
        %2972 = vmatprep.subr.bf16.mxu0 0
        %2973 = vmatpush2.bf16.msra.mxu0 0
        %2974 = vmatprep.mubr.bf16.mxu0 0
        %2975 = vmatmul.mubr.bf16.gmra.mxu0 %v2940
        %v2976 = vpop.f32.mrf.mxu0
        %v2977 = vadd.f32 %v2925, %v2976
        %v2978 = vpop.f32.mrf.mxu0
        %v2979 = vpop.f32.mrf.mxu0
        %v2980 = vpop.f32.mrf.mxu0
        %2981 = vdwg.mxu0
        %v2982 = vmax.f32 %v2977, 0.0
        %v2983 = vpack.c.bf16 %v2982, %v2982
        %v2984 = vld [vmem:[%s1526] sm:$0xf]
        %v2985 = vld [vmem:[%s1526 + $0x4] sm:$0xf]
        %v2986 = vld [vmem:[%s1526 + $0x8] sm:$0xf]
        %v2987 = vld [vmem:[%s1526 + $0xc] sm:$0xf]
        %v2988 = vld [vmem:[%s1526 + $0x10] sm:$0xf]
        %v2989 = vld [vmem:[%s1526 + $0x14] sm:$0xf]
        %v2990 = vld [vmem:[%s1526 + $0x18] sm:$0xf]
        %v2991 = vld [vmem:[%s1526 + $0x1c] sm:$0xf]
        %v2992 = vld [vmem:[%s1529] sm:$0x1]
        %v2994 = vlaneseq
        %v2995 = vshrl.u32 %v2994, 7
        %v2996 = vsub.s32 0, %v2995
        %v2997 = vrot.slane %v2992, %v2996
        %v3007 = vunpack.c.l.b16 %v2984
        %v3008 = vunpack.c.l.b16 %v2985
        %v3009 = vunpack.c.l.b16 %v2986
        %v3010 = vunpack.c.l.b16 %v2987
        %v3011 = vunpack.c.l.b16 %v2988
        %v3012 = vunpack.c.l.b16 %v2989
        %v3013 = vunpack.c.l.b16 %v2990
        %v3014 = vunpack.c.l.b16 %v2991
        %v3015 = vpack.c.b16 %v3008, %v3007
        %v3016 = vpack.c.b16 %v3010, %v3009
        %v3017 = vpack.c.b16 %v3012, %v3011
        %v3018 = vpack.c.b16 %v3014, %v3013
        %vm3023 = vcmask 523264
        %v3025 = vsel %vm3023, %v2983, 0
        %3027 = vmatprep.subr.bf16.mxu0 0
        %3028 = vmatpush1.bf16.msra.mxu0 0
        %3029 = vmatprep.subr.bf16.mxu0 0
        %3030 = vmatpush1.bf16.msra.mxu0 0
        %3031 = vmatprep.subr.bf16.mxu0 0
        %3032 = vmatpush1.bf16.msra.mxu0 0
        %3033 = vmatprep.subr.bf16.mxu0 0
        %3034 = vmatpush1.bf16.msra.mxu0 0
        %3035 = vmatprep.subr.bf16.mxu0 0
        %3036 = vmatpush1.bf16.msra.mxu0 %v3018
        %3037 = vmatprep.subr.bf16.mxu0 0
        %3038 = vmatpush1.bf16.msra.mxu0 %v3017
        %3039 = vmatprep.subr.bf16.mxu0 0
        %3040 = vmatpush1.bf16.msra.mxu0 %v3016
        %3041 = vmatprep.subr.bf16.mxu0 0
        %3042 = vmatpush1.bf16.msra.mxu0 %v3015
        %3043 = vmatprep.subr.bf16.mxu0 0
        %3044 = vmatpush2.bf16.msra.mxu0 0
        %3045 = vmatprep.subr.bf16.mxu0 0
        %3046 = vmatpush2.bf16.msra.mxu0 0
        %3047 = vmatprep.subr.bf16.mxu0 0
        %3048 = vmatpush2.bf16.msra.mxu0 0
        %3049 = vmatprep.subr.bf16.mxu0 0
        %3050 = vmatpush2.bf16.msra.mxu0 0
        %3051 = vmatprep.subr.bf16.mxu0 0
        %3052 = vmatpush2.bf16.msra.mxu0 0
        %3053 = vmatprep.subr.bf16.mxu0 0
        %3054 = vmatpush2.bf16.msra.mxu0 0
        %3055 = vmatprep.subr.bf16.mxu0 0
        %3056 = vmatpush2.bf16.msra.mxu0 0
        %3057 = vmatprep.subr.bf16.mxu0 0
        %3058 = vmatpush2.bf16.msra.mxu0 0
        %3059 = vmatprep.mubr.bf16.mxu0 0
        %3060 = vmatmul.mubr.bf16.gmra.mxu0 %v3025
        %v3061 = vpop.f32.mrf.mxu0
        %v3062 = vadd.f32 %v2997, %v3061
        %v3063 = vpop.f32.mrf.mxu0
        %v3064 = vpop.f32.mrf.mxu0
        %v3065 = vpop.f32.mrf.mxu0
        %3066 = vdwg.mxu0
        %v3067 = vadd.f32 %v2883, %v3062
        %3068 = vst.msk [vmem:[#allocation2] sm:$0xff] %vm1541, %v3067
        %p3069 = scmp.eq.s32.totalorder %s77, 1
        // Predicated region
        $region197: #{tpu_custom_call.1} parent=123 // pred_check
          %p3070 = pneg %p3069
        $region198: #{tpu_custom_call.1} parent=123 // pred_check_branch
          %3072 = sbr.rel (%p3070) target = $region200
        $region199: #{tpu_custom_call.1} parent=123 // pred_region
          %v3073 = vld [vmem:[%s24] sm:$0x1]
          %v3074 = vld [vmem:[%s25] sm:$0x1]
          %v3075 = vsel %vm1541, %v3067, 0.0
          %3076 = vadd.xlane.f32.xlu0 %v3075
          %v3077 = vpop.xlane.xlu0 %3076
          %v3078 = vmul.f32 %v3077, %v1545
          %v3079 = vmul.f32 %v3067, %v3067
          %v3080 = vsel %vm1541, %v3079, 0.0
          %3081 = vadd.xlane.f32.xlu0 %v3080
          %v3082 = vpop.xlane.xlu0 %3081
          %v3083 = vmul.f32 %v3082, %v1545
          %v3084 = vmul.f32 %v3078, %v3078
          %v3085 = vsub.f32 %v3083, %v3084
          %v3086 = vsub.f32 %v3067, %v3078
          %v3087 = vadd.f32 %v3085, 1e-05
          %v3088 = vrsqrt.pop %v3087
          %v3089 = vmul.f32 %v3086, %v3088
          %v3091 = vlaneseq
          %v3092 = vshrl.u32 %v3091, 7
          %v3093 = vsub.s32 0, %v3092
          %v3094 = vrot.slane %v3073, %v3093
          %v3096 = vmul.f32 %v3089, %v3094
          %v3098 = vlaneseq
          %v3099 = vshrl.u32 %v3098, 7
          %v3100 = vsub.s32 0, %v3099
          %v3101 = vrot.slane %v3074, %v3100
          %v3103 = vadd.f32 %v3096, %v3101
          %3104 = vst.msk [vmem:[%s1489] sm:$0xff] %vm1541, %v3103
        $region200: #{tpu_custom_call.1} parent=123 // pred_fallthru
          _
        %s3105 = sand.u32 %s758, 1
        %s3106 = scalar_lea.sflag [#allocation6], %s3105
        %s3107 = sand.u32 %s758, 1
        %s3108 = smul.addr %s3107, 8
        %s3109 = scalar_lea.vmem [#allocation31], %s3108
        %s3110 = sand.u32 %s784, 1
        %s3111 = scalar_lea.sflag [#allocation33], %s3110
        %s3112 = sand.u32 %s784, 1
        %s3113 = smul.addr %s3112, 32
        %s3114 = scalar_lea.vmem [#allocation32], %s3113
        // Predicated region
        $region201: #{tpu_custom_call.1} parent=123 // pred_check
          %p3115 = pneg %p768
        $region202: #{tpu_custom_call.1} parent=123 // pred_check_branch
          %3117 = sbr.rel (%p3115) target = $region204
        $region203: #{tpu_custom_call.1} parent=123 // pred_region
          %s3119 = ssub.s32 128, 128
          %3120 = vsyncadd %s3106, %s3119
          %s3121 = smul.addr %s76, 128
          %s3122 = scalar_lea.hbm %s26, %s3121
          %s3124 = sshll.u32 %s3109, 4
          %s3125 = int_to_ptr.vmem [resolvable:$true] %s3124
          %3127 = dma.vmem_to_hbm [thread:$0]  %s3125, 128, %s3122, %s3106
        $region204: #{tpu_custom_call.1} parent=123 // pred_fallthru
          _
        // Predicated region
        $region205: #{tpu_custom_call.1} parent=123 // pred_check
          %p3128 = pneg %p794
        $region206: #{tpu_custom_call.1} parent=123 // pred_check_branch
          %3130 = sbr.rel (%p3128) target = $region208
        $region207: #{tpu_custom_call.1} parent=123 // pred_region
          %s3132 = ssub.s32 512, 512
          %3133 = vsyncadd %s3111, %s3132
          %s3134 = smul.addr %s76, 4
          %s3135 = smul.addr %s3134, 128
          %s3136 = scalar_lea.hbm %s27, %s3135
          %s3137 = sshll.u32 %s3114, 4
          %s3138 = int_to_ptr.vmem [resolvable:$true] %s3137
          %3143 = dma.vmem_to_hbm [thread:$0]  %s3138, 512, %s3136, %s3111, 128, 128, 8
        $region208: #{tpu_custom_call.1} parent=123 // pred_fallthru
          _
      $region124: #{tpu_custom_call.1} parent=5 // pred_fallthru
        _
      %p3144 = scmp.le.s32.totalorder 2, %s67
      // Predicated region
      $region209: #{tpu_custom_call.1} parent=5 // pred_check
        %p3145 = pneg %p3144
      $region210: #{tpu_custom_call.1} parent=5 // pred_check_branch
        %3147 = sbr.rel (%p3145) target = $region212
      $region211: #{tpu_custom_call.1} parent=5 // pred_region
        %s3148 = ssub.s32 %s67, 2
        // Predicated region
        $region213: #{tpu_custom_call.1} parent=211 // pred_check
          %p3149 = pneg %p774
        $region214: #{tpu_custom_call.1} parent=211 // pred_check_branch
          %3151 = sbr.rel (%p3149) target = $region216
        $region215: #{tpu_custom_call.1} parent=211 // pred_region
          %s3152 = sand.u32 %s759, 1
          %s3153 = scalar_lea.sflag [#allocation6], %s3152
          %s3154 = sand.u32 %s759, 1
          %s3155 = smul.addr %s3154, 8
          %s3156 = scalar_lea.vmem [#allocation31], %s3155
          %3157 = dma.done %s3153, 128
        $region216: #{tpu_custom_call.1} parent=211 // pred_fallthru
          _
        // Predicated region
        $region217: #{tpu_custom_call.1} parent=211 // pred_check
          %p3158 = pneg %p800
        $region218: #{tpu_custom_call.1} parent=211 // pred_check_branch
          %3160 = sbr.rel (%p3158) target = $region220
        $region219: #{tpu_custom_call.1} parent=211 // pred_region
          %s3161 = sand.u32 %s785, 1
          %s3162 = scalar_lea.sflag [#allocation33], %s3161
          %s3163 = sand.u32 %s785, 1
          %s3164 = smul.addr %s3163, 32
          %s3165 = scalar_lea.vmem [#allocation32], %s3164
          %3166 = dma.done %s3162, 512
        $region220: #{tpu_custom_call.1} parent=211 // pred_fallthru
          _
      $region212: #{tpu_custom_call.1} parent=5 // pred_fallthru
        _
    $region6: #{tpu_custom_call.1} parent=1 // loop_footer
      %s71 = sadd.s32 1, %s67
    $region7: #{tpu_custom_call.1} parent=1 // loop_footer_branch
      %66 = sbr.rel target = $region3
    $region8: #{tpu_custom_call.1} parent=1 // loop_exit
      _
    %3167 = vsyncpa [#allocation5], 1
    %s3168 = scalar_lea.sflag [#allocation5], 1
    %3169 = vsyncpa %s3168, 1
    %3170 = vsyncpa [#allocation8], 1
    %s3171 = scalar_lea.sflag [#allocation8], 1
    %3172 = vsyncpa %s3171, 1
    %3173 = vsyncpa [#allocation11], 1
    %s3174 = scalar_lea.sflag [#allocation11], 1
    %3175 = vsyncpa %s3174, 1
    %3176 = vsyncpa [#allocation14], 1
    %s3177 = scalar_lea.sflag [#allocation14], 1
    %3178 = vsyncpa %s3177, 1
    %3179 = vsyncpa [#allocation17], 1
    %s3180 = scalar_lea.sflag [#allocation17], 1
    %3181 = vsyncpa %s3180, 1
    %3182 = vsyncpa [#allocation20], 1
    %s3183 = scalar_lea.sflag [#allocation20], 1
    %3184 = vsyncpa %s3183, 1
    %3185 = vsyncpa [#allocation23], 1
    %s3186 = scalar_lea.sflag [#allocation23], 1
    %3187 = vsyncpa %s3186, 1
    %3188 = vsyncpa [#allocation26], 1
    %s3189 = scalar_lea.sflag [#allocation26], 1
    %3190 = vsyncpa %s3189, 1
    %3191 = vsyncpa [#allocation29], 1
    %s3192 = scalar_lea.sflag [#allocation29], 1
    %3193 = vsyncpa %s3192, 1
    %3194 = vsyncpa [#allocation6], 1
    %s3195 = scalar_lea.sflag [#allocation6], 1
    %3196 = vsyncpa %s3195, 1
    %3197 = vsyncpa [#allocation33], 1
    %s3198 = scalar_lea.sflag [#allocation33], 1
    %3199 = vsyncpa %s3198, 1

</llo_original>
